<compile_context>
chip_gen: v7x
topology: tpu7x:2x2x1
jax: 0.10.0
libtpu: 0.0.40
codegen_flags: <defaults>
</compile_context>

<pallas_src>
import functools

import jax
import jax.numpy as jnp
from jax.experimental import pallas as pl
from jax.experimental.pallas import tpu as pltpu


# ----------------------------- fused Pallas kernel ---------------------------

def _egnn_fused_kernel(
    # grid-invariant inputs
    x_ref, hin_ref, deg_ref,
    # edge-tiled inputs
    grow_ref, gcol_ref, ea_ref,
    # embedding
    embw_ref, embb_ref,
    # per-layer weights (stacked over layers, selected by grid axis 0)
    w1s_ref, w1hr_ref, w1hc_ref, w1ea_ref, b1e_ref, w2e_ref, b2e_ref,
    w1c_ref, b1c_ref, w2c_ref, b2c_ref,
    w1nh_ref, w1nm_ref, b1n_ref, w2n_ref, b2n_ref,
    # outputs
    x_out_ref, h_out_ref,
    # scratch (persists across the whole grid)
    x_cur, h_cur, hwr, hwc, acc_f, acc_msg,
):
    f32 = jnp.float32
    l = pl.program_id(0)
    e = pl.program_id(1)
    n_l = pl.num_programs(0)
    n_e = pl.num_programs(1)

    # ---- one-time init: load coords, apply embedding Linear ----
    @pl.when(jnp.logical_and(l == 0, e == 0))
    def _init_state():
        x_cur[...] = x_ref[...]
        h_cur[...] = (
            jnp.dot(hin_ref[...], embw_ref[...], preferred_element_type=f32)
            + embb_ref[...]
        )

    # ---- per-layer init: zero accumulators, hoist h @ W through the gather ----
    @pl.when(e == 0)
    def _init_layer():
        acc_f[...] = jnp.zeros_like(acc_f)
        acc_msg[...] = jnp.zeros_like(acc_msg)
        hwr[...] = jnp.dot(h_cur[...], w1hr_ref[...], preferred_element_type=f32)
        hwc[...] = jnp.dot(h_cur[...], w1hc_ref[...], preferred_element_type=f32)

    # ---- edge tile compute ----
    g_row = grow_ref[...].astype(f32)                   # [TM, N] (bf16 0/1 -> f32, exact)
    g_col = gcol_ref[...].astype(f32)                   # [TM, N]
    x = x_cur[...]                                      # [N, P3]

    x_row = jnp.dot(g_row, x, preferred_element_type=f32)   # [TM, P3]
    x_col = jnp.dot(g_col, x, preferred_element_type=f32)
    rij = x_row - x_col
    sq = jnp.sum(rij * rij, axis=-1, keepdims=True)          # [TM, 1]  (= Z^T Z, K=1)

    # edge message MLP: input cat([sq, h_row, h_col, edge_attr]) via split weights;
    # h_row @ W == G_row @ (h @ W) (one-hot gather commutes with the matmul).
    pre1 = (
        sq * w1s_ref[...]                                             # [TM,1]*[1,D]
        + jnp.dot(g_row, hwr[...], preferred_element_type=f32)
        + jnp.dot(g_col, hwc[...], preferred_element_type=f32)
        + jnp.dot(ea_ref[...], w1ea_ref[...], preferred_element_type=f32)
        + b1e_ref[...]
    )
    hid_e = jax.nn.silu(pre1)
    message = (
        jnp.dot(hid_e, w2e_ref[...], preferred_element_type=f32) + b2e_ref[...]
    )                                                         # [TM, D]

    # coord MLP -> scalar per edge (second matmul is D->1: do it on the VPU)
    hid_c = jax.nn.silu(
        jnp.dot(message, w1c_ref[...], preferred_element_type=f32) + b1c_ref[...]
    )
    coord_msg = (
        jnp.sum(hid_c * w2c_ref[...], axis=-1, keepdims=True) + b2c_ref[...]
    )                                                         # [TM, 1]
    f_edge = rij * coord_msg                                  # [TM, P3]

    # scatter-add onto nodes: contract the edge dim of g_row directly (no transpose copy)
    dn = (((0,), (0,)), ((), ()))
    acc_f[...] += jax.lax.dot_general(g_row, f_edge, dn, preferred_element_type=f32)
    acc_msg[...] += jax.lax.dot_general(g_row, message, dn, preferred_element_type=f32)

    # ---- per-layer finalize: mean/sum aggregation + node MLP, update carried state ----
    @pl.when(e == n_e - 1)
    def _finalize_layer():
        tot_f = acc_f[...] / jnp.maximum(deg_ref[...], 1.0)
        tot_f = jnp.clip(tot_f, -100.0, 100.0)
        x_cur[...] = x_cur[...] + tot_f
        hid_n = jax.nn.silu(
            jnp.dot(h_cur[...], w1nh_ref[...], preferred_element_type=f32)
            + jnp.dot(acc_msg[...], w1nm_ref[...], preferred_element_type=f32)
            + b1n_ref[...]
        )
        h_cur[...] = (
            h_cur[...]
            + jnp.dot(hid_n, w2n_ref[...], preferred_element_type=f32)
            + b2n_ref[...]
        )

    @pl.when(jnp.logical_and(l == n_l - 1, e == n_e - 1))
    def _write_out():
        x_out_ref[...] = x_cur[...]
        h_out_ref[...] = h_cur[...]


# ----------------------------- wrapper ---------------------------------------

_WEIGHT_NAMES = (
    "w1s", "w1hr", "w1hc", "w1ea", "b1e", "w2e", "b2e",
    "w1c", "b1c", "w2c", "b2c",
    "w1nh", "w1nm", "b1n", "w2n", "b2n",
)

_PAD3 = 8  # padded coordinate feature width


@functools.partial(jax.jit, static_argnames=("n_node", "edge_tile"))
def egnn_forward(x, h_in, edge_index, edge_attr, params, *, n_node, edge_tile=256):
    f32 = jnp.float32
    N = n_node
    M = edge_attr.shape[0]
    E = edge_attr.shape[1]
    D = params["emb_w"].shape[1]
    L = params["w2e"].shape[0]

    tm = max(8, (int(edge_tile) // 8) * 8)
    m_pad = -(-M // tm) * tm
    n_et = m_pad // tm
    pad = m_pad - M

    row = edge_index[0].astype(jnp.int32)
    col = edge_index[1].astype(jnp.int32)
    # padded edges get an out-of-range index -> all-zero one-hot row -> no contribution
    row_p = jnp.pad(row, (0, pad), constant_values=N)
    col_p = jnp.pad(col, (0, pad), constant_values=N)
    ea_p = jnp.pad(edge_attr.astype(f32), ((0, pad), (0, 0)))

    # dense one-hot gather operators, stored as bf16 (exact 0/1, half the DMA bytes)
    g_row = jax.nn.one_hot(row_p, N, dtype=jnp.bfloat16)     # [M_pad, N]
    g_col = jax.nn.one_hot(col_p, N, dtype=jnp.bfloat16)     # [M_pad, N]

    # node degrees for mean aggregation, precomputed once
    deg = jax.ops.segment_sum(jnp.ones((M,), f32), row, num_segments=N)[:, None]

    # pad coordinates 3 -> 8 so coordinate-path matmuls / stores are not width-3
    x_pad = jnp.pad(x.astype(f32), ((0, 0), (0, _PAD3 - x.shape[1])))
    h_f32 = h_in.astype(f32)

    def full_spec(arr):
        return pl.BlockSpec(arr.shape, lambda l, e: (0, 0))

    def edge_spec(width):
        return pl.BlockSpec((tm, width), lambda l, e: (e, 0))

    def layer_spec(arr):
        return pl.BlockSpec((None,) + arr.shape[1:], lambda l, e: (l, 0, 0))

    in_specs = [
        full_spec(x_pad), full_spec(h_f32), full_spec(deg),
        edge_spec(N), edge_spec(N), edge_spec(E),
        full_spec(params["emb_w"]), full_spec(params["emb_b"]),
    ] + [layer_spec(params[name]) for name in _WEIGHT_NAMES]

    out_shape = (
        jax.ShapeDtypeStruct((N, _PAD3), f32),
        jax.ShapeDtypeStruct((N, D), f32),
    )
    out_specs = (
        pl.BlockSpec((N, _PAD3), lambda l, e: (0, 0)),
        pl.BlockSpec((N, D), lambda l, e: (0, 0)),
    )

    scratch_shapes = [
        pltpu.VMEM((N, _PAD3), f32),   # x_cur
        pltpu.VMEM((N, D), f32),       # h_cur
        pltpu.VMEM((N, D), f32),       # hwr = h @ w1hr
        pltpu.VMEM((N, D), f32),       # hwc = h @ w1hc
        pltpu.VMEM((N, _PAD3), f32),   # acc_f
        pltpu.VMEM((N, D), f32),       # acc_msg
    ]

    args = (
        x_pad, h_f32, deg, g_row, g_col, ea_p,
        params["emb_w"], params["emb_b"],
    ) + tuple(params[name] for name in _WEIGHT_NAMES)

    x_out, h_out = pl.pallas_call(
        _egnn_fused_kernel,
        out_shape=out_shape,
        grid=(L, n_et),
        in_specs=in_specs,
        out_specs=out_specs,
        scratch_shapes=scratch_shapes,
        compiler_params=pltpu.CompilerParams(
            dimension_semantics=("arbitrary", "arbitrary"),
            vmem_limit_bytes=64 * 1024 * 1024,
        ),
    )(*args)

    return x_out[:, :3], h_out


# ----------------------------- parameters ------------------------------------

def init_params(key, in_dim, num_edge_features, lifting_dim, num_layers):
    """Deterministic synthetic parameters, stacked over layers (matches module shapes)."""
    D, E, L = lifting_dim, num_edge_features, num_layers
    ks = iter(jax.random.split(key, 32))

    def w(shape, scale=0.1):
        return scale * jax.random.normal(next(ks), shape, dtype=jnp.float32)

    emb_w = w((in_dim, D))
    emb_b = w((1, D))
    # edge_message_net.scalar_mlp : MLP(1 + 2D + E, D, D), first weight split by input group
    w1 = w((L, 1 + 2 * D + E, D))
    params = dict(
        emb_w=emb_w, emb_b=emb_b,
        w1s=w1[:, 0:1, :],               # [L, 1, D]
        w1hr=w1[:, 1:1 + D, :],          # [L, D, D]
        w1hc=w1[:, 1 + D:1 + 2 * D, :],  # [L, D, D]
        w1ea=w1[:, 1 + 2 * D:, :],       # [L, E, D]
        b1e=w((L, 1, D)), w2e=w((L, D, D)), b2e=w((L, 1, D)),
        # coord_net : MLP(D, D, 1) — second weight stored row-form [1, D]
        w1c=w((L, D, D)), b1c=w((L, 1, D)), w2c=w((L, 1, D)), b2c=w((L, 1, 1)),
        # node_net : MLP(2D, D, D) — first weight split [h | tot_message]
        w1nh=w((L, D, D)), w1nm=w((L, D, D)), b1n=w((L, 1, D)),
        w2n=w((L, D, D)), b2n=w((L, 1, D)),
    )
    return params


# ------------------------ pure-JAX reference (sanity) ------------------------

def _mlp_ref(x, w1, b1, w2, b2):
    return jnp.dot(jax.nn.silu(jnp.dot(x, w1) + b1), w2) + b2


def egnn_reference(x, h_in, edge_index, edge_attr, params):
    n = x.shape[0]
    row, col = edge_index[0], edge_index[1]
    h = jnp.dot(h_in, params["emb_w"]) + params["emb_b"]
    L = params["w2e"].shape[0]
    for l in range(L):
        p = {k: v[l] for k, v in params.items() if k not in ("emb_w", "emb_b")}
        rij = x[row] - x[col]
        sq = jnp.sum(rij * rij, axis=-1, keepdims=True)
        hij = jnp.concatenate([sq, h[row], h[col], edge_attr], axis=-1)
        w1 = jnp.concatenate([p["w1s"], p["w1hr"], p["w1hc"], p["w1ea"]], axis=0)
        message = _mlp_ref(hij, w1, p["b1e"], p["w2e"], p["b2e"])
        coord_msg = _mlp_ref(message, p["w1c"], p["b1c"], p["w2c"].T, p["b2c"])
        f = rij * coord_msg
        tot_f = jax.ops.segment_sum(f, row, num_segments=n)
        cnt = jax.ops.segment_sum(jnp.ones_like(f), row, num_segments=n)
        tot_f = jnp.clip(tot_f / jnp.maximum(cnt, 1.0), -100.0, 100.0)
        x = x + tot_f
        tot_msg = jax.ops.segment_sum(message, row, num_segments=n)
        node_in = jnp.concatenate([h, tot_msg], axis=-1)
        w1n = jnp.concatenate([p["w1nh"], p["w1nm"]], axis=0)
        h = h + _mlp_ref(node_in, w1n, p["b1n"], p["w2n"], p["b2n"])
    return x, h


# --------------------------------- main --------------------------------------

if __name__ == "__main__":
    N = 8            # nodes
    M = 14           # edges (not a multiple of the edge tile -> exercises padding)
    IN_DIM = 8
    E = 4            # num_edge_features
    D = 32           # lifting_dim
    NUM_LAYERS = 2

    key = jax.random.PRNGKey(0)
    kx, kh, ke, ki, kj, kp = jax.random.split(key, 6)

    x = jax.random.normal(kx, (N, 3), dtype=jnp.float32)
    h = jax.random.normal(kh, (N, IN_DIM), dtype=jnp.float32)
    edge_attr = jax.random.normal(ke, (M, E), dtype=jnp.float32)
    row = jax.random.randint(ki, (M,), 0, N, dtype=jnp.int32)
    col = jax.random.randint(kj, (M,), 0, N, dtype=jnp.int32)
    edge_index = jnp.stack([row, col], axis=0)

    params = init_params(kp, IN_DIM, E, D, NUM_LAYERS)

    x_out, h_out = egnn_forward(
        x, h, edge_index, edge_attr, params, n_node=N, edge_tile=8
    )
    jax.block_until_ready((x_out, h_out))

    x_ref, h_ref = egnn_reference(x, h, edge_index, edge_attr, params)
    assert jnp.allclose(x_out, x_ref, rtol=1e-4, atol=1e-4), \
        float(jnp.max(jnp.abs(x_out - x_ref)))
    assert jnp.allclose(h_out, h_ref, rtol=1e-4, atol=1e-4), \
        float(jnp.max(jnp.abs(h_out - h_ref)))

    print("KERNEL_OK")
</pallas_src>

<mosaic_0001>
module attributes {stable_mosaic.version = 11 : i64} {
  func.func @_egnn_fused_kernel(%arg0: i32, %arg1: i32, %arg2: memref<8x8xf32, #tpu.memory_space<vmem>>, %arg3: memref<8x8xf32, #tpu.memory_space<vmem>>, %arg4: memref<8x1xf32, #tpu.memory_space<vmem>>, %arg5: memref<8x8xbf16, #tpu.memory_space<vmem>>, %arg6: memref<8x8xbf16, #tpu.memory_space<vmem>>, %arg7: memref<8x4xf32, #tpu.memory_space<vmem>>, %arg8: memref<8x32xf32, #tpu.memory_space<vmem>>, %arg9: memref<1x32xf32, #tpu.memory_space<vmem>>, %arg10: memref<1x1x32xf32, #tpu.memory_space<vmem>>, %arg11: memref<1x32x32xf32, #tpu.memory_space<vmem>>, %arg12: memref<1x32x32xf32, #tpu.memory_space<vmem>>, %arg13: memref<1x4x32xf32, #tpu.memory_space<vmem>>, %arg14: memref<1x1x32xf32, #tpu.memory_space<vmem>>, %arg15: memref<1x32x32xf32, #tpu.memory_space<vmem>>, %arg16: memref<1x1x32xf32, #tpu.memory_space<vmem>>, %arg17: memref<1x32x32xf32, #tpu.memory_space<vmem>>, %arg18: memref<1x1x32xf32, #tpu.memory_space<vmem>>, %arg19: memref<1x1x32xf32, #tpu.memory_space<vmem>>, %arg20: memref<1x1x1xf32, #tpu.memory_space<vmem>>, %arg21: memref<1x32x32xf32, #tpu.memory_space<vmem>>, %arg22: memref<1x32x32xf32, #tpu.memory_space<vmem>>, %arg23: memref<1x1x32xf32, #tpu.memory_space<vmem>>, %arg24: memref<1x32x32xf32, #tpu.memory_space<vmem>>, %arg25: memref<1x1x32xf32, #tpu.memory_space<vmem>>, %arg26: memref<8x8xf32, #tpu.memory_space<vmem>>, %arg27: memref<8x32xf32, #tpu.memory_space<vmem>>, %arg28: memref<8x8xf32, #tpu.memory_space<vmem>>, %arg29: memref<8x32xf32, #tpu.memory_space<vmem>>, %arg30: memref<8x32xf32, #tpu.memory_space<vmem>>, %arg31: memref<8x32xf32, #tpu.memory_space<vmem>>, %arg32: memref<8x8xf32, #tpu.memory_space<vmem>>, %arg33: memref<8x32xf32, #tpu.memory_space<vmem>>) attributes {dimension_semantics = [#tpu.dimension_semantics<arbitrary>, #tpu.dimension_semantics<arbitrary>], iteration_bounds = array<i64: 2, 2>, scalar_prefetch = 0 : i64, scratch_operands = 6 : i64, tpu.core_type = #tpu.core_type<tc>, window_params = [{pipeline_mode = #tpu.pipeline_mode<synchronous>, transform_indices = @transform_0, window_bounds = array<i64: 8, 8>}, {pipeline_mode = #tpu.pipeline_mode<synchronous>, transform_indices = @transform_1, window_bounds = array<i64: 8, 8>}, {pipeline_mode = #tpu.pipeline_mode<synchronous>, transform_indices = @transform_2, window_bounds = array<i64: 8, 1>}, {transform_indices = @transform_3, window_bounds = array<i64: 8, 8>}, {transform_indices = @transform_4, window_bounds = array<i64: 8, 8>}, {transform_indices = @transform_5, window_bounds = array<i64: 8, 4>}, {pipeline_mode = #tpu.pipeline_mode<synchronous>, transform_indices = @transform_6, window_bounds = array<i64: 8, 32>}, {pipeline_mode = #tpu.pipeline_mode<synchronous>, transform_indices = @transform_7, window_bounds = array<i64: 1, 32>}, {transform_indices = @transform_8, window_bounds = array<i64: 1, 1, 32>}, {transform_indices = @transform_9, window_bounds = array<i64: 1, 32, 32>}, {transform_indices = @transform_10, window_bounds = array<i64: 1, 32, 32>}, {transform_indices = @transform_11, window_bounds = array<i64: 1, 4, 32>}, {transform_indices = @transform_12, window_bounds = array<i64: 1, 1, 32>}, {transform_indices = @transform_13, window_bounds = array<i64: 1, 32, 32>}, {transform_indices = @transform_14, window_bounds = array<i64: 1, 1, 32>}, {transform_indices = @transform_15, window_bounds = array<i64: 1, 32, 32>}, {transform_indices = @transform_16, window_bounds = array<i64: 1, 1, 32>}, {transform_indices = @transform_17, window_bounds = array<i64: 1, 1, 32>}, {transform_indices = @transform_18, window_bounds = array<i64: 1, 1, 1>}, {transform_indices = @transform_19, window_bounds = array<i64: 1, 32, 32>}, {transform_indices = @transform_20, window_bounds = array<i64: 1, 32, 32>}, {transform_indices = @transform_21, window_bounds = array<i64: 1, 1, 32>}, {transform_indices = @transform_22, window_bounds = array<i64: 1, 32, 32>}, {transform_indices = @transform_23, window_bounds = array<i64: 1, 1, 32>}, {pipeline_mode = #tpu.pipeline_mode<synchronous>, transform_indices = @transform_24, window_bounds = array<i64: 8, 8>}, {pipeline_mode = #tpu.pipeline_mode<synchronous>, transform_indices = @transform_25, window_bounds = array<i64: 8, 32>}]} {
    %c0_i32 = arith.constant 0 : i32
    %0 = arith.cmpi eq, %arg0, %c0_i32 : i32
    %c0_i32_0 = arith.constant 0 : i32
    %1 = arith.cmpi eq, %arg1, %c0_i32_0 : i32
    %2 = arith.andi %0, %1 : i1
    %3 = arith.extui %2 : i1 to i32
    %c0_i32_1 = arith.constant 0 : i32
    %4 = arith.cmpi ne, %3, %c0_i32_1 : i32
    scf.if %4 {
      %c0_66 = arith.constant 0 : index
      %c0_67 = arith.constant 0 : index
      %93 = vector.load %arg2[%c0_66, %c0_67] : memref<8x8xf32, #tpu.memory_space<vmem>>, vector<8x8xf32>
      %c0_68 = arith.constant 0 : index
      %c0_69 = arith.constant 0 : index
      %94 = vector.load %arg28[%c0_68, %c0_69] : memref<8x8xf32, #tpu.memory_space<vmem>>, vector<8x8xf32>
      tpu.vector_store %arg28[%c0_68, %c0_69], %93 {strides = array<i32>} : memref<8x8xf32, #tpu.memory_space<vmem>>, vector<8x8xf32>,
      %c0_70 = arith.constant 0 : index
      %c0_71 = arith.constant 0 : index
      %95 = vector.load %arg3[%c0_70, %c0_71] : memref<8x8xf32, #tpu.memory_space<vmem>>, vector<8x8xf32>
      %c0_72 = arith.constant 0 : index
      %c0_73 = arith.constant 0 : index
      %96 = vector.load %arg8[%c0_72, %c0_73] : memref<8x32xf32, #tpu.memory_space<vmem>>, vector<8x32xf32>
      %cst_74 = arith.constant dense<0.000000e+00> : vector<8x32xf32>
      %97 = tpu.matmul %95, %96, %cst_74 {dimension_numbers = #tpu.dot_dimension_numbers<[1], [0], [0], [1], [0, 0, 1, 1], [], []>} : vector<8x8xf32>, vector<8x32xf32>, vector<8x32xf32> -> vector<8x32xf32>
      %c0_75 = arith.constant 0 : index
      %c0_76 = arith.constant 0 : index
      %98 = vector.load %arg9[%c0_75, %c0_76] : memref<1x32xf32, #tpu.memory_space<vmem>>, vector<1x32xf32>
      %99 = vector.broadcast %98 : vector<1x32xf32> to vector<8x32xf32>
      %100 = arith.addf %97, %99 : vector<8x32xf32>
      %c0_77 = arith.constant 0 : index
      %c0_78 = arith.constant 0 : index
      %101 = vector.load %arg29[%c0_77, %c0_78] : memref<8x32xf32, #tpu.memory_space<vmem>>, vector<8x32xf32>
      tpu.vector_store %arg29[%c0_77, %c0_78], %100 {strides = array<i32>} : memref<8x32xf32, #tpu.memory_space<vmem>>, vector<8x32xf32>,
    } else {
    }
    %c0_i32_2 = arith.constant 0 : i32
    %5 = arith.cmpi eq, %arg1, %c0_i32_2 : i32
    %6 = arith.extui %5 : i1 to i32
    %c0_i32_3 = arith.constant 0 : i32
    %7 = arith.cmpi ne, %6, %c0_i32_3 : i32
    scf.if %7 {
      %cst_66 = arith.constant 0.000000e+00 : f32
      %93 = vector.broadcast %cst_66 : f32 to vector<8x8xf32>
      %c0_67 = arith.constant 0 : index
      %c0_68 = arith.constant 0 : index
      %94 = vector.load %arg32[%c0_67, %c0_68] : memref<8x8xf32, #tpu.memory_space<vmem>>, vector<8x8xf32>
      tpu.vector_store %arg32[%c0_67, %c0_68], %93 {strides = array<i32>} : memref<8x8xf32, #tpu.memory_space<vmem>>, vector<8x8xf32>,
      %cst_69 = arith.constant 0.000000e+00 : f32
      %95 = vector.broadcast %cst_69 : f32 to vector<8x32xf32>
      %c0_70 = arith.constant 0 : index
      %c0_71 = arith.constant 0 : index
      %96 = vector.load %arg33[%c0_70, %c0_71] : memref<8x32xf32, #tpu.memory_space<vmem>>, vector<8x32xf32>
      tpu.vector_store %arg33[%c0_70, %c0_71], %95 {strides = array<i32>} : memref<8x32xf32, #tpu.memory_space<vmem>>, vector<8x32xf32>,
      %c0_72 = arith.constant 0 : index
      %c0_73 = arith.constant 0 : index
      %97 = vector.load %arg29[%c0_72, %c0_73] : memref<8x32xf32, #tpu.memory_space<vmem>>, vector<8x32xf32>
      %c0_74 = arith.constant 0 : index
      %c0_75 = arith.constant 0 : index
      %c0_76 = arith.constant 0 : index
      %98 = vector.load %arg11[%c0_74, %c0_75, %c0_76] : memref<1x32x32xf32, #tpu.memory_space<vmem>>, vector<1x32x32xf32>
      %99 = vector.shape_cast %98 : vector<1x32x32xf32> to vector<32x32xf32>
      %cst_77 = arith.constant dense<0.000000e+00> : vector<8x32xf32>
      %100 = tpu.matmul %97, %99, %cst_77 {dimension_numbers = #tpu.dot_dimension_numbers<[1], [0], [0], [1], [0, 0, 1, 1], [], []>} : vector<8x32xf32>, vector<32x32xf32>, vector<8x32xf32> -> vector<8x32xf32>
      %c0_78 = arith.constant 0 : index
      %c0_79 = arith.constant 0 : index
      %101 = vector.load %arg30[%c0_78, %c0_79] : memref<8x32xf32, #tpu.memory_space<vmem>>, vector<8x32xf32>
      tpu.vector_store %arg30[%c0_78, %c0_79], %100 {strides = array<i32>} : memref<8x32xf32, #tpu.memory_space<vmem>>, vector<8x32xf32>,
      %c0_80 = arith.constant 0 : index
      %c0_81 = arith.constant 0 : index
      %102 = vector.load %arg29[%c0_80, %c0_81] : memref<8x32xf32, #tpu.memory_space<vmem>>, vector<8x32xf32>
      %c0_82 = arith.constant 0 : index
      %c0_83 = arith.constant 0 : index
      %c0_84 = arith.constant 0 : index
      %103 = vector.load %arg12[%c0_82, %c0_83, %c0_84] : memref<1x32x32xf32, #tpu.memory_space<vmem>>, vector<1x32x32xf32>
      %104 = vector.shape_cast %103 : vector<1x32x32xf32> to vector<32x32xf32>
      %cst_85 = arith.constant dense<0.000000e+00> : vector<8x32xf32>
      %105 = tpu.matmul %102, %104, %cst_85 {dimension_numbers = #tpu.dot_dimension_numbers<[1], [0], [0], [1], [0, 0, 1, 1], [], []>} : vector<8x32xf32>, vector<32x32xf32>, vector<8x32xf32> -> vector<8x32xf32>
      %c0_86 = arith.constant 0 : index
      %c0_87 = arith.constant 0 : index
      %106 = vector.load %arg31[%c0_86, %c0_87] : memref<8x32xf32, #tpu.memory_space<vmem>>, vector<8x32xf32>
      tpu.vector_store %arg31[%c0_86, %c0_87], %105 {strides = array<i32>} : memref<8x32xf32, #tpu.memory_space<vmem>>, vector<8x32xf32>,
    } else {
    }
    %c0 = arith.constant 0 : index
    %c0_4 = arith.constant 0 : index
    %8 = vector.load %arg5[%c0, %c0_4] : memref<8x8xbf16, #tpu.memory_space<vmem>>, vector<8x8xbf16>
    %9 = arith.extf %8 : vector<8x8xbf16> to vector<8x8xf32>
    %c0_5 = arith.constant 0 : index
    %c0_6 = arith.constant 0 : index
    %10 = vector.load %arg6[%c0_5, %c0_6] : memref<8x8xbf16, #tpu.memory_space<vmem>>, vector<8x8xbf16>
    %11 = arith.extf %10 : vector<8x8xbf16> to vector<8x8xf32>
    %c0_7 = arith.constant 0 : index
    %c0_8 = arith.constant 0 : index
    %12 = vector.load %arg28[%c0_7, %c0_8] : memref<8x8xf32, #tpu.memory_space<vmem>>, vector<8x8xf32>
    %cst = arith.constant dense<0.000000e+00> : vector<8x8xf32>
    %13 = tpu.matmul %9, %12, %cst {dimension_numbers = #tpu.dot_dimension_numbers<[1], [0], [0], [1], [0, 0, 1, 1], [], []>} : vector<8x8xf32>, vector<8x8xf32>, vector<8x8xf32> -> vector<8x8xf32>
    %cst_9 = arith.constant dense<0.000000e+00> : vector<8x8xf32>
    %14 = tpu.matmul %11, %12, %cst_9 {dimension_numbers = #tpu.dot_dimension_numbers<[1], [0], [0], [1], [0, 0, 1, 1], [], []>} : vector<8x8xf32>, vector<8x8xf32>, vector<8x8xf32> -> vector<8x8xf32>
    %15 = arith.subf %13, %14 : vector<8x8xf32>
    %16 = arith.mulf %15, %15 : vector<8x8xf32>
    %cst_10 = arith.constant dense<0.000000e+00> : vector<8xf32>
    %17 = vector.multi_reduction <add>, %16, %cst_10 [1] : vector<8x8xf32> to vector<8xf32>
    %18 = vector.shape_cast %17 : vector<8xf32> to vector<8x1xf32>
    %c0_11 = arith.constant 0 : index
    %c0_12 = arith.constant 0 : index
    %c0_13 = arith.constant 0 : index
    %19 = vector.load %arg10[%c0_11, %c0_12, %c0_13] : memref<1x1x32xf32, #tpu.memory_space<vmem>>, vector<1x1x32xf32>
    %20 = vector.shape_cast %19 : vector<1x1x32xf32> to vector<1x32xf32>
    %21 = vector.broadcast %18 : vector<8x1xf32> to vector<8x32xf32>
    %22 = vector.broadcast %20 : vector<1x32xf32> to vector<8x32xf32>
    %23 = arith.mulf %21, %22 : vector<8x32xf32>
    %c0_14 = arith.constant 0 : index
    %c0_15 = arith.constant 0 : index
    %24 = vector.load %arg30[%c0_14, %c0_15] : memref<8x32xf32, #tpu.memory_space<vmem>>, vector<8x32xf32>
    %cst_16 = arith.constant dense<0.000000e+00> : vector<8x32xf32>
    %25 = tpu.matmul %9, %24, %cst_16 {dimension_numbers = #tpu.dot_dimension_numbers<[1], [0], [0], [1], [0, 0, 1, 1], [], []>} : vector<8x8xf32>, vector<8x32xf32>, vector<8x32xf32> -> vector<8x32xf32>
    %26 = arith.addf %23, %25 : vector<8x32xf32>
    %c0_17 = arith.constant 0 : index
    %c0_18 = arith.constant 0 : index
    %27 = vector.load %arg31[%c0_17, %c0_18] : memref<8x32xf32, #tpu.memory_space<vmem>>, vector<8x32xf32>
    %cst_19 = arith.constant dense<0.000000e+00> : vector<8x32xf32>
    %28 = tpu.matmul %11, %27, %cst_19 {dimension_numbers = #tpu.dot_dimension_numbers<[1], [0], [0], [1], [0, 0, 1, 1], [], []>} : vector<8x8xf32>, vector<8x32xf32>, vector<8x32xf32> -> vector<8x32xf32>
    %29 = arith.addf %26, %28 : vector<8x32xf32>
    %c0_20 = arith.constant 0 : index
    %c0_21 = arith.constant 0 : index
    %30 = vector.load %arg7[%c0_20, %c0_21] : memref<8x4xf32, #tpu.memory_space<vmem>>, vector<8x4xf32>
    %c0_22 = arith.constant 0 : index
    %c0_23 = arith.constant 0 : index
    %c0_24 = arith.constant 0 : index
    %31 = vector.load %arg13[%c0_22, %c0_23, %c0_24] : memref<1x4x32xf32, #tpu.memory_space<vmem>>, vector<1x4x32xf32>
    %32 = vector.shape_cast %31 : vector<1x4x32xf32> to vector<4x32xf32>
    %cst_25 = arith.constant dense<0.000000e+00> : vector<8x32xf32>
    %33 = tpu.matmul %30, %32, %cst_25 {dimension_numbers = #tpu.dot_dimension_numbers<[1], [0], [0], [1], [0, 0, 1, 1], [], []>} : vector<8x4xf32>, vector<4x32xf32>, vector<8x32xf32> -> vector<8x32xf32>
    %34 = arith.addf %29, %33 : vector<8x32xf32>
    %c0_26 = arith.constant 0 : index
    %c0_27 = arith.constant 0 : index
    %c0_28 = arith.constant 0 : index
    %35 = vector.load %arg14[%c0_26, %c0_27, %c0_28] : memref<1x1x32xf32, #tpu.memory_space<vmem>>, vector<1x1x32xf32>
    %36 = vector.shape_cast %35 : vector<1x1x32xf32> to vector<1x32xf32>
    %37 = vector.broadcast %36 : vector<1x32xf32> to vector<8x32xf32>
    %38 = arith.addf %34, %37 : vector<8x32xf32>
    %39 = arith.negf %38 : vector<8x32xf32>
    %40 = math.exp %39 : vector<8x32xf32>
    %cst_29 = arith.constant 1.000000e+00 : f32
    %41 = vector.broadcast %cst_29 : f32 to vector<8x32xf32>
    %42 = arith.addf %41, %40 : vector<8x32xf32>
    %43 = arith.divf %41, %42 : vector<8x32xf32>
    %44 = arith.mulf %38, %43 : vector<8x32xf32>
    %c0_30 = arith.constant 0 : index
    %c0_31 = arith.constant 0 : index
    %c0_32 = arith.constant 0 : index
    %45 = vector.load %arg15[%c0_30, %c0_31, %c0_32] : memref<1x32x32xf32, #tpu.memory_space<vmem>>, vector<1x32x32xf32>
    %46 = vector.shape_cast %45 : vector<1x32x32xf32> to vector<32x32xf32>
    %cst_33 = arith.constant dense<0.000000e+00> : vector<8x32xf32>
    %47 = tpu.matmul %44, %46, %cst_33 {dimension_numbers = #tpu.dot_dimension_numbers<[1], [0], [0], [1], [0, 0, 1, 1], [], []>} : vector<8x32xf32>, vector<32x32xf32>, vector<8x32xf32> -> vector<8x32xf32>
    %c0_34 = arith.constant 0 : index
    %c0_35 = arith.constant 0 : index
    %c0_36 = arith.constant 0 : index
    %48 = vector.load %arg16[%c0_34, %c0_35, %c0_36] : memref<1x1x32xf32, #tpu.memory_space<vmem>>, vector<1x1x32xf32>
    %49 = vector.shape_cast %48 : vector<1x1x32xf32> to vector<1x32xf32>
    %50 = vector.broadcast %49 : vector<1x32xf32> to vector<8x32xf32>
    %51 = arith.addf %47, %50 : vector<8x32xf32>
    %c0_37 = arith.constant 0 : index
    %c0_38 = arith.constant 0 : index
    %c0_39 = arith.constant 0 : index
    %52 = vector.load %arg17[%c0_37, %c0_38, %c0_39] : memref<1x32x32xf32, #tpu.memory_space<vmem>>, vector<1x32x32xf32>
    %53 = vector.shape_cast %52 : vector<1x32x32xf32> to vector<32x32xf32>
    %cst_40 = arith.constant dense<0.000000e+00> : vector<8x32xf32>
    %54 = tpu.matmul %51, %53, %cst_40 {dimension_numbers = #tpu.dot_dimension_numbers<[1], [0], [0], [1], [0, 0, 1, 1], [], []>} : vector<8x32xf32>, vector<32x32xf32>, vector<8x32xf32> -> vector<8x32xf32>
    %c0_41 = arith.constant 0 : index
    %c0_42 = arith.constant 0 : index
    %c0_43 = arith.constant 0 : index
    %55 = vector.load %arg18[%c0_41, %c0_42, %c0_43] : memref<1x1x32xf32, #tpu.memory_space<vmem>>, vector<1x1x32xf32>
    %56 = vector.shape_cast %55 : vector<1x1x32xf32> to vector<1x32xf32>
    %57 = vector.broadcast %56 : vector<1x32xf32> to vector<8x32xf32>
    %58 = arith.addf %54, %57 : vector<8x32xf32>
    %59 = arith.negf %58 : vector<8x32xf32>
    %60 = math.exp %59 : vector<8x32xf32>
    %cst_44 = arith.constant 1.000000e+00 : f32
    %61 = vector.broadcast %cst_44 : f32 to vector<8x32xf32>
    %62 = arith.addf %61, %60 : vector<8x32xf32>
    %63 = arith.divf %61, %62 : vector<8x32xf32>
    %64 = arith.mulf %58, %63 : vector<8x32xf32>
    %c0_45 = arith.constant 0 : index
    %c0_46 = arith.constant 0 : index
    %c0_47 = arith.constant 0 : index
    %65 = vector.load %arg19[%c0_45, %c0_46, %c0_47] : memref<1x1x32xf32, #tpu.memory_space<vmem>>, vector<1x1x32xf32>
    %66 = vector.shape_cast %65 : vector<1x1x32xf32> to vector<1x32xf32>
    %67 = vector.broadcast %66 : vector<1x32xf32> to vector<8x32xf32>
    %68 = arith.mulf %64, %67 : vector<8x32xf32>
    %cst_48 = arith.constant dense<0.000000e+00> : vector<8xf32>
    %69 = vector.multi_reduction <add>, %68, %cst_48 [1] : vector<8x32xf32> to vector<8xf32>
    %70 = vector.shape_cast %69 : vector<8xf32> to vector<8x1xf32>
    %c0_49 = arith.constant 0 : index
    %c0_50 = arith.constant 0 : index
    %c0_51 = arith.constant 0 : index
    %71 = vector.load %arg20[%c0_49, %c0_50, %c0_51] : memref<1x1x1xf32, #tpu.memory_space<vmem>>, vector<1x1x1xf32>
    %72 = vector.shape_cast %71 : vector<1x1x1xf32> to vector<1x1xf32>
    %73 = vector.broadcast %72 : vector<1x1xf32> to vector<8x1xf32>
    %74 = arith.addf %70, %73 : vector<8x1xf32>
    %75 = vector.broadcast %74 : vector<8x1xf32> to vector<8x8xf32>
    %76 = arith.mulf %15, %75 : vector<8x8xf32>
    %c0_52 = arith.constant 0 : index
    %c0_53 = arith.constant 0 : index
    %77 = vector.load %arg32[%c0_52, %c0_53] : memref<8x8xf32, #tpu.memory_space<vmem>>, vector<8x8xf32>
    %cst_54 = arith.constant dense<0.000000e+00> : vector<8x8xf32>
    %78 = tpu.matmul %9, %76, %cst_54 {dimension_numbers = #tpu.dot_dimension_numbers<[0], [0], [1], [1], [0, 1, 1, 1], [], []>} : vector<8x8xf32>, vector<8x8xf32>, vector<8x8xf32> -> vector<8x8xf32>
    %79 = arith.addf %77, %78 : vector<8x8xf32>
    %c0_55 = arith.constant 0 : index
    %c0_56 = arith.constant 0 : index
    %80 = vector.load %arg32[%c0_55, %c0_56] : memref<8x8xf32, #tpu.memory_space<vmem>>, vector<8x8xf32>
    tpu.vector_store %arg32[%c0_55, %c0_56], %79 {strides = array<i32>} : memref<8x8xf32, #tpu.memory_space<vmem>>, vector<8x8xf32>,
    %c0_57 = arith.constant 0 : index
    %c0_58 = arith.constant 0 : index
    %81 = vector.load %arg33[%c0_57, %c0_58] : memref<8x32xf32, #tpu.memory_space<vmem>>, vector<8x32xf32>
    %cst_59 = arith.constant dense<0.000000e+00> : vector<8x32xf32>
    %82 = tpu.matmul %9, %51, %cst_59 {dimension_numbers = #tpu.dot_dimension_numbers<[0], [0], [1], [1], [0, 1, 1, 1], [], []>} : vector<8x8xf32>, vector<8x32xf32>, vector<8x32xf32> -> vector<8x32xf32>
    %83 = arith.addf %81, %82 : vector<8x32xf32>
    %c0_60 = arith.constant 0 : index
    %c0_61 = arith.constant 0 : index
    %84 = vector.load %arg33[%c0_60, %c0_61] : memref<8x32xf32, #tpu.memory_space<vmem>>, vector<8x32xf32>
    tpu.vector_store %arg33[%c0_60, %c0_61], %83 {strides = array<i32>} : memref<8x32xf32, #tpu.memory_space<vmem>>, vector<8x32xf32>,
    %c1_i32 = arith.constant 1 : i32
    %85 = arith.cmpi eq, %arg1, %c1_i32 : i32
    %86 = arith.extui %85 : i1 to i32
    %c0_i32_62 = arith.constant 0 : i32
    %87 = arith.cmpi ne, %86, %c0_i32_62 : i32
    scf.if %87 {
      %c0_66 = arith.constant 0 : index
      %c0_67 = arith.constant 0 : index
      %93 = vector.load %arg32[%c0_66, %c0_67] : memref<8x8xf32, #tpu.memory_space<vmem>>, vector<8x8xf32>
      %c0_68 = arith.constant 0 : index
      %c0_69 = arith.constant 0 : index
      %94 = vector.load %arg4[%c0_68, %c0_69] : memref<8x1xf32, #tpu.memory_space<vmem>>, vector<8x1xf32>
      %cst_70 = arith.constant 1.000000e+00 : f32
      %95 = vector.broadcast %cst_70 : f32 to vector<8x1xf32>
      %96 = arith.maximumf %94, %95 : vector<8x1xf32>
      %97 = vector.broadcast %96 : vector<8x1xf32> to vector<8x8xf32>
      %98 = arith.divf %93, %97 : vector<8x8xf32>
      %cst_71 = arith.constant -1.000000e+02 : f32
      %cst_72 = arith.constant 1.000000e+02 : f32
      %99 = vector.broadcast %cst_71 : f32 to vector<8x8xf32>
      %100 = arith.maximumf %99, %98 : vector<8x8xf32>
      %101 = vector.broadcast %cst_72 : f32 to vector<8x8xf32>
      %102 = arith.minimumf %101, %100 : vector<8x8xf32>
      %c0_73 = arith.constant 0 : index
      %c0_74 = arith.constant 0 : index
      %103 = vector.load %arg28[%c0_73, %c0_74] : memref<8x8xf32, #tpu.memory_space<vmem>>, vector<8x8xf32>
      %104 = arith.addf %103, %102 : vector<8x8xf32>
      %c0_75 = arith.constant 0 : index
      %c0_76 = arith.constant 0 : index
      %105 = vector.load %arg28[%c0_75, %c0_76] : memref<8x8xf32, #tpu.memory_space<vmem>>, vector<8x8xf32>
      tpu.vector_store %arg28[%c0_75, %c0_76], %104 {strides = array<i32>} : memref<8x8xf32, #tpu.memory_space<vmem>>, vector<8x8xf32>,
      %c0_77 = arith.constant 0 : index
      %c0_78 = arith.constant 0 : index
      %106 = vector.load %arg29[%c0_77, %c0_78] : memref<8x32xf32, #tpu.memory_space<vmem>>, vector<8x32xf32>
      %c0_79 = arith.constant 0 : index
      %c0_80 = arith.constant 0 : index
      %c0_81 = arith.constant 0 : index
      %107 = vector.load %arg21[%c0_79, %c0_80, %c0_81] : memref<1x32x32xf32, #tpu.memory_space<vmem>>, vector<1x32x32xf32>
      %108 = vector.shape_cast %107 : vector<1x32x32xf32> to vector<32x32xf32>
      %cst_82 = arith.constant dense<0.000000e+00> : vector<8x32xf32>
      %109 = tpu.matmul %106, %108, %cst_82 {dimension_numbers = #tpu.dot_dimension_numbers<[1], [0], [0], [1], [0, 0, 1, 1], [], []>} : vector<8x32xf32>, vector<32x32xf32>, vector<8x32xf32> -> vector<8x32xf32>
      %c0_83 = arith.constant 0 : index
      %c0_84 = arith.constant 0 : index
      %110 = vector.load %arg33[%c0_83, %c0_84] : memref<8x32xf32, #tpu.memory_space<vmem>>, vector<8x32xf32>
      %c0_85 = arith.constant 0 : index
      %c0_86 = arith.constant 0 : index
      %c0_87 = arith.constant 0 : index
      %111 = vector.load %arg22[%c0_85, %c0_86, %c0_87] : memref<1x32x32xf32, #tpu.memory_space<vmem>>, vector<1x32x32xf32>
      %112 = vector.shape_cast %111 : vector<1x32x32xf32> to vector<32x32xf32>
      %cst_88 = arith.constant dense<0.000000e+00> : vector<8x32xf32>
      %113 = tpu.matmul %110, %112, %cst_88 {dimension_numbers = #tpu.dot_dimension_numbers<[1], [0], [0], [1], [0, 0, 1, 1], [], []>} : vector<8x32xf32>, vector<32x32xf32>, vector<8x32xf32> -> vector<8x32xf32>
      %114 = arith.addf %109, %113 : vector<8x32xf32>
      %c0_89 = arith.constant 0 : index
      %c0_90 = arith.constant 0 : index
      %c0_91 = arith.constant 0 : index
      %115 = vector.load %arg23[%c0_89, %c0_90, %c0_91] : memref<1x1x32xf32, #tpu.memory_space<vmem>>, vector<1x1x32xf32>
      %116 = vector.shape_cast %115 : vector<1x1x32xf32> to vector<1x32xf32>
      %117 = vector.broadcast %116 : vector<1x32xf32> to vector<8x32xf32>
      %118 = arith.addf %114, %117 : vector<8x32xf32>
      %119 = arith.negf %118 : vector<8x32xf32>
      %120 = math.exp %119 : vector<8x32xf32>
      %cst_92 = arith.constant 1.000000e+00 : f32
      %121 = vector.broadcast %cst_92 : f32 to vector<8x32xf32>
      %122 = arith.addf %121, %120 : vector<8x32xf32>
      %123 = arith.divf %121, %122 : vector<8x32xf32>
      %124 = arith.mulf %118, %123 : vector<8x32xf32>
      %c0_93 = arith.constant 0 : index
      %c0_94 = arith.constant 0 : index
      %125 = vector.load %arg29[%c0_93, %c0_94] : memref<8x32xf32, #tpu.memory_space<vmem>>, vector<8x32xf32>
      %c0_95 = arith.constant 0 : index
      %c0_96 = arith.constant 0 : index
      %c0_97 = arith.constant 0 : index
      %126 = vector.load %arg24[%c0_95, %c0_96, %c0_97] : memref<1x32x32xf32, #tpu.memory_space<vmem>>, vector<1x32x32xf32>
      %127 = vector.shape_cast %126 : vector<1x32x32xf32> to vector<32x32xf32>
      %cst_98 = arith.constant dense<0.000000e+00> : vector<8x32xf32>
      %128 = tpu.matmul %124, %127, %cst_98 {dimension_numbers = #tpu.dot_dimension_numbers<[1], [0], [0], [1], [0, 0, 1, 1], [], []>} : vector<8x32xf32>, vector<32x32xf32>, vector<8x32xf32> -> vector<8x32xf32>
      %129 = arith.addf %125, %128 : vector<8x32xf32>
      %c0_99 = arith.constant 0 : index
      %c0_100 = arith.constant 0 : index
      %c0_101 = arith.constant 0 : index
      %130 = vector.load %arg25[%c0_99, %c0_100, %c0_101] : memref<1x1x32xf32, #tpu.memory_space<vmem>>, vector<1x1x32xf32>
      %131 = vector.shape_cast %130 : vector<1x1x32xf32> to vector<1x32xf32>
      %132 = vector.broadcast %131 : vector<1x32xf32> to vector<8x32xf32>
      %133 = arith.addf %129, %132 : vector<8x32xf32>
      %c0_102 = arith.constant 0 : index
      %c0_103 = arith.constant 0 : index
      %134 = vector.load %arg29[%c0_102, %c0_103] : memref<8x32xf32, #tpu.memory_space<vmem>>, vector<8x32xf32>
      tpu.vector_store %arg29[%c0_102, %c0_103], %133 {strides = array<i32>} : memref<8x32xf32, #tpu.memory_space<vmem>>, vector<8x32xf32>,
    } else {
    }
    %c1_i32_63 = arith.constant 1 : i32
    %88 = arith.cmpi eq, %arg0, %c1_i32_63 : i32
    %c1_i32_64 = arith.constant 1 : i32
    %89 = arith.cmpi eq, %arg1, %c1_i32_64 : i32
    %90 = arith.andi %88, %89 : i1
    %91 = arith.extui %90 : i1 to i32
    %c0_i32_65 = arith.constant 0 : i32
    %92 = arith.cmpi ne, %91, %c0_i32_65 : i32
    scf.if %92 {
      %c0_66 = arith.constant 0 : index
      %c0_67 = arith.constant 0 : index
      %93 = vector.load %arg28[%c0_66, %c0_67] : memref<8x8xf32, #tpu.memory_space<vmem>>, vector<8x8xf32>
      %c0_68 = arith.constant 0 : index
      %c0_69 = arith.constant 0 : index
      %94 = vector.load %arg26[%c0_68, %c0_69] : memref<8x8xf32, #tpu.memory_space<vmem>>, vector<8x8xf32>
      tpu.vector_store %arg26[%c0_68, %c0_69], %93 {strides = array<i32>} : memref<8x8xf32, #tpu.memory_space<vmem>>, vector<8x8xf32>,
      %c0_70 = arith.constant 0 : index
      %c0_71 = arith.constant 0 : index
      %95 = vector.load %arg29[%c0_70, %c0_71] : memref<8x32xf32, #tpu.memory_space<vmem>>, vector<8x32xf32>
      %c0_72 = arith.constant 0 : index
      %c0_73 = arith.constant 0 : index
      %96 = vector.load %arg27[%c0_72, %c0_73] : memref<8x32xf32, #tpu.memory_space<vmem>>, vector<8x32xf32>
      tpu.vector_store %arg27[%c0_72, %c0_73], %95 {strides = array<i32>} : memref<8x32xf32, #tpu.memory_space<vmem>>, vector<8x32xf32>,
    } else {
    }
    return
  }
  func.func @transform_0(%arg0: i32, %arg1: i32) -> (i32, i32) {
    %c0_i32 = arith.constant 0 : i32
    %c0_i32_0 = arith.constant 0 : i32
    %c0_i32_1 = arith.constant 0 : i32
    return %c0_i32, %c0_i32_0 : i32, i32
  }
  func.func @transform_1(%arg0: i32, %arg1: i32) -> (i32, i32) {
    %c0_i32 = arith.constant 0 : i32
    %c0_i32_0 = arith.constant 0 : i32
    %c0_i32_1 = arith.constant 0 : i32
    return %c0_i32, %c0_i32_0 : i32, i32
  }
  func.func @transform_2(%arg0: i32, %arg1: i32) -> (i32, i32) {
    %c0_i32 = arith.constant 0 : i32
    %c0_i32_0 = arith.constant 0 : i32
    %c0_i32_1 = arith.constant 0 : i32
    return %c0_i32, %c0_i32_0 : i32, i32
  }
  func.func @transform_3(%arg0: i32, %arg1: i32) -> (i32, i32) {
    %c0_i32 = arith.constant 0 : i32
    %c0_i32_0 = arith.constant 0 : i32
    return %arg1, %c0_i32 : i32, i32
  }
  func.func @transform_4(%arg0: i32, %arg1: i32) -> (i32, i32) {
    %c0_i32 = arith.constant 0 : i32
    %c0_i32_0 = arith.constant 0 : i32
    return %arg1, %c0_i32 : i32, i32
  }
  func.func @transform_5(%arg0: i32, %arg1: i32) -> (i32, i32) {
    %c0_i32 = arith.constant 0 : i32
    %c0_i32_0 = arith.constant 0 : i32
    return %arg1, %c0_i32 : i32, i32
  }
  func.func @transform_6(%arg0: i32, %arg1: i32) -> (i32, i32) {
    %c0_i32 = arith.constant 0 : i32
    %c0_i32_0 = arith.constant 0 : i32
    %c0_i32_1 = arith.constant 0 : i32
    return %c0_i32, %c0_i32_0 : i32, i32
  }
  func.func @transform_7(%arg0: i32, %arg1: i32) -> (i32, i32) {
    %c0_i32 = arith.constant 0 : i32
    %c0_i32_0 = arith.constant 0 : i32
    %c0_i32_1 = arith.constant 0 : i32
    return %c0_i32, %c0_i32_0 : i32, i32
  }
  func.func @transform_8(%arg0: i32, %arg1: i32) -> (i32, i32, i32) {
    %c0_i32 = arith.constant 0 : i32
    %c0_i32_0 = arith.constant 0 : i32
    %c0_i32_1 = arith.constant 0 : i32
    return %arg0, %c0_i32, %c0_i32_0 : i32, i32, i32
  }
  func.func @transform_9(%arg0: i32, %arg1: i32) -> (i32, i32, i32) {
    %c0_i32 = arith.constant 0 : i32
    %c0_i32_0 = arith.constant 0 : i32
    %c0_i32_1 = arith.constant 0 : i32
    return %arg0, %c0_i32, %c0_i32_0 : i32, i32, i32
  }
  func.func @transform_10(%arg0: i32, %arg1: i32) -> (i32, i32, i32) {
    %c0_i32 = arith.constant 0 : i32
    %c0_i32_0 = arith.constant 0 : i32
    %c0_i32_1 = arith.constant 0 : i32
    return %arg0, %c0_i32, %c0_i32_0 : i32, i32, i32
  }
  func.func @transform_11(%arg0: i32, %arg1: i32) -> (i32, i32, i32) {
    %c0_i32 = arith.constant 0 : i32
    %c0_i32_0 = arith.constant 0 : i32
    %c0_i32_1 = arith.constant 0 : i32
    return %arg0, %c0_i32, %c0_i32_0 : i32, i32, i32
  }
  func.func @transform_12(%arg0: i32, %arg1: i32) -> (i32, i32, i32) {
    %c0_i32 = arith.constant 0 : i32
    %c0_i32_0 = arith.constant 0 : i32
    %c0_i32_1 = arith.constant 0 : i32
    return %arg0, %c0_i32, %c0_i32_0 : i32, i32, i32
  }
  func.func @transform_13(%arg0: i32, %arg1: i32) -> (i32, i32, i32) {
    %c0_i32 = arith.constant 0 : i32
    %c0_i32_0 = arith.constant 0 : i32
    %c0_i32_1 = arith.constant 0 : i32
    return %arg0, %c0_i32, %c0_i32_0 : i32, i32, i32
  }
  func.func @transform_14(%arg0: i32, %arg1: i32) -> (i32, i32, i32) {
    %c0_i32 = arith.constant 0 : i32
    %c0_i32_0 = arith.constant 0 : i32
    %c0_i32_1 = arith.constant 0 : i32
    return %arg0, %c0_i32, %c0_i32_0 : i32, i32, i32
  }
  func.func @transform_15(%arg0: i32, %arg1: i32) -> (i32, i32, i32) {
    %c0_i32 = arith.constant 0 : i32
    %c0_i32_0 = arith.constant 0 : i32
    %c0_i32_1 = arith.constant 0 : i32
    return %arg0, %c0_i32, %c0_i32_0 : i32, i32, i32
  }
  func.func @transform_16(%arg0: i32, %arg1: i32) -> (i32, i32, i32) {
    %c0_i32 = arith.constant 0 : i32
    %c0_i32_0 = arith.constant 0 : i32
    %c0_i32_1 = arith.constant 0 : i32
    return %arg0, %c0_i32, %c0_i32_0 : i32, i32, i32
  }
  func.func @transform_17(%arg0: i32, %arg1: i32) -> (i32, i32, i32) {
    %c0_i32 = arith.constant 0 : i32
    %c0_i32_0 = arith.constant 0 : i32
    %c0_i32_1 = arith.constant 0 : i32
    return %arg0, %c0_i32, %c0_i32_0 : i32, i32, i32
  }
  func.func @transform_18(%arg0: i32, %arg1: i32) -> (i32, i32, i32) {
    %c0_i32 = arith.constant 0 : i32
    %c0_i32_0 = arith.constant 0 : i32
    %c0_i32_1 = arith.constant 0 : i32
    return %arg0, %c0_i32, %c0_i32_0 : i32, i32, i32
  }
  func.func @transform_19(%arg0: i32, %arg1: i32) -> (i32, i32, i32) {
    %c0_i32 = arith.constant 0 : i32
    %c0_i32_0 = arith.constant 0 : i32
    %c0_i32_1 = arith.constant 0 : i32
    return %arg0, %c0_i32, %c0_i32_0 : i32, i32, i32
  }
  func.func @transform_20(%arg0: i32, %arg1: i32) -> (i32, i32, i32) {
    %c0_i32 = arith.constant 0 : i32
    %c0_i32_0 = arith.constant 0 : i32
    %c0_i32_1 = arith.constant 0 : i32
    return %arg0, %c0_i32, %c0_i32_0 : i32, i32, i32
  }
  func.func @transform_21(%arg0: i32, %arg1: i32) -> (i32, i32, i32) {
    %c0_i32 = arith.constant 0 : i32
    %c0_i32_0 = arith.constant 0 : i32
    %c0_i32_1 = arith.constant 0 : i32
    return %arg0, %c0_i32, %c0_i32_0 : i32, i32, i32
  }
  func.func @transform_22(%arg0: i32, %arg1: i32) -> (i32, i32, i32) {
    %c0_i32 = arith.constant 0 : i32
    %c0_i32_0 = arith.constant 0 : i32
    %c0_i32_1 = arith.constant 0 : i32
    return %arg0, %c0_i32, %c0_i32_0 : i32, i32, i32
  }
  func.func @transform_23(%arg0: i32, %arg1: i32) -> (i32, i32, i32) {
    %c0_i32 = arith.constant 0 : i32
    %c0_i32_0 = arith.constant 0 : i32
    %c0_i32_1 = arith.constant 0 : i32
    return %arg0, %c0_i32, %c0_i32_0 : i32, i32, i32
  }
  func.func @transform_24(%arg0: i32, %arg1: i32) -> (i32, i32) {
    %c0_i32 = arith.constant 0 : i32
    %c0_i32_0 = arith.constant 0 : i32
    %c0_i32_1 = arith.constant 0 : i32
    return %c0_i32, %c0_i32_0 : i32, i32
  }
  func.func @transform_25(%arg0: i32, %arg1: i32) -> (i32, i32) {
    %c0_i32 = arith.constant 0 : i32
    %c0_i32_0 = arith.constant 0 : i32
    %c0_i32_1 = arith.constant 0 : i32
    return %c0_i32, %c0_i32_0 : i32, i32
  }
}

</mosaic_0001>

<llo_original>
// kernel: egnn_forward.1
$region0: #{egnn_forward.1}
  #allocation0 [shape = 'u32[]', space=smem, size = 0x4, offset = 0x4, fixed_abs, tag = 'smem constant byte address 0x4 - core index']
  #allocation1 [shape = 'u32[144,128]{1,0:T(1,128)}', space=vmem, size = 0x12000, scoped, tag = 'internal scratch']
  #allocation2 [shape = 'f32[8,8]{1,0:T(8,128)}', space=vmem, size = 0x1000, scoped, tag = 'scratch operand']
  #allocation3 [shape = 'f32[8,32]{1,0:T(8,128)}', space=vmem, size = 0x1000, scoped, tag = 'scratch operand']
  #allocation4 [shape = 'f32[8,32]{1,0:T(8,128)}', space=vmem, size = 0x1000, scoped, tag = 'scratch operand']
  #allocation5 [shape = 'f32[8,32]{1,0:T(8,128)}', space=vmem, size = 0x1000, scoped, tag = 'scratch operand']
  #allocation6 [shape = 'f32[8,8]{1,0:T(8,128)}', space=vmem, size = 0x1000, scoped, tag = 'scratch operand']
  #allocation7 [shape = 'f32[8,32]{1,0:T(8,128)}', space=vmem, size = 0x1000, scoped, tag = 'scratch operand']
  %s0 = inlined_call_operand.hbm [shape: f32[8,8], index: 0, kind: input, shape index: {}]
  %s1 = inlined_call_operand.hbm [shape: f32[8,8], index: 1, kind: input, shape index: {}]
  %s2 = inlined_call_operand.hbm [shape: f32[8,1], index: 2, kind: input, shape index: {}]
  %s3 = inlined_call_operand.hbm [shape: bf16[16,8], index: 3, kind: input, shape index: {}]
  %s4 = inlined_call_operand.hbm [shape: bf16[16,8], index: 4, kind: input, shape index: {}]
  %s5 = inlined_call_operand.hbm [shape: f32[16,4], index: 5, kind: input, shape index: {}]
  %s6 = inlined_call_operand.hbm [shape: f32[8,32], index: 6, kind: input, shape index: {}]
  %s7 = inlined_call_operand.hbm [shape: f32[1,32], index: 7, kind: input, shape index: {}]
  %s8 = inlined_call_operand.hbm [shape: f32[2,1,32], index: 8, kind: input, shape index: {}]
  %s9 = inlined_call_operand.hbm [shape: f32[2,32,32], index: 9, kind: input, shape index: {}]
  %s10 = inlined_call_operand.hbm [shape: f32[2,32,32], index: 10, kind: input, shape index: {}]
  %s11 = inlined_call_operand.hbm [shape: f32[2,4,32], index: 11, kind: input, shape index: {}]
  %s12 = inlined_call_operand.hbm [shape: f32[2,1,32], index: 12, kind: input, shape index: {}]
  %s13 = inlined_call_operand.hbm [shape: f32[2,32,32], index: 13, kind: input, shape index: {}]
  %s14 = inlined_call_operand.hbm [shape: f32[2,1,32], index: 14, kind: input, shape index: {}]
  %s15 = inlined_call_operand.hbm [shape: f32[2,32,32], index: 15, kind: input, shape index: {}]
  %s16 = inlined_call_operand.hbm [shape: f32[2,1,32], index: 16, kind: input, shape index: {}]
  %s17 = inlined_call_operand.hbm [shape: f32[2,1,32], index: 17, kind: input, shape index: {}]
  %s18 = inlined_call_operand.hbm [shape: f32[2,1,1], index: 18, kind: input, shape index: {}]
  %s19 = inlined_call_operand.hbm [shape: f32[2,32,32], index: 19, kind: input, shape index: {}]
  %s20 = inlined_call_operand.hbm [shape: f32[2,32,32], index: 20, kind: input, shape index: {}]
  %s21 = inlined_call_operand.hbm [shape: f32[2,1,32], index: 21, kind: input, shape index: {}]
  %s22 = inlined_call_operand.hbm [shape: f32[2,32,32], index: 22, kind: input, shape index: {}]
  %s23 = inlined_call_operand.hbm [shape: f32[2,1,32], index: 23, kind: input, shape index: {}]
  %s24 = inlined_call_operand.hbm [shape: f32[8,8], index: 24, kind: output, shape index: {0}]
  %s25 = inlined_call_operand.hbm [shape: f32[8,32], index: 25, kind: output, shape index: {1}]
  %26 = xla_tuple %s24, %s25
  %s27 = sld [smem:[#allocation0]]
  $region249: #{egnn_forward.1} parent=0
    _
  %s29 = ssub.s32 1, %s27
  %s30 = scalar_select 0, %s29, %s27
  $region1: #{egnn_forward.1} parent=0
    #allocation8 [shape = 'u8[4096]{0}', space=vmem, size = 0x1000, scoped, tag = 'input window, operand 0, single buffered']
    #allocation9 [shape = 's32[2]{0}', space=sflag, size = 0x8, scoped, tag = 'scoped memory for egnn_forward.1']
    #allocation10 [shape = 's32[2]{0}', space=sflag, size = 0x8, scoped, tag = 'scoped memory for egnn_forward.1']
    #allocation11 [shape = 'u8[4096]{0}', space=vmem, size = 0x1000, scoped, tag = 'input window, operand 1, single buffered']
    #allocation12 [shape = 's32[1]{0}', space=sflag, size = 0x4, scoped, tag = 'scoped memory for egnn_forward.1']
    #allocation13 [shape = 'u8[4096]{0}', space=vmem, size = 0x1000, scoped, tag = 'input window, operand 2, single buffered']
    #allocation14 [shape = 'u8[4096]{0}', space=vmem, size = 0x1000, scoped, tag = 'input window, operand 3']
    #allocation15 [shape = 's32[2]{0}', space=sflag, size = 0x8, scoped, tag = 'scoped memory for egnn_forward.1']
    #allocation16 [shape = 'u8[4096]{0}', space=vmem, size = 0x1000, scoped, tag = 'input window, operand 4']
    #allocation17 [shape = 'u8[8192]{0}', space=vmem, size = 0x2000, scoped, tag = 'input window, operand 5']
    #allocation18 [shape = 's32[2]{0}', space=sflag, size = 0x8, scoped, tag = 'scoped memory for egnn_forward.1']
    #allocation19 [shape = 'u8[4096]{0}', space=vmem, size = 0x1000, scoped, tag = 'input window, operand 6, single buffered']
    #allocation20 [shape = 'u8[512]{0}', space=vmem, size = 0x400, scoped, tag = 'input window, operand 7, single buffered']
    #allocation21 [shape = 's32[1]{0}', space=sflag, size = 0x4, scoped, tag = 'scoped memory for egnn_forward.1']
    #allocation22 [shape = 'u8[1024]{0}', space=vmem, size = 0x400, scoped, tag = 'input window, operand 8']
    #allocation23 [shape = 'u8[32768]{0}', space=vmem, size = 0x8000, scoped, tag = 'input window, operand 9']
    #allocation24 [shape = 'u8[32768]{0}', space=vmem, size = 0x8000, scoped, tag = 'input window, operand 10']
    #allocation25 [shape = 'u8[4096]{0}', space=vmem, size = 0x1000, scoped, tag = 'input window, operand 11']
    #allocation26 [shape = 'u8[1024]{0}', space=vmem, size = 0x400, scoped, tag = 'input window, operand 12']
    #allocation27 [shape = 'u8[32768]{0}', space=vmem, size = 0x8000, scoped, tag = 'input window, operand 13']
    #allocation28 [shape = 'u8[1024]{0}', space=vmem, size = 0x400, scoped, tag = 'input window, operand 14']
    #allocation29 [shape = 'u8[32768]{0}', space=vmem, size = 0x8000, scoped, tag = 'input window, operand 15']
    #allocation30 [shape = 'u8[1024]{0}', space=vmem, size = 0x400, scoped, tag = 'input window, operand 16']
    #allocation31 [shape = 'u8[1024]{0}', space=vmem, size = 0x400, scoped, tag = 'input window, operand 17']
    #allocation32 [shape = 'u8[1024]{0}', space=vmem, size = 0x400, scoped, tag = 'input window, operand 18']
    #allocation33 [shape = 'u8[32768]{0}', space=vmem, size = 0x8000, scoped, tag = 'input window, operand 19']
    #allocation34 [shape = 'u8[32768]{0}', space=vmem, size = 0x8000, scoped, tag = 'input window, operand 20']
    #allocation35 [shape = 'u8[1024]{0}', space=vmem, size = 0x400, scoped, tag = 'input window, operand 21']
    #allocation36 [shape = 'u8[32768]{0}', space=vmem, size = 0x8000, scoped, tag = 'input window, operand 22']
    #allocation37 [shape = 'u8[1024]{0}', space=vmem, size = 0x400, scoped, tag = 'input window, operand 23']
    #allocation38 [shape = 'u8[4096]{0}', space=vmem, size = 0x1000, scoped, tag = 'output window, operand 0, single buffered']
    #allocation39 [shape = 'u8[4096]{0}', space=vmem, size = 0x1000, scoped, tag = 'output window, operand 1, single buffered']
    #allocation40 [shape = 's32[1]{0}', space=sflag, size = 0x4, scoped, tag = 'scoped memory for egnn_forward.1']
    %31 = vsyncpa [#allocation9], 0
    %32 = vsyncpa [#allocation12], 0
    %33 = vsyncpa [#allocation15], 0
    %s34 = scalar_lea.sflag [#allocation15], 1
    %35 = vsyncpa %s34, 0
    %36 = vsyncpa [#allocation18], 0
    %s37 = scalar_lea.sflag [#allocation18], 1
    %38 = vsyncpa %s37, 0
    %39 = vsyncpa [#allocation21], 0
    %40 = vsyncpa [#allocation10], 0
    %41 = vsyncpa [#allocation40], 0
    loop: start=0, step=1, limit=6
    $region2: #{egnn_forward.1} parent=1 // loop_pre_header
      _
    $region3: #{egnn_forward.1} parent=1 // loop_header
      %s43 = sphi 0, %s47
      %p44 = scmp.ge.s32.totalorder %s43, 6
      %s50 = sphi 0, %s62
      %s51 = sphi 0, %s58
      %s52 = sphi 0, %s50
      %s53 = sphi 0, %s51
      %s54 = sphi 0, %s52
      %s55 = sphi 0, %s53
      %s63 = sphi 0, %s63
      %s65 = sphi 0, %s63
      %s66 = sphi 0, %s65
      %s80 = sphi 0, %s66
      %s84 = sphi 0, %s84
      %s86 = sphi 0, %s84
      %s87 = sphi 0, %s86
      %s101 = sphi 0, %s87
      %s105 = sphi 0, %s105
      %s107 = sphi 0, %s105
      %s108 = sphi 0, %s107
      %s122 = sphi 0, %s108
      %s128 = sphi 0, %s130
      %s131 = sphi 0, %s128
      %s132 = sphi 0, %s131
      %s148 = sphi 0, %s132
      %s154 = sphi 0, %s156
      %s157 = sphi 0, %s154
      %s158 = sphi 0, %s157
      %s174 = sphi 0, %s158
      %s180 = sphi 0, %s182
      %s183 = sphi 0, %s180
      %s184 = sphi 0, %s183
      %s200 = sphi 0, %s184
      %s204 = sphi 0, %s204
      %s206 = sphi 0, %s204
      %s207 = sphi 0, %s206
      %s221 = sphi 0, %s207
      %s225 = sphi 0, %s225
      %s227 = sphi 0, %s225
      %s228 = sphi 0, %s227
      %s242 = sphi 0, %s228
      %s248 = sphi 0, %s250
      %s251 = sphi 0, %s248
      %s252 = sphi 0, %s251
      %s268 = sphi 0, %s252
      %s274 = sphi 0, %s276
      %s277 = sphi 0, %s274
      %s278 = sphi 0, %s277
      %s294 = sphi 0, %s278
      %s300 = sphi 0, %s302
      %s303 = sphi 0, %s300
      %s304 = sphi 0, %s303
      %s320 = sphi 0, %s304
      %s326 = sphi 0, %s328
      %s329 = sphi 0, %s326
      %s330 = sphi 0, %s329
      %s346 = sphi 0, %s330
      %s352 = sphi 0, %s354
      %s355 = sphi 0, %s352
      %s356 = sphi 0, %s355
      %s372 = sphi 0, %s356
      %s378 = sphi 0, %s380
      %s381 = sphi 0, %s378
      %s382 = sphi 0, %s381
      %s398 = sphi 0, %s382
      %s404 = sphi 0, %s406
      %s407 = sphi 0, %s404
      %s408 = sphi 0, %s407
      %s424 = sphi 0, %s408
      %s430 = sphi 0, %s432
      %s433 = sphi 0, %s430
      %s434 = sphi 0, %s433
      %s450 = sphi 0, %s434
      %s456 = sphi 0, %s458
      %s459 = sphi 0, %s456
      %s460 = sphi 0, %s459
      %s476 = sphi 0, %s460
      %s482 = sphi 0, %s484
      %s485 = sphi 0, %s482
      %s486 = sphi 0, %s485
      %s502 = sphi 0, %s486
      %s508 = sphi 0, %s510
      %s511 = sphi 0, %s508
      %s512 = sphi 0, %s511
      %s528 = sphi 0, %s512
      %s534 = sphi 0, %s536
      %s537 = sphi 0, %s534
      %s538 = sphi 0, %s537
      %s554 = sphi 0, %s538
      %s560 = sphi 0, %s562
      %s563 = sphi 0, %s560
      %s564 = sphi 0, %s563
      %s580 = sphi 0, %s564
      %s586 = sphi 0, %s588
      %s589 = sphi 0, %s586
      %s590 = sphi 0, %s589
      %s606 = sphi 0, %s590
      %s612 = sphi 0, %s614
      %s615 = sphi 0, %s612
      %s616 = sphi 0, %s615
      %s632 = sphi 0, %s616
      %s638 = sphi 0, %s640
      %s641 = sphi 0, %s638
      %s642 = sphi 0, %s641
      %s658 = sphi 0, %s642
      %s662 = sphi 0, %s662
      %s664 = sphi 0, %s662
      %s665 = sphi 0, %s664
      %s679 = sphi 0, %s665
      %s683 = sphi 0, %s683
      %s685 = sphi 0, %s683
      %s686 = sphi 0, %s685
      %s700 = sphi 0, %s686
    $region4: #{egnn_forward.1} parent=1 // loop_header_branch
      %46 = sbr.rel (%p44) target = $region8
    $region5: #{egnn_forward.1} parent=1 // loop_body
      %s48 = ssub.s32 %s43, 1
      %s49 = ssub.s32 %s43, 2
      %s56 = sadd.s32 1, %s51
      %p57 = scmp.ge.s32.totalorder %s56, 2
      %s58 = scalar_select %p57, 0, %s56
      %s59 = sadd.s32 1, %s50
      %s60 = scalar_select %p57, %s59, %s50
      %p61 = scmp.ge.s32.totalorder %s60, 2
      %s62 = scalar_select %p61, 0, %s60
      %s64 = sadd.s32 %s63, 1
      %p67 = scmp.eq.s32.totalorder %s43, 3
      %p68 = scmp.ne.s32.totalorder %s63, %s65
      %p69 = scmp.eq.s32.totalorder %s43, 0
      %p70 = por %p68, %p69
      %p71 = scmp.ne.s32.totalorder %s63, %s65
      %p72 = scmp.eq.s32.totalorder %s48, 3
      %p73 = por %p71, %p72
      %p74 = scmp.ne.s32.totalorder %s65, %s66
      %p75 = scmp.eq.s32.totalorder %s48, 0
      %p76 = por %p74, %p75
      %p77 = scmp.ne.s32.totalorder %s65, %s66
      %p78 = scmp.eq.s32.totalorder %s49, 3
      %p79 = por %p77, %p78
      %p81 = scmp.ne.s32.totalorder %s66, %s80
      %p82 = scmp.eq.s32.totalorder %s49, 0
      %p83 = por %p81, %p82
      %s85 = sadd.s32 %s84, 1
      %p88 = scmp.eq.s32.totalorder %s43, 3
      %p89 = scmp.ne.s32.totalorder %s84, %s86
      %p90 = scmp.eq.s32.totalorder %s43, 0
      %p91 = por %p89, %p90
      %p92 = scmp.ne.s32.totalorder %s84, %s86
      %p93 = scmp.eq.s32.totalorder %s48, 3
      %p94 = por %p92, %p93
      %p95 = scmp.ne.s32.totalorder %s86, %s87
      %p96 = scmp.eq.s32.totalorder %s48, 0
      %p97 = por %p95, %p96
      %p98 = scmp.ne.s32.totalorder %s86, %s87
      %p99 = scmp.eq.s32.totalorder %s49, 3
      %p100 = por %p98, %p99
      %p102 = scmp.ne.s32.totalorder %s87, %s101
      %p103 = scmp.eq.s32.totalorder %s49, 0
      %p104 = por %p102, %p103
      %s106 = sadd.s32 %s105, 1
      %p109 = scmp.eq.s32.totalorder %s43, 3
      %p110 = scmp.ne.s32.totalorder %s105, %s107
      %p111 = scmp.eq.s32.totalorder %s43, 0
      %p112 = por %p110, %p111
      %p113 = scmp.ne.s32.totalorder %s105, %s107
      %p114 = scmp.eq.s32.totalorder %s48, 3
      %p115 = por %p113, %p114
      %p116 = scmp.ne.s32.totalorder %s107, %s108
      %p117 = scmp.eq.s32.totalorder %s48, 0
      %p118 = por %p116, %p117
      %p119 = scmp.ne.s32.totalorder %s107, %s108
      %p120 = scmp.eq.s32.totalorder %s49, 3
      %p121 = por %p119, %p120
      %p123 = scmp.ne.s32.totalorder %s108, %s122
      %p124 = scmp.eq.s32.totalorder %s49, 0
      %p125 = por %p123, %p124
      %s126 = ssub.s32 %s51, %s58
      %p127 = scmp.eq.s32.totalorder %s126, 0
      %s129 = sadd.s32 %s128, 1
      %s130 = scalar_select %p127, %s128, %s129
      %p133 = pneg %p127
      %p134 = scmp.eq.s32.totalorder %s43, 3
      %p135 = por %p133, %p134
      %p136 = scmp.ne.s32.totalorder %s128, %s131
      %p137 = scmp.eq.s32.totalorder %s43, 0
      %p138 = por %p136, %p137
      %p139 = scmp.ne.s32.totalorder %s128, %s131
      %p140 = scmp.eq.s32.totalorder %s48, 3
      %p141 = por %p139, %p140
      %p142 = scmp.ne.s32.totalorder %s131, %s132
      %p143 = scmp.eq.s32.totalorder %s48, 0
      %p144 = por %p142, %p143
      %p145 = scmp.ne.s32.totalorder %s131, %s132
      %p146 = scmp.eq.s32.totalorder %s49, 3
      %p147 = por %p145, %p146
      %p149 = scmp.ne.s32.totalorder %s132, %s148
      %p150 = scmp.eq.s32.totalorder %s49, 0
      %p151 = por %p149, %p150
      %s152 = ssub.s32 %s51, %s58
      %p153 = scmp.eq.s32.totalorder %s152, 0
      %s155 = sadd.s32 %s154, 1
      %s156 = scalar_select %p153, %s154, %s155
      %p159 = pneg %p153
      %p160 = scmp.eq.s32.totalorder %s43, 3
      %p161 = por %p159, %p160
      %p162 = scmp.ne.s32.totalorder %s154, %s157
      %p163 = scmp.eq.s32.totalorder %s43, 0
      %p164 = por %p162, %p163
      %p165 = scmp.ne.s32.totalorder %s154, %s157
      %p166 = scmp.eq.s32.totalorder %s48, 3
      %p167 = por %p165, %p166
      %p168 = scmp.ne.s32.totalorder %s157, %s158
      %p169 = scmp.eq.s32.totalorder %s48, 0
      %p170 = por %p168, %p169
      %p171 = scmp.ne.s32.totalorder %s157, %s158
      %p172 = scmp.eq.s32.totalorder %s49, 3
      %p173 = por %p171, %p172
      %p175 = scmp.ne.s32.totalorder %s158, %s174
      %p176 = scmp.eq.s32.totalorder %s49, 0
      %p177 = por %p175, %p176
      %s178 = ssub.s32 %s51, %s58
      %p179 = scmp.eq.s32.totalorder %s178, 0
      %s181 = sadd.s32 %s180, 1
      %s182 = scalar_select %p179, %s180, %s181
      %p185 = pneg %p179
      %p186 = scmp.eq.s32.totalorder %s43, 3
      %p187 = por %p185, %p186
      %p188 = scmp.ne.s32.totalorder %s180, %s183
      %p189 = scmp.eq.s32.totalorder %s43, 0
      %p190 = por %p188, %p189
      %p191 = scmp.ne.s32.totalorder %s180, %s183
      %p192 = scmp.eq.s32.totalorder %s48, 3
      %p193 = por %p191, %p192
      %p194 = scmp.ne.s32.totalorder %s183, %s184
      %p195 = scmp.eq.s32.totalorder %s48, 0
      %p196 = por %p194, %p195
      %p197 = scmp.ne.s32.totalorder %s183, %s184
      %p198 = scmp.eq.s32.totalorder %s49, 3
      %p199 = por %p197, %p198
      %p201 = scmp.ne.s32.totalorder %s184, %s200
      %p202 = scmp.eq.s32.totalorder %s49, 0
      %p203 = por %p201, %p202
      %s205 = sadd.s32 %s204, 1
      %p208 = scmp.eq.s32.totalorder %s43, 3
      %p209 = scmp.ne.s32.totalorder %s204, %s206
      %p210 = scmp.eq.s32.totalorder %s43, 0
      %p211 = por %p209, %p210
      %p212 = scmp.ne.s32.totalorder %s204, %s206
      %p213 = scmp.eq.s32.totalorder %s48, 3
      %p214 = por %p212, %p213
      %p215 = scmp.ne.s32.totalorder %s206, %s207
      %p216 = scmp.eq.s32.totalorder %s48, 0
      %p217 = por %p215, %p216
      %p218 = scmp.ne.s32.totalorder %s206, %s207
      %p219 = scmp.eq.s32.totalorder %s49, 3
      %p220 = por %p218, %p219
      %p222 = scmp.ne.s32.totalorder %s207, %s221
      %p223 = scmp.eq.s32.totalorder %s49, 0
      %p224 = por %p222, %p223
      %s226 = sadd.s32 %s225, 1
      %p229 = scmp.eq.s32.totalorder %s43, 3
      %p230 = scmp.ne.s32.totalorder %s225, %s227
      %p231 = scmp.eq.s32.totalorder %s43, 0
      %p232 = por %p230, %p231
      %p233 = scmp.ne.s32.totalorder %s225, %s227
      %p234 = scmp.eq.s32.totalorder %s48, 3
      %p235 = por %p233, %p234
      %p236 = scmp.ne.s32.totalorder %s227, %s228
      %p237 = scmp.eq.s32.totalorder %s48, 0
      %p238 = por %p236, %p237
      %p239 = scmp.ne.s32.totalorder %s227, %s228
      %p240 = scmp.eq.s32.totalorder %s49, 3
      %p241 = por %p239, %p240
      %p243 = scmp.ne.s32.totalorder %s228, %s242
      %p244 = scmp.eq.s32.totalorder %s49, 0
      %p245 = por %p243, %p244
      %s246 = ssub.s32 %s50, %s62
      %p247 = scmp.eq.s32.totalorder %s246, 0
      %s249 = sadd.s32 %s248, 1
      %s250 = scalar_select %p247, %s248, %s249
      %p253 = pneg %p247
      %p254 = scmp.eq.s32.totalorder %s43, 3
      %p255 = por %p253, %p254
      %p256 = scmp.ne.s32.totalorder %s248, %s251
      %p257 = scmp.eq.s32.totalorder %s43, 0
      %p258 = por %p256, %p257
      %p259 = scmp.ne.s32.totalorder %s248, %s251
      %p260 = scmp.eq.s32.totalorder %s48, 3
      %p261 = por %p259, %p260
      %p262 = scmp.ne.s32.totalorder %s251, %s252
      %p263 = scmp.eq.s32.totalorder %s48, 0
      %p264 = por %p262, %p263
      %p265 = scmp.ne.s32.totalorder %s251, %s252
      %p266 = scmp.eq.s32.totalorder %s49, 3
      %p267 = por %p265, %p266
      %p269 = scmp.ne.s32.totalorder %s252, %s268
      %p270 = scmp.eq.s32.totalorder %s49, 0
      %p271 = por %p269, %p270
      %s272 = ssub.s32 %s50, %s62
      %p273 = scmp.eq.s32.totalorder %s272, 0
      %s275 = sadd.s32 %s274, 1
      %s276 = scalar_select %p273, %s274, %s275
      %p279 = pneg %p273
      %p280 = scmp.eq.s32.totalorder %s43, 3
      %p281 = por %p279, %p280
      %p282 = scmp.ne.s32.totalorder %s274, %s277
      %p283 = scmp.eq.s32.totalorder %s43, 0
      %p284 = por %p282, %p283
      %p285 = scmp.ne.s32.totalorder %s274, %s277
      %p286 = scmp.eq.s32.totalorder %s48, 3
      %p287 = por %p285, %p286
      %p288 = scmp.ne.s32.totalorder %s277, %s278
      %p289 = scmp.eq.s32.totalorder %s48, 0
      %p290 = por %p288, %p289
      %p291 = scmp.ne.s32.totalorder %s277, %s278
      %p292 = scmp.eq.s32.totalorder %s49, 3
      %p293 = por %p291, %p292
      %p295 = scmp.ne.s32.totalorder %s278, %s294
      %p296 = scmp.eq.s32.totalorder %s49, 0
      %p297 = por %p295, %p296
      %s298 = ssub.s32 %s50, %s62
      %p299 = scmp.eq.s32.totalorder %s298, 0
      %s301 = sadd.s32 %s300, 1
      %s302 = scalar_select %p299, %s300, %s301
      %p305 = pneg %p299
      %p306 = scmp.eq.s32.totalorder %s43, 3
      %p307 = por %p305, %p306
      %p308 = scmp.ne.s32.totalorder %s300, %s303
      %p309 = scmp.eq.s32.totalorder %s43, 0
      %p310 = por %p308, %p309
      %p311 = scmp.ne.s32.totalorder %s300, %s303
      %p312 = scmp.eq.s32.totalorder %s48, 3
      %p313 = por %p311, %p312
      %p314 = scmp.ne.s32.totalorder %s303, %s304
      %p315 = scmp.eq.s32.totalorder %s48, 0
      %p316 = por %p314, %p315
      %p317 = scmp.ne.s32.totalorder %s303, %s304
      %p318 = scmp.eq.s32.totalorder %s49, 3
      %p319 = por %p317, %p318
      %p321 = scmp.ne.s32.totalorder %s304, %s320
      %p322 = scmp.eq.s32.totalorder %s49, 0
      %p323 = por %p321, %p322
      %s324 = ssub.s32 %s50, %s62
      %p325 = scmp.eq.s32.totalorder %s324, 0
      %s327 = sadd.s32 %s326, 1
      %s328 = scalar_select %p325, %s326, %s327
      %p331 = pneg %p325
      %p332 = scmp.eq.s32.totalorder %s43, 3
      %p333 = por %p331, %p332
      %p334 = scmp.ne.s32.totalorder %s326, %s329
      %p335 = scmp.eq.s32.totalorder %s43, 0
      %p336 = por %p334, %p335
      %p337 = scmp.ne.s32.totalorder %s326, %s329
      %p338 = scmp.eq.s32.totalorder %s48, 3
      %p339 = por %p337, %p338
      %p340 = scmp.ne.s32.totalorder %s329, %s330
      %p341 = scmp.eq.s32.totalorder %s48, 0
      %p342 = por %p340, %p341
      %p343 = scmp.ne.s32.totalorder %s329, %s330
      %p344 = scmp.eq.s32.totalorder %s49, 3
      %p345 = por %p343, %p344
      %p347 = scmp.ne.s32.totalorder %s330, %s346
      %p348 = scmp.eq.s32.totalorder %s49, 0
      %p349 = por %p347, %p348
      %s350 = ssub.s32 %s50, %s62
      %p351 = scmp.eq.s32.totalorder %s350, 0
      %s353 = sadd.s32 %s352, 1
      %s354 = scalar_select %p351, %s352, %s353
      %p357 = pneg %p351
      %p358 = scmp.eq.s32.totalorder %s43, 3
      %p359 = por %p357, %p358
      %p360 = scmp.ne.s32.totalorder %s352, %s355
      %p361 = scmp.eq.s32.totalorder %s43, 0
      %p362 = por %p360, %p361
      %p363 = scmp.ne.s32.totalorder %s352, %s355
      %p364 = scmp.eq.s32.totalorder %s48, 3
      %p365 = por %p363, %p364
      %p366 = scmp.ne.s32.totalorder %s355, %s356
      %p367 = scmp.eq.s32.totalorder %s48, 0
      %p368 = por %p366, %p367
      %p369 = scmp.ne.s32.totalorder %s355, %s356
      %p370 = scmp.eq.s32.totalorder %s49, 3
      %p371 = por %p369, %p370
      %p373 = scmp.ne.s32.totalorder %s356, %s372
      %p374 = scmp.eq.s32.totalorder %s49, 0
      %p375 = por %p373, %p374
      %s376 = ssub.s32 %s50, %s62
      %p377 = scmp.eq.s32.totalorder %s376, 0
      %s379 = sadd.s32 %s378, 1
      %s380 = scalar_select %p377, %s378, %s379
      %p383 = pneg %p377
      %p384 = scmp.eq.s32.totalorder %s43, 3
      %p385 = por %p383, %p384
      %p386 = scmp.ne.s32.totalorder %s378, %s381
      %p387 = scmp.eq.s32.totalorder %s43, 0
      %p388 = por %p386, %p387
      %p389 = scmp.ne.s32.totalorder %s378, %s381
      %p390 = scmp.eq.s32.totalorder %s48, 3
      %p391 = por %p389, %p390
      %p392 = scmp.ne.s32.totalorder %s381, %s382
      %p393 = scmp.eq.s32.totalorder %s48, 0
      %p394 = por %p392, %p393
      %p395 = scmp.ne.s32.totalorder %s381, %s382
      %p396 = scmp.eq.s32.totalorder %s49, 3
      %p397 = por %p395, %p396
      %p399 = scmp.ne.s32.totalorder %s382, %s398
      %p400 = scmp.eq.s32.totalorder %s49, 0
      %p401 = por %p399, %p400
      %s402 = ssub.s32 %s50, %s62
      %p403 = scmp.eq.s32.totalorder %s402, 0
      %s405 = sadd.s32 %s404, 1
      %s406 = scalar_select %p403, %s404, %s405
      %p409 = pneg %p403
      %p410 = scmp.eq.s32.totalorder %s43, 3
      %p411 = por %p409, %p410
      %p412 = scmp.ne.s32.totalorder %s404, %s407
      %p413 = scmp.eq.s32.totalorder %s43, 0
      %p414 = por %p412, %p413
      %p415 = scmp.ne.s32.totalorder %s404, %s407
      %p416 = scmp.eq.s32.totalorder %s48, 3
      %p417 = por %p415, %p416
      %p418 = scmp.ne.s32.totalorder %s407, %s408
      %p419 = scmp.eq.s32.totalorder %s48, 0
      %p420 = por %p418, %p419
      %p421 = scmp.ne.s32.totalorder %s407, %s408
      %p422 = scmp.eq.s32.totalorder %s49, 3
      %p423 = por %p421, %p422
      %p425 = scmp.ne.s32.totalorder %s408, %s424
      %p426 = scmp.eq.s32.totalorder %s49, 0
      %p427 = por %p425, %p426
      %s428 = ssub.s32 %s50, %s62
      %p429 = scmp.eq.s32.totalorder %s428, 0
      %s431 = sadd.s32 %s430, 1
      %s432 = scalar_select %p429, %s430, %s431
      %p435 = pneg %p429
      %p436 = scmp.eq.s32.totalorder %s43, 3
      %p437 = por %p435, %p436
      %p438 = scmp.ne.s32.totalorder %s430, %s433
      %p439 = scmp.eq.s32.totalorder %s43, 0
      %p440 = por %p438, %p439
      %p441 = scmp.ne.s32.totalorder %s430, %s433
      %p442 = scmp.eq.s32.totalorder %s48, 3
      %p443 = por %p441, %p442
      %p444 = scmp.ne.s32.totalorder %s433, %s434
      %p445 = scmp.eq.s32.totalorder %s48, 0
      %p446 = por %p444, %p445
      %p447 = scmp.ne.s32.totalorder %s433, %s434
      %p448 = scmp.eq.s32.totalorder %s49, 3
      %p449 = por %p447, %p448
      %p451 = scmp.ne.s32.totalorder %s434, %s450
      %p452 = scmp.eq.s32.totalorder %s49, 0
      %p453 = por %p451, %p452
      %s454 = ssub.s32 %s50, %s62
      %p455 = scmp.eq.s32.totalorder %s454, 0
      %s457 = sadd.s32 %s456, 1
      %s458 = scalar_select %p455, %s456, %s457
      %p461 = pneg %p455
      %p462 = scmp.eq.s32.totalorder %s43, 3
      %p463 = por %p461, %p462
      %p464 = scmp.ne.s32.totalorder %s456, %s459
      %p465 = scmp.eq.s32.totalorder %s43, 0
      %p466 = por %p464, %p465
      %p467 = scmp.ne.s32.totalorder %s456, %s459
      %p468 = scmp.eq.s32.totalorder %s48, 3
      %p469 = por %p467, %p468
      %p470 = scmp.ne.s32.totalorder %s459, %s460
      %p471 = scmp.eq.s32.totalorder %s48, 0
      %p472 = por %p470, %p471
      %p473 = scmp.ne.s32.totalorder %s459, %s460
      %p474 = scmp.eq.s32.totalorder %s49, 3
      %p475 = por %p473, %p474
      %p477 = scmp.ne.s32.totalorder %s460, %s476
      %p478 = scmp.eq.s32.totalorder %s49, 0
      %p479 = por %p477, %p478
      %s480 = ssub.s32 %s50, %s62
      %p481 = scmp.eq.s32.totalorder %s480, 0
      %s483 = sadd.s32 %s482, 1
      %s484 = scalar_select %p481, %s482, %s483
      %p487 = pneg %p481
      %p488 = scmp.eq.s32.totalorder %s43, 3
      %p489 = por %p487, %p488
      %p490 = scmp.ne.s32.totalorder %s482, %s485
      %p491 = scmp.eq.s32.totalorder %s43, 0
      %p492 = por %p490, %p491
      %p493 = scmp.ne.s32.totalorder %s482, %s485
      %p494 = scmp.eq.s32.totalorder %s48, 3
      %p495 = por %p493, %p494
      %p496 = scmp.ne.s32.totalorder %s485, %s486
      %p497 = scmp.eq.s32.totalorder %s48, 0
      %p498 = por %p496, %p497
      %p499 = scmp.ne.s32.totalorder %s485, %s486
      %p500 = scmp.eq.s32.totalorder %s49, 3
      %p501 = por %p499, %p500
      %p503 = scmp.ne.s32.totalorder %s486, %s502
      %p504 = scmp.eq.s32.totalorder %s49, 0
      %p505 = por %p503, %p504
      %s506 = ssub.s32 %s50, %s62
      %p507 = scmp.eq.s32.totalorder %s506, 0
      %s509 = sadd.s32 %s508, 1
      %s510 = scalar_select %p507, %s508, %s509
      %p513 = pneg %p507
      %p514 = scmp.eq.s32.totalorder %s43, 3
      %p515 = por %p513, %p514
      %p516 = scmp.ne.s32.totalorder %s508, %s511
      %p517 = scmp.eq.s32.totalorder %s43, 0
      %p518 = por %p516, %p517
      %p519 = scmp.ne.s32.totalorder %s508, %s511
      %p520 = scmp.eq.s32.totalorder %s48, 3
      %p521 = por %p519, %p520
      %p522 = scmp.ne.s32.totalorder %s511, %s512
      %p523 = scmp.eq.s32.totalorder %s48, 0
      %p524 = por %p522, %p523
      %p525 = scmp.ne.s32.totalorder %s511, %s512
      %p526 = scmp.eq.s32.totalorder %s49, 3
      %p527 = por %p525, %p526
      %p529 = scmp.ne.s32.totalorder %s512, %s528
      %p530 = scmp.eq.s32.totalorder %s49, 0
      %p531 = por %p529, %p530
      %s532 = ssub.s32 %s50, %s62
      %p533 = scmp.eq.s32.totalorder %s532, 0
      %s535 = sadd.s32 %s534, 1
      %s536 = scalar_select %p533, %s534, %s535
      %p539 = pneg %p533
      %p540 = scmp.eq.s32.totalorder %s43, 3
      %p541 = por %p539, %p540
      %p542 = scmp.ne.s32.totalorder %s534, %s537
      %p543 = scmp.eq.s32.totalorder %s43, 0
      %p544 = por %p542, %p543
      %p545 = scmp.ne.s32.totalorder %s534, %s537
      %p546 = scmp.eq.s32.totalorder %s48, 3
      %p547 = por %p545, %p546
      %p548 = scmp.ne.s32.totalorder %s537, %s538
      %p549 = scmp.eq.s32.totalorder %s48, 0
      %p550 = por %p548, %p549
      %p551 = scmp.ne.s32.totalorder %s537, %s538
      %p552 = scmp.eq.s32.totalorder %s49, 3
      %p553 = por %p551, %p552
      %p555 = scmp.ne.s32.totalorder %s538, %s554
      %p556 = scmp.eq.s32.totalorder %s49, 0
      %p557 = por %p555, %p556
      %s558 = ssub.s32 %s50, %s62
      %p559 = scmp.eq.s32.totalorder %s558, 0
      %s561 = sadd.s32 %s560, 1
      %s562 = scalar_select %p559, %s560, %s561
      %p565 = pneg %p559
      %p566 = scmp.eq.s32.totalorder %s43, 3
      %p567 = por %p565, %p566
      %p568 = scmp.ne.s32.totalorder %s560, %s563
      %p569 = scmp.eq.s32.totalorder %s43, 0
      %p570 = por %p568, %p569
      %p571 = scmp.ne.s32.totalorder %s560, %s563
      %p572 = scmp.eq.s32.totalorder %s48, 3
      %p573 = por %p571, %p572
      %p574 = scmp.ne.s32.totalorder %s563, %s564
      %p575 = scmp.eq.s32.totalorder %s48, 0
      %p576 = por %p574, %p575
      %p577 = scmp.ne.s32.totalorder %s563, %s564
      %p578 = scmp.eq.s32.totalorder %s49, 3
      %p579 = por %p577, %p578
      %p581 = scmp.ne.s32.totalorder %s564, %s580
      %p582 = scmp.eq.s32.totalorder %s49, 0
      %p583 = por %p581, %p582
      %s584 = ssub.s32 %s50, %s62
      %p585 = scmp.eq.s32.totalorder %s584, 0
      %s587 = sadd.s32 %s586, 1
      %s588 = scalar_select %p585, %s586, %s587
      %p591 = pneg %p585
      %p592 = scmp.eq.s32.totalorder %s43, 3
      %p593 = por %p591, %p592
      %p594 = scmp.ne.s32.totalorder %s586, %s589
      %p595 = scmp.eq.s32.totalorder %s43, 0
      %p596 = por %p594, %p595
      %p597 = scmp.ne.s32.totalorder %s586, %s589
      %p598 = scmp.eq.s32.totalorder %s48, 3
      %p599 = por %p597, %p598
      %p600 = scmp.ne.s32.totalorder %s589, %s590
      %p601 = scmp.eq.s32.totalorder %s48, 0
      %p602 = por %p600, %p601
      %p603 = scmp.ne.s32.totalorder %s589, %s590
      %p604 = scmp.eq.s32.totalorder %s49, 3
      %p605 = por %p603, %p604
      %p607 = scmp.ne.s32.totalorder %s590, %s606
      %p608 = scmp.eq.s32.totalorder %s49, 0
      %p609 = por %p607, %p608
      %s610 = ssub.s32 %s50, %s62
      %p611 = scmp.eq.s32.totalorder %s610, 0
      %s613 = sadd.s32 %s612, 1
      %s614 = scalar_select %p611, %s612, %s613
      %p617 = pneg %p611
      %p618 = scmp.eq.s32.totalorder %s43, 3
      %p619 = por %p617, %p618
      %p620 = scmp.ne.s32.totalorder %s612, %s615
      %p621 = scmp.eq.s32.totalorder %s43, 0
      %p622 = por %p620, %p621
      %p623 = scmp.ne.s32.totalorder %s612, %s615
      %p624 = scmp.eq.s32.totalorder %s48, 3
      %p625 = por %p623, %p624
      %p626 = scmp.ne.s32.totalorder %s615, %s616
      %p627 = scmp.eq.s32.totalorder %s48, 0
      %p628 = por %p626, %p627
      %p629 = scmp.ne.s32.totalorder %s615, %s616
      %p630 = scmp.eq.s32.totalorder %s49, 3
      %p631 = por %p629, %p630
      %p633 = scmp.ne.s32.totalorder %s616, %s632
      %p634 = scmp.eq.s32.totalorder %s49, 0
      %p635 = por %p633, %p634
      %s636 = ssub.s32 %s50, %s62
      %p637 = scmp.eq.s32.totalorder %s636, 0
      %s639 = sadd.s32 %s638, 1
      %s640 = scalar_select %p637, %s638, %s639
      %p643 = pneg %p637
      %p644 = scmp.eq.s32.totalorder %s43, 3
      %p645 = por %p643, %p644
      %p646 = scmp.ne.s32.totalorder %s638, %s641
      %p647 = scmp.eq.s32.totalorder %s43, 0
      %p648 = por %p646, %p647
      %p649 = scmp.ne.s32.totalorder %s638, %s641
      %p650 = scmp.eq.s32.totalorder %s48, 3
      %p651 = por %p649, %p650
      %p652 = scmp.ne.s32.totalorder %s641, %s642
      %p653 = scmp.eq.s32.totalorder %s48, 0
      %p654 = por %p652, %p653
      %p655 = scmp.ne.s32.totalorder %s641, %s642
      %p656 = scmp.eq.s32.totalorder %s49, 3
      %p657 = por %p655, %p656
      %p659 = scmp.ne.s32.totalorder %s642, %s658
      %p660 = scmp.eq.s32.totalorder %s49, 0
      %p661 = por %p659, %p660
      %s663 = sadd.s32 %s662, 1
      %p666 = scmp.eq.s32.totalorder %s43, 3
      %p667 = scmp.ne.s32.totalorder %s662, %s664
      %p668 = scmp.eq.s32.totalorder %s43, 0
      %p669 = por %p667, %p668
      %p670 = scmp.ne.s32.totalorder %s662, %s664
      %p671 = scmp.eq.s32.totalorder %s48, 3
      %p672 = por %p670, %p671
      %p673 = scmp.ne.s32.totalorder %s664, %s665
      %p674 = scmp.eq.s32.totalorder %s48, 0
      %p675 = por %p673, %p674
      %p676 = scmp.ne.s32.totalorder %s664, %s665
      %p677 = scmp.eq.s32.totalorder %s49, 3
      %p678 = por %p676, %p677
      %p680 = scmp.ne.s32.totalorder %s665, %s679
      %p681 = scmp.eq.s32.totalorder %s49, 0
      %p682 = por %p680, %p681
      %s684 = sadd.s32 %s683, 1
      %p687 = scmp.eq.s32.totalorder %s43, 3
      %p688 = scmp.ne.s32.totalorder %s683, %s685
      %p689 = scmp.eq.s32.totalorder %s43, 0
      %p690 = por %p688, %p689
      %p691 = scmp.ne.s32.totalorder %s683, %s685
      %p692 = scmp.eq.s32.totalorder %s48, 3
      %p693 = por %p691, %p692
      %p694 = scmp.ne.s32.totalorder %s685, %s686
      %p695 = scmp.eq.s32.totalorder %s48, 0
      %p696 = por %p694, %p695
      %p697 = scmp.ne.s32.totalorder %s685, %s686
      %p698 = scmp.eq.s32.totalorder %s49, 3
      %p699 = por %p697, %p698
      %p701 = scmp.ne.s32.totalorder %s686, %s700
      %p702 = scmp.eq.s32.totalorder %s49, 0
      %p703 = por %p701, %p702
      %p704 = scmp.le.s32.totalorder 1, %s43
      %p705 = scmp.lt.s32.totalorder %s43, 5
      %p706 = pnand %p704, %p705
      %p707 = pneg %p706
      // Predicated region
      $region9: #{egnn_forward.1} parent=5 // pred_check
        _
      $region10: #{egnn_forward.1} parent=5 // pred_check_branch
        %709 = sbr.rel (%p706) target = $region12
      $region11: #{egnn_forward.1} parent=5 // pred_region
        %s710 = ssub.s32 %s43, 1
        // Predicated region
        $region13: #{egnn_forward.1} parent=11 // pred_check
          %p711 = pneg %p76
        $region14: #{egnn_forward.1} parent=11 // pred_check_branch
          %713 = sbr.rel (%p711) target = $region16
        $region15: #{egnn_forward.1} parent=11 // pred_region
          %s715 = ssub.s32 128, 128
          %716 = vsyncadd [#allocation9], %s715
          %s718 = sshll.u32 [#allocation8], 4
          %s719 = int_to_ptr.vmem [resolvable:$true] %s718
          %721 = dma.hbm_to_vmem [thread:$0]  %s0, 128, %s719, [#allocation9]
        $region16: #{egnn_forward.1} parent=11 // pred_fallthru
          _
        // Predicated region
        $region17: #{egnn_forward.1} parent=11 // pred_check
          %p722 = pneg %p97
        $region18: #{egnn_forward.1} parent=11 // pred_check_branch
          %724 = sbr.rel (%p722) target = $region20
        $region19: #{egnn_forward.1} parent=11 // pred_region
          %s726 = ssub.s32 128, 128
          %727 = vsyncadd [#allocation12], %s726
          %s729 = sshll.u32 [#allocation11], 4
          %s730 = int_to_ptr.vmem [resolvable:$true] %s729
          %732 = dma.hbm_to_vmem [thread:$0]  %s1, 128, %s730, [#allocation12]
        $region20: #{egnn_forward.1} parent=11 // pred_fallthru
          _
        // Predicated region
        $region21: #{egnn_forward.1} parent=11 // pred_check
          %p733 = pneg %p118
        $region22: #{egnn_forward.1} parent=11 // pred_check_branch
          %735 = sbr.rel (%p733) target = $region24
        $region23: #{egnn_forward.1} parent=11 // pred_region
          %s737 = ssub.s32 128, 128
          %738 = vsyncadd [#allocation12], %s737
          %s740 = sshll.u32 [#allocation13], 4
          %s741 = int_to_ptr.vmem [resolvable:$true] %s740
          %743 = dma.hbm_to_vmem [thread:$0]  %s2, 128, %s741, [#allocation12]
        $region24: #{egnn_forward.1} parent=11 // pred_fallthru
          _
        // Predicated region
        $region25: #{egnn_forward.1} parent=11 // pred_check
          %p744 = pneg %p217
        $region26: #{egnn_forward.1} parent=11 // pred_check_branch
          %746 = sbr.rel (%p744) target = $region28
        $region27: #{egnn_forward.1} parent=11 // pred_region
          %s748 = ssub.s32 128, 128
          %749 = vsyncadd [#allocation18], %s748
          %s751 = sshll.u32 [#allocation19], 4
          %s752 = int_to_ptr.vmem [resolvable:$true] %s751
          %754 = dma.hbm_to_vmem [thread:$0]  %s6, 128, %s752, [#allocation18]
        $region28: #{egnn_forward.1} parent=11 // pred_fallthru
          _
        // Predicated region
        $region29: #{egnn_forward.1} parent=11 // pred_check
          %p755 = pneg %p238
        $region30: #{egnn_forward.1} parent=11 // pred_check_branch
          %757 = sbr.rel (%p755) target = $region32
        $region31: #{egnn_forward.1} parent=11 // pred_region
          %s759 = ssub.s32 16, 16
          %760 = vsyncadd [#allocation21], %s759
          %s762 = sshll.u32 [#allocation20], 4
          %s763 = int_to_ptr.vmem [resolvable:$true] %s762
          %765 = dma.hbm_to_vmem [thread:$0]  %s7, 16, %s763, [#allocation21]
        $region32: #{egnn_forward.1} parent=11 // pred_fallthru
          _
      $region12: #{egnn_forward.1} parent=5 // pred_fallthru
        _
      %p766 = scmp.lt.s32.totalorder %s43, 4
      // Predicated region
      $region33: #{egnn_forward.1} parent=5 // pred_check
        %p767 = pneg %p766
      $region34: #{egnn_forward.1} parent=5 // pred_check_branch
        %769 = sbr.rel (%p767) target = $region36
      $region35: #{egnn_forward.1} parent=5 // pred_region
        // Predicated region
        $region37: #{egnn_forward.1} parent=35 // pred_check
          %p770 = pneg %p138
        $region38: #{egnn_forward.1} parent=35 // pred_check_branch
          %772 = sbr.rel (%p770) target = $region40
        $region39: #{egnn_forward.1} parent=35 // pred_region
          %s773 = sand.u32 %s43, 1
          %s774 = scalar_lea.sflag [#allocation15], %s773
          %s775 = sand.u32 %s128, 1
          %s776 = smul.addr %s775, 4
          %s777 = scalar_lea.vmem [#allocation14], %s776
          %s779 = ssub.s32 64, 64
          %780 = vsyncadd %s774, %s779
          %s781 = smul.addr %s51, 64
          %s782 = scalar_lea.hbm %s3, %s781
          %s784 = sshll.u32 %s777, 4
          %s785 = int_to_ptr.vmem [resolvable:$true] %s784
          %787 = dma.hbm_to_vmem [thread:$0]  %s782, 64, %s785, %s774
        $region40: #{egnn_forward.1} parent=35 // pred_fallthru
          _
        // Predicated region
        $region41: #{egnn_forward.1} parent=35 // pred_check
          %p788 = pneg %p164
        $region42: #{egnn_forward.1} parent=35 // pred_check_branch
          %790 = sbr.rel (%p788) target = $region44
        $region43: #{egnn_forward.1} parent=35 // pred_region
          %s791 = sand.u32 %s43, 1
          %s792 = scalar_lea.sflag [#allocation15], %s791
          %s793 = sand.u32 %s154, 1
          %s794 = smul.addr %s793, 4
          %s795 = scalar_lea.vmem [#allocation16], %s794
          %s797 = ssub.s32 64, 64
          %798 = vsyncadd %s792, %s797
          %s799 = smul.addr %s51, 64
          %s800 = scalar_lea.hbm %s4, %s799
          %s802 = sshll.u32 %s795, 4
          %s803 = int_to_ptr.vmem [resolvable:$true] %s802
          %805 = dma.hbm_to_vmem [thread:$0]  %s800, 64, %s803, %s792
        $region44: #{egnn_forward.1} parent=35 // pred_fallthru
          _
        // Predicated region
        $region45: #{egnn_forward.1} parent=35 // pred_check
          %p806 = pneg %p190
        $region46: #{egnn_forward.1} parent=35 // pred_check_branch
          %808 = sbr.rel (%p806) target = $region48
        $region47: #{egnn_forward.1} parent=35 // pred_region
          %s809 = sand.u32 %s43, 1
          %s810 = scalar_lea.sflag [#allocation18], %s809
          %s811 = sand.u32 %s180, 1
          %s812 = smul.addr %s811, 8
          %s813 = scalar_lea.vmem [#allocation17], %s812
          %s815 = ssub.s32 128, 128
          %816 = vsyncadd %s810, %s815
          %s817 = smul.addr %s51, 128
          %s818 = scalar_lea.hbm %s5, %s817
          %s820 = sshll.u32 %s813, 4
          %s821 = int_to_ptr.vmem [resolvable:$true] %s820
          %823 = dma.hbm_to_vmem [thread:$0]  %s818, 128, %s821, %s810
        $region48: #{egnn_forward.1} parent=35 // pred_fallthru
          _
        // Predicated region
        $region49: #{egnn_forward.1} parent=35 // pred_check
          %p824 = pneg %p258
        $region50: #{egnn_forward.1} parent=35 // pred_check_branch
          %826 = sbr.rel (%p824) target = $region52
        $region51: #{egnn_forward.1} parent=35 // pred_region
          %s827 = sand.u32 %s43, 1
          %s828 = scalar_lea.sflag [#allocation9], %s827
          %s829 = sand.u32 %s248, 1
          %s830 = scalar_lea.vmem [#allocation22], %s829
          %s832 = ssub.s32 16, 16
          %833 = vsyncadd %s828, %s832
          %s834 = smul.addr %s50, 16
          %s835 = scalar_lea.hbm %s8, %s834
          %s837 = sshll.u32 %s830, 4
          %s838 = int_to_ptr.vmem [resolvable:$true] %s837
          %840 = dma.hbm_to_vmem [thread:$0]  %s835, 16, %s838, %s828
        $region52: #{egnn_forward.1} parent=35 // pred_fallthru
          _
        // Predicated region
        $region53: #{egnn_forward.1} parent=35 // pred_check
          %p841 = pneg %p284
        $region54: #{egnn_forward.1} parent=35 // pred_check_branch
          %843 = sbr.rel (%p841) target = $region56
        $region55: #{egnn_forward.1} parent=35 // pred_region
          %s844 = sand.u32 %s43, 1
          %s845 = scalar_lea.sflag [#allocation15], %s844
          %s846 = sand.u32 %s274, 1
          %s847 = smul.addr %s846, 32
          %s848 = scalar_lea.vmem [#allocation23], %s847
          %s850 = ssub.s32 512, 512
          %851 = vsyncadd %s845, %s850
          %s852 = smul.addr %s50, 4
          %s853 = smul.addr %s852, 128
          %s854 = scalar_lea.hbm %s9, %s853
          %s855 = sshll.u32 %s848, 4
          %s856 = int_to_ptr.vmem [resolvable:$true] %s855
          %861 = dma.hbm_to_vmem [thread:$0]  %s854, 512, %s856, %s845, 128, 128, 8
        $region56: #{egnn_forward.1} parent=35 // pred_fallthru
          _
        // Predicated region
        $region57: #{egnn_forward.1} parent=35 // pred_check
          %p862 = pneg %p310
        $region58: #{egnn_forward.1} parent=35 // pred_check_branch
          %864 = sbr.rel (%p862) target = $region60
        $region59: #{egnn_forward.1} parent=35 // pred_region
          %s865 = sand.u32 %s43, 1
          %s866 = scalar_lea.sflag [#allocation18], %s865
          %s867 = sand.u32 %s300, 1
          %s868 = smul.addr %s867, 32
          %s869 = scalar_lea.vmem [#allocation24], %s868
          %s871 = ssub.s32 512, 512
          %872 = vsyncadd %s866, %s871
          %s873 = smul.addr %s50, 4
          %s874 = smul.addr %s873, 128
          %s875 = scalar_lea.hbm %s10, %s874
          %s876 = sshll.u32 %s869, 4
          %s877 = int_to_ptr.vmem [resolvable:$true] %s876
          %882 = dma.hbm_to_vmem [thread:$0]  %s875, 512, %s877, %s866, 128, 128, 8
        $region60: #{egnn_forward.1} parent=35 // pred_fallthru
          _
        // Predicated region
        $region61: #{egnn_forward.1} parent=35 // pred_check
          %p883 = pneg %p336
        $region62: #{egnn_forward.1} parent=35 // pred_check_branch
          %885 = sbr.rel (%p883) target = $region64
        $region63: #{egnn_forward.1} parent=35 // pred_region
          %s886 = sand.u32 %s43, 1
          %s887 = scalar_lea.sflag [#allocation9], %s886
          %s888 = sand.u32 %s326, 1
          %s889 = smul.addr %s888, 4
          %s890 = scalar_lea.vmem [#allocation25], %s889
          %s892 = ssub.s32 64, 64
          %893 = vsyncadd %s887, %s892
          %s894 = smul.addr %s50, 64
          %s895 = scalar_lea.hbm %s11, %s894
          %s897 = sshll.u32 %s890, 4
          %s898 = int_to_ptr.vmem [resolvable:$true] %s897
          %900 = dma.hbm_to_vmem [thread:$0]  %s895, 64, %s898, %s887
        $region64: #{egnn_forward.1} parent=35 // pred_fallthru
          _
        // Predicated region
        $region65: #{egnn_forward.1} parent=35 // pred_check
          %p901 = pneg %p362
        $region66: #{egnn_forward.1} parent=35 // pred_check_branch
          %903 = sbr.rel (%p901) target = $region68
        $region67: #{egnn_forward.1} parent=35 // pred_region
          %s904 = sand.u32 %s43, 1
          %s905 = scalar_lea.sflag [#allocation15], %s904
          %s906 = sand.u32 %s352, 1
          %s907 = scalar_lea.vmem [#allocation26], %s906
          %s909 = ssub.s32 16, 16
          %910 = vsyncadd %s905, %s909
          %s911 = smul.addr %s50, 16
          %s912 = scalar_lea.hbm %s12, %s911
          %s914 = sshll.u32 %s907, 4
          %s915 = int_to_ptr.vmem [resolvable:$true] %s914
          %917 = dma.hbm_to_vmem [thread:$0]  %s912, 16, %s915, %s905
        $region68: #{egnn_forward.1} parent=35 // pred_fallthru
          _
        // Predicated region
        $region69: #{egnn_forward.1} parent=35 // pred_check
          %p918 = pneg %p388
        $region70: #{egnn_forward.1} parent=35 // pred_check_branch
          %920 = sbr.rel (%p918) target = $region72
        $region71: #{egnn_forward.1} parent=35 // pred_region
          %s921 = sand.u32 %s43, 1
          %s922 = scalar_lea.sflag [#allocation18], %s921
          %s923 = sand.u32 %s378, 1
          %s924 = smul.addr %s923, 32
          %s925 = scalar_lea.vmem [#allocation27], %s924
          %s927 = ssub.s32 512, 512
          %928 = vsyncadd %s922, %s927
          %s929 = smul.addr %s50, 4
          %s930 = smul.addr %s929, 128
          %s931 = scalar_lea.hbm %s13, %s930
          %s932 = sshll.u32 %s925, 4
          %s933 = int_to_ptr.vmem [resolvable:$true] %s932
          %938 = dma.hbm_to_vmem [thread:$0]  %s931, 512, %s933, %s922, 128, 128, 8
        $region72: #{egnn_forward.1} parent=35 // pred_fallthru
          _
        // Predicated region
        $region73: #{egnn_forward.1} parent=35 // pred_check
          %p939 = pneg %p414
        $region74: #{egnn_forward.1} parent=35 // pred_check_branch
          %941 = sbr.rel (%p939) target = $region76
        $region75: #{egnn_forward.1} parent=35 // pred_region
          %s942 = sand.u32 %s43, 1
          %s943 = scalar_lea.sflag [#allocation9], %s942
          %s944 = sand.u32 %s404, 1
          %s945 = scalar_lea.vmem [#allocation28], %s944
          %s947 = ssub.s32 16, 16
          %948 = vsyncadd %s943, %s947
          %s949 = smul.addr %s50, 16
          %s950 = scalar_lea.hbm %s14, %s949
          %s952 = sshll.u32 %s945, 4
          %s953 = int_to_ptr.vmem [resolvable:$true] %s952
          %955 = dma.hbm_to_vmem [thread:$0]  %s950, 16, %s953, %s943
        $region76: #{egnn_forward.1} parent=35 // pred_fallthru
          _
        // Predicated region
        $region77: #{egnn_forward.1} parent=35 // pred_check
          %p956 = pneg %p440
        $region78: #{egnn_forward.1} parent=35 // pred_check_branch
          %958 = sbr.rel (%p956) target = $region80
        $region79: #{egnn_forward.1} parent=35 // pred_region
          %s959 = sand.u32 %s43, 1
          %s960 = scalar_lea.sflag [#allocation15], %s959
          %s961 = sand.u32 %s430, 1
          %s962 = smul.addr %s961, 32
          %s963 = scalar_lea.vmem [#allocation29], %s962
          %s965 = ssub.s32 512, 512
          %966 = vsyncadd %s960, %s965
          %s967 = smul.addr %s50, 4
          %s968 = smul.addr %s967, 128
          %s969 = scalar_lea.hbm %s15, %s968
          %s970 = sshll.u32 %s963, 4
          %s971 = int_to_ptr.vmem [resolvable:$true] %s970
          %976 = dma.hbm_to_vmem [thread:$0]  %s969, 512, %s971, %s960, 128, 128, 8
        $region80: #{egnn_forward.1} parent=35 // pred_fallthru
          _
        // Predicated region
        $region81: #{egnn_forward.1} parent=35 // pred_check
          %p977 = pneg %p466
        $region82: #{egnn_forward.1} parent=35 // pred_check_branch
          %979 = sbr.rel (%p977) target = $region84
        $region83: #{egnn_forward.1} parent=35 // pred_region
          %s980 = sand.u32 %s43, 1
          %s981 = scalar_lea.sflag [#allocation18], %s980
          %s982 = sand.u32 %s456, 1
          %s983 = scalar_lea.vmem [#allocation30], %s982
          %s985 = ssub.s32 16, 16
          %986 = vsyncadd %s981, %s985
          %s987 = smul.addr %s50, 16
          %s988 = scalar_lea.hbm %s16, %s987
          %s990 = sshll.u32 %s983, 4
          %s991 = int_to_ptr.vmem [resolvable:$true] %s990
          %993 = dma.hbm_to_vmem [thread:$0]  %s988, 16, %s991, %s981
        $region84: #{egnn_forward.1} parent=35 // pred_fallthru
          _
        // Predicated region
        $region85: #{egnn_forward.1} parent=35 // pred_check
          %p994 = pneg %p492
        $region86: #{egnn_forward.1} parent=35 // pred_check_branch
          %996 = sbr.rel (%p994) target = $region88
        $region87: #{egnn_forward.1} parent=35 // pred_region
          %s997 = sand.u32 %s43, 1
          %s998 = scalar_lea.sflag [#allocation9], %s997
          %s999 = sand.u32 %s482, 1
          %s1000 = scalar_lea.vmem [#allocation31], %s999
          %s1002 = ssub.s32 16, 16
          %1003 = vsyncadd %s998, %s1002
          %s1004 = smul.addr %s50, 16
          %s1005 = scalar_lea.hbm %s17, %s1004
          %s1007 = sshll.u32 %s1000, 4
          %s1008 = int_to_ptr.vmem [resolvable:$true] %s1007
          %1010 = dma.hbm_to_vmem [thread:$0]  %s1005, 16, %s1008, %s998
        $region88: #{egnn_forward.1} parent=35 // pred_fallthru
          _
        // Predicated region
        $region89: #{egnn_forward.1} parent=35 // pred_check
          %p1011 = pneg %p518
        $region90: #{egnn_forward.1} parent=35 // pred_check_branch
          %1013 = sbr.rel (%p1011) target = $region92
        $region91: #{egnn_forward.1} parent=35 // pred_region
          %s1014 = sand.u32 %s43, 1
          %s1015 = scalar_lea.sflag [#allocation15], %s1014
          %s1016 = sand.u32 %s508, 1
          %s1017 = scalar_lea.vmem [#allocation32], %s1016
          %s1019 = ssub.s32 16, 16
          %1020 = vsyncadd %s1015, %s1019
          %s1021 = smul.addr %s50, 16
          %s1022 = scalar_lea.hbm %s18, %s1021
          %s1024 = sshll.u32 %s1017, 4
          %s1025 = int_to_ptr.vmem [resolvable:$true] %s1024
          %1027 = dma.hbm_to_vmem [thread:$0]  %s1022, 16, %s1025, %s1015
        $region92: #{egnn_forward.1} parent=35 // pred_fallthru
          _
        // Predicated region
        $region93: #{egnn_forward.1} parent=35 // pred_check
          %p1028 = pneg %p544
        $region94: #{egnn_forward.1} parent=35 // pred_check_branch
          %1030 = sbr.rel (%p1028) target = $region96
        $region95: #{egnn_forward.1} parent=35 // pred_region
          %s1031 = sand.u32 %s43, 1
          %s1032 = scalar_lea.sflag [#allocation18], %s1031
          %s1033 = sand.u32 %s534, 1
          %s1034 = smul.addr %s1033, 32
          %s1035 = scalar_lea.vmem [#allocation33], %s1034
          %s1037 = ssub.s32 512, 512
          %1038 = vsyncadd %s1032, %s1037
          %s1039 = smul.addr %s50, 4
          %s1040 = smul.addr %s1039, 128
          %s1041 = scalar_lea.hbm %s19, %s1040
          %s1042 = sshll.u32 %s1035, 4
          %s1043 = int_to_ptr.vmem [resolvable:$true] %s1042
          %1048 = dma.hbm_to_vmem [thread:$0]  %s1041, 512, %s1043, %s1032, 128, 128, 8
        $region96: #{egnn_forward.1} parent=35 // pred_fallthru
          _
        // Predicated region
        $region97: #{egnn_forward.1} parent=35 // pred_check
          %p1049 = pneg %p570
        $region98: #{egnn_forward.1} parent=35 // pred_check_branch
          %1051 = sbr.rel (%p1049) target = $region100
        $region99: #{egnn_forward.1} parent=35 // pred_region
          %s1052 = sand.u32 %s43, 1
          %s1053 = scalar_lea.sflag [#allocation9], %s1052
          %s1054 = sand.u32 %s560, 1
          %s1055 = smul.addr %s1054, 32
          %s1056 = scalar_lea.vmem [#allocation34], %s1055
          %s1058 = ssub.s32 512, 512
          %1059 = vsyncadd %s1053, %s1058
          %s1060 = smul.addr %s50, 4
          %s1061 = smul.addr %s1060, 128
          %s1062 = scalar_lea.hbm %s20, %s1061
          %s1063 = sshll.u32 %s1056, 4
          %s1064 = int_to_ptr.vmem [resolvable:$true] %s1063
          %1069 = dma.hbm_to_vmem [thread:$0]  %s1062, 512, %s1064, %s1053, 128, 128, 8
        $region100: #{egnn_forward.1} parent=35 // pred_fallthru
          _
        // Predicated region
        $region101: #{egnn_forward.1} parent=35 // pred_check
          %p1070 = pneg %p596
        $region102: #{egnn_forward.1} parent=35 // pred_check_branch
          %1072 = sbr.rel (%p1070) target = $region104
        $region103: #{egnn_forward.1} parent=35 // pred_region
          %s1073 = sand.u32 %s43, 1
          %s1074 = scalar_lea.sflag [#allocation15], %s1073
          %s1075 = sand.u32 %s586, 1
          %s1076 = scalar_lea.vmem [#allocation35], %s1075
          %s1078 = ssub.s32 16, 16
          %1079 = vsyncadd %s1074, %s1078
          %s1080 = smul.addr %s50, 16
          %s1081 = scalar_lea.hbm %s21, %s1080
          %s1083 = sshll.u32 %s1076, 4
          %s1084 = int_to_ptr.vmem [resolvable:$true] %s1083
          %1086 = dma.hbm_to_vmem [thread:$0]  %s1081, 16, %s1084, %s1074
        $region104: #{egnn_forward.1} parent=35 // pred_fallthru
          _
        // Predicated region
        $region105: #{egnn_forward.1} parent=35 // pred_check
          %p1087 = pneg %p622
        $region106: #{egnn_forward.1} parent=35 // pred_check_branch
          %1089 = sbr.rel (%p1087) target = $region108
        $region107: #{egnn_forward.1} parent=35 // pred_region
          %s1090 = sand.u32 %s43, 1
          %s1091 = scalar_lea.sflag [#allocation18], %s1090
          %s1092 = sand.u32 %s612, 1
          %s1093 = smul.addr %s1092, 32
          %s1094 = scalar_lea.vmem [#allocation36], %s1093
          %s1096 = ssub.s32 512, 512
          %1097 = vsyncadd %s1091, %s1096
          %s1098 = smul.addr %s50, 4
          %s1099 = smul.addr %s1098, 128
          %s1100 = scalar_lea.hbm %s22, %s1099
          %s1101 = sshll.u32 %s1094, 4
          %s1102 = int_to_ptr.vmem [resolvable:$true] %s1101
          %1107 = dma.hbm_to_vmem [thread:$0]  %s1100, 512, %s1102, %s1091, 128, 128, 8
        $region108: #{egnn_forward.1} parent=35 // pred_fallthru
          _
        // Predicated region
        $region109: #{egnn_forward.1} parent=35 // pred_check
          %p1108 = pneg %p648
        $region110: #{egnn_forward.1} parent=35 // pred_check_branch
          %1110 = sbr.rel (%p1108) target = $region112
        $region111: #{egnn_forward.1} parent=35 // pred_region
          %s1111 = sand.u32 %s43, 1
          %s1112 = scalar_lea.sflag [#allocation9], %s1111
          %s1113 = sand.u32 %s638, 1
          %s1114 = scalar_lea.vmem [#allocation37], %s1113
          %s1116 = ssub.s32 16, 16
          %1117 = vsyncadd %s1112, %s1116
          %s1118 = smul.addr %s50, 16
          %s1119 = scalar_lea.hbm %s23, %s1118
          %s1121 = sshll.u32 %s1114, 4
          %s1122 = int_to_ptr.vmem [resolvable:$true] %s1121
          %1124 = dma.hbm_to_vmem [thread:$0]  %s1119, 16, %s1122, %s1112
        $region112: #{egnn_forward.1} parent=35 // pred_fallthru
          _
      $region36: #{egnn_forward.1} parent=5 // pred_fallthru
        _
      %p1125 = scmp.le.s32.totalorder 1, %s43
      %p1126 = scmp.lt.s32.totalorder %s43, 5
      %p1127 = pnand %p1125, %p1126
      %p1128 = pneg %p1127
      // Predicated region
      $region113: #{egnn_forward.1} parent=5 // pred_check
        _
      $region114: #{egnn_forward.1} parent=5 // pred_check_branch
        %1130 = sbr.rel (%p1127) target = $region116
      $region115: #{egnn_forward.1} parent=5 // pred_region
        %s1131 = ssub.s32 %s43, 1
        // Predicated region
        $region117: #{egnn_forward.1} parent=115 // pred_check
          %p1132 = pneg %p76
        $region118: #{egnn_forward.1} parent=115 // pred_check_branch
          %1134 = sbr.rel (%p1132) target = $region120
        $region119: #{egnn_forward.1} parent=115 // pred_region
          %1135 = dma.done [#allocation9], 128
        $region120: #{egnn_forward.1} parent=115 // pred_fallthru
          _
        // Predicated region
        $region121: #{egnn_forward.1} parent=115 // pred_check
          %p1136 = pneg %p97
        $region122: #{egnn_forward.1} parent=115 // pred_check_branch
          %1138 = sbr.rel (%p1136) target = $region124
        $region123: #{egnn_forward.1} parent=115 // pred_region
          %1139 = dma.done [#allocation12], 128
        $region124: #{egnn_forward.1} parent=115 // pred_fallthru
          _
        // Predicated region
        $region125: #{egnn_forward.1} parent=115 // pred_check
          %p1140 = pneg %p118
        $region126: #{egnn_forward.1} parent=115 // pred_check_branch
          %1142 = sbr.rel (%p1140) target = $region128
        $region127: #{egnn_forward.1} parent=115 // pred_region
          %1143 = dma.done [#allocation12], 128
        $region128: #{egnn_forward.1} parent=115 // pred_fallthru
          _
        %s1144 = sand.u32 %s48, 1
        %s1145 = scalar_lea.sflag [#allocation15], %s1144
        %s1146 = sand.u32 %s131, 1
        %s1147 = smul.addr %s1146, 4
        %s1148 = scalar_lea.vmem [#allocation14], %s1147
        // Predicated region
        $region129: #{egnn_forward.1} parent=115 // pred_check
          %p1149 = pneg %p144
        $region130: #{egnn_forward.1} parent=115 // pred_check_branch
          %1151 = sbr.rel (%p1149) target = $region132
        $region131: #{egnn_forward.1} parent=115 // pred_region
          %1152 = dma.done %s1145, 64
        $region132: #{egnn_forward.1} parent=115 // pred_fallthru
          _
        %s1153 = sand.u32 %s48, 1
        %s1154 = scalar_lea.sflag [#allocation15], %s1153
        %s1155 = sand.u32 %s157, 1
        %s1156 = smul.addr %s1155, 4
        %s1157 = scalar_lea.vmem [#allocation16], %s1156
        // Predicated region
        $region133: #{egnn_forward.1} parent=115 // pred_check
          %p1158 = pneg %p170
        $region134: #{egnn_forward.1} parent=115 // pred_check_branch
          %1160 = sbr.rel (%p1158) target = $region136
        $region135: #{egnn_forward.1} parent=115 // pred_region
          %1161 = dma.done %s1154, 64
        $region136: #{egnn_forward.1} parent=115 // pred_fallthru
          _
        %s1162 = sand.u32 %s48, 1
        %s1163 = scalar_lea.sflag [#allocation18], %s1162
        %s1164 = sand.u32 %s183, 1
        %s1165 = smul.addr %s1164, 8
        %s1166 = scalar_lea.vmem [#allocation17], %s1165
        // Predicated region
        $region137: #{egnn_forward.1} parent=115 // pred_check
          %p1167 = pneg %p196
        $region138: #{egnn_forward.1} parent=115 // pred_check_branch
          %1169 = sbr.rel (%p1167) target = $region140
        $region139: #{egnn_forward.1} parent=115 // pred_region
          %1170 = dma.done %s1163, 128
        $region140: #{egnn_forward.1} parent=115 // pred_fallthru
          _
        // Predicated region
        $region141: #{egnn_forward.1} parent=115 // pred_check
          %p1171 = pneg %p217
        $region142: #{egnn_forward.1} parent=115 // pred_check_branch
          %1173 = sbr.rel (%p1171) target = $region144
        $region143: #{egnn_forward.1} parent=115 // pred_region
          %1174 = dma.done [#allocation18], 128
        $region144: #{egnn_forward.1} parent=115 // pred_fallthru
          _
        // Predicated region
        $region145: #{egnn_forward.1} parent=115 // pred_check
          %p1175 = pneg %p238
        $region146: #{egnn_forward.1} parent=115 // pred_check_branch
          %1177 = sbr.rel (%p1175) target = $region148
        $region147: #{egnn_forward.1} parent=115 // pred_region
          %1178 = dma.done [#allocation21], 16
        $region148: #{egnn_forward.1} parent=115 // pred_fallthru
          _
        %s1179 = sand.u32 %s48, 1
        %s1180 = scalar_lea.sflag [#allocation9], %s1179
        %s1181 = sand.u32 %s251, 1
        %s1182 = scalar_lea.vmem [#allocation22], %s1181
        // Predicated region
        $region149: #{egnn_forward.1} parent=115 // pred_check
          %p1183 = pneg %p264
        $region150: #{egnn_forward.1} parent=115 // pred_check_branch
          %1185 = sbr.rel (%p1183) target = $region152
        $region151: #{egnn_forward.1} parent=115 // pred_region
          %1186 = dma.done %s1180, 16
        $region152: #{egnn_forward.1} parent=115 // pred_fallthru
          _
        %s1187 = sand.u32 %s48, 1
        %s1188 = scalar_lea.sflag [#allocation15], %s1187
        %s1189 = sand.u32 %s277, 1
        %s1190 = smul.addr %s1189, 32
        %s1191 = scalar_lea.vmem [#allocation23], %s1190
        // Predicated region
        $region153: #{egnn_forward.1} parent=115 // pred_check
          %p1192 = pneg %p290
        $region154: #{egnn_forward.1} parent=115 // pred_check_branch
          %1194 = sbr.rel (%p1192) target = $region156
        $region155: #{egnn_forward.1} parent=115 // pred_region
          %1195 = dma.done %s1188, 512
        $region156: #{egnn_forward.1} parent=115 // pred_fallthru
          _
        %s1196 = sand.u32 %s48, 1
        %s1197 = scalar_lea.sflag [#allocation18], %s1196
        %s1198 = sand.u32 %s303, 1
        %s1199 = smul.addr %s1198, 32
        %s1200 = scalar_lea.vmem [#allocation24], %s1199
        // Predicated region
        $region157: #{egnn_forward.1} parent=115 // pred_check
          %p1201 = pneg %p316
        $region158: #{egnn_forward.1} parent=115 // pred_check_branch
          %1203 = sbr.rel (%p1201) target = $region160
        $region159: #{egnn_forward.1} parent=115 // pred_region
          %1204 = dma.done %s1197, 512
        $region160: #{egnn_forward.1} parent=115 // pred_fallthru
          _
        %s1205 = sand.u32 %s48, 1
        %s1206 = scalar_lea.sflag [#allocation9], %s1205
        %s1207 = sand.u32 %s329, 1
        %s1208 = smul.addr %s1207, 4
        %s1209 = scalar_lea.vmem [#allocation25], %s1208
        // Predicated region
        $region161: #{egnn_forward.1} parent=115 // pred_check
          %p1210 = pneg %p342
        $region162: #{egnn_forward.1} parent=115 // pred_check_branch
          %1212 = sbr.rel (%p1210) target = $region164
        $region163: #{egnn_forward.1} parent=115 // pred_region
          %1213 = dma.done %s1206, 64
        $region164: #{egnn_forward.1} parent=115 // pred_fallthru
          _
        %s1214 = sand.u32 %s48, 1
        %s1215 = scalar_lea.sflag [#allocation15], %s1214
        %s1216 = sand.u32 %s355, 1
        %s1217 = scalar_lea.vmem [#allocation26], %s1216
        // Predicated region
        $region165: #{egnn_forward.1} parent=115 // pred_check
          %p1218 = pneg %p368
        $region166: #{egnn_forward.1} parent=115 // pred_check_branch
          %1220 = sbr.rel (%p1218) target = $region168
        $region167: #{egnn_forward.1} parent=115 // pred_region
          %1221 = dma.done %s1215, 16
        $region168: #{egnn_forward.1} parent=115 // pred_fallthru
          _
        %s1222 = sand.u32 %s48, 1
        %s1223 = scalar_lea.sflag [#allocation18], %s1222
        %s1224 = sand.u32 %s381, 1
        %s1225 = smul.addr %s1224, 32
        %s1226 = scalar_lea.vmem [#allocation27], %s1225
        // Predicated region
        $region169: #{egnn_forward.1} parent=115 // pred_check
          %p1227 = pneg %p394
        $region170: #{egnn_forward.1} parent=115 // pred_check_branch
          %1229 = sbr.rel (%p1227) target = $region172
        $region171: #{egnn_forward.1} parent=115 // pred_region
          %1230 = dma.done %s1223, 512
        $region172: #{egnn_forward.1} parent=115 // pred_fallthru
          _
        %s1231 = sand.u32 %s48, 1
        %s1232 = scalar_lea.sflag [#allocation9], %s1231
        %s1233 = sand.u32 %s407, 1
        %s1234 = scalar_lea.vmem [#allocation28], %s1233
        // Predicated region
        $region173: #{egnn_forward.1} parent=115 // pred_check
          %p1235 = pneg %p420
        $region174: #{egnn_forward.1} parent=115 // pred_check_branch
          %1237 = sbr.rel (%p1235) target = $region176
        $region175: #{egnn_forward.1} parent=115 // pred_region
          %1238 = dma.done %s1232, 16
        $region176: #{egnn_forward.1} parent=115 // pred_fallthru
          _
        %s1239 = sand.u32 %s48, 1
        %s1240 = scalar_lea.sflag [#allocation15], %s1239
        %s1241 = sand.u32 %s433, 1
        %s1242 = smul.addr %s1241, 32
        %s1243 = scalar_lea.vmem [#allocation29], %s1242
        // Predicated region
        $region177: #{egnn_forward.1} parent=115 // pred_check
          %p1244 = pneg %p446
        $region178: #{egnn_forward.1} parent=115 // pred_check_branch
          %1246 = sbr.rel (%p1244) target = $region180
        $region179: #{egnn_forward.1} parent=115 // pred_region
          %1247 = dma.done %s1240, 512
        $region180: #{egnn_forward.1} parent=115 // pred_fallthru
          _
        %s1248 = sand.u32 %s48, 1
        %s1249 = scalar_lea.sflag [#allocation18], %s1248
        %s1250 = sand.u32 %s459, 1
        %s1251 = scalar_lea.vmem [#allocation30], %s1250
        // Predicated region
        $region181: #{egnn_forward.1} parent=115 // pred_check
          %p1252 = pneg %p472
        $region182: #{egnn_forward.1} parent=115 // pred_check_branch
          %1254 = sbr.rel (%p1252) target = $region184
        $region183: #{egnn_forward.1} parent=115 // pred_region
          %1255 = dma.done %s1249, 16
        $region184: #{egnn_forward.1} parent=115 // pred_fallthru
          _
        %s1256 = sand.u32 %s48, 1
        %s1257 = scalar_lea.sflag [#allocation9], %s1256
        %s1258 = sand.u32 %s485, 1
        %s1259 = scalar_lea.vmem [#allocation31], %s1258
        // Predicated region
        $region185: #{egnn_forward.1} parent=115 // pred_check
          %p1260 = pneg %p498
        $region186: #{egnn_forward.1} parent=115 // pred_check_branch
          %1262 = sbr.rel (%p1260) target = $region188
        $region187: #{egnn_forward.1} parent=115 // pred_region
          %1263 = dma.done %s1257, 16
        $region188: #{egnn_forward.1} parent=115 // pred_fallthru
          _
        %s1264 = sand.u32 %s48, 1
        %s1265 = scalar_lea.sflag [#allocation15], %s1264
        %s1266 = sand.u32 %s511, 1
        %s1267 = scalar_lea.vmem [#allocation32], %s1266
        // Predicated region
        $region189: #{egnn_forward.1} parent=115 // pred_check
          %p1268 = pneg %p524
        $region190: #{egnn_forward.1} parent=115 // pred_check_branch
          %1270 = sbr.rel (%p1268) target = $region192
        $region191: #{egnn_forward.1} parent=115 // pred_region
          %1271 = dma.done %s1265, 16
        $region192: #{egnn_forward.1} parent=115 // pred_fallthru
          _
        %s1272 = sand.u32 %s48, 1
        %s1273 = scalar_lea.sflag [#allocation18], %s1272
        %s1274 = sand.u32 %s537, 1
        %s1275 = smul.addr %s1274, 32
        %s1276 = scalar_lea.vmem [#allocation33], %s1275
        // Predicated region
        $region193: #{egnn_forward.1} parent=115 // pred_check
          %p1277 = pneg %p550
        $region194: #{egnn_forward.1} parent=115 // pred_check_branch
          %1279 = sbr.rel (%p1277) target = $region196
        $region195: #{egnn_forward.1} parent=115 // pred_region
          %1280 = dma.done %s1273, 512
        $region196: #{egnn_forward.1} parent=115 // pred_fallthru
          _
        %s1281 = sand.u32 %s48, 1
        %s1282 = scalar_lea.sflag [#allocation9], %s1281
        %s1283 = sand.u32 %s563, 1
        %s1284 = smul.addr %s1283, 32
        %s1285 = scalar_lea.vmem [#allocation34], %s1284
        // Predicated region
        $region197: #{egnn_forward.1} parent=115 // pred_check
          %p1286 = pneg %p576
        $region198: #{egnn_forward.1} parent=115 // pred_check_branch
          %1288 = sbr.rel (%p1286) target = $region200
        $region199: #{egnn_forward.1} parent=115 // pred_region
          %1289 = dma.done %s1282, 512
        $region200: #{egnn_forward.1} parent=115 // pred_fallthru
          _
        %s1290 = sand.u32 %s48, 1
        %s1291 = scalar_lea.sflag [#allocation15], %s1290
        %s1292 = sand.u32 %s589, 1
        %s1293 = scalar_lea.vmem [#allocation35], %s1292
        // Predicated region
        $region201: #{egnn_forward.1} parent=115 // pred_check
          %p1294 = pneg %p602
        $region202: #{egnn_forward.1} parent=115 // pred_check_branch
          %1296 = sbr.rel (%p1294) target = $region204
        $region203: #{egnn_forward.1} parent=115 // pred_region
          %1297 = dma.done %s1291, 16
        $region204: #{egnn_forward.1} parent=115 // pred_fallthru
          _
        %s1298 = sand.u32 %s48, 1
        %s1299 = scalar_lea.sflag [#allocation18], %s1298
        %s1300 = sand.u32 %s615, 1
        %s1301 = smul.addr %s1300, 32
        %s1302 = scalar_lea.vmem [#allocation36], %s1301
        // Predicated region
        $region205: #{egnn_forward.1} parent=115 // pred_check
          %p1303 = pneg %p628
        $region206: #{egnn_forward.1} parent=115 // pred_check_branch
          %1305 = sbr.rel (%p1303) target = $region208
        $region207: #{egnn_forward.1} parent=115 // pred_region
          %1306 = dma.done %s1299, 512
        $region208: #{egnn_forward.1} parent=115 // pred_fallthru
          _
        %s1307 = sand.u32 %s48, 1
        %s1308 = scalar_lea.sflag [#allocation9], %s1307
        %s1309 = sand.u32 %s641, 1
        %s1310 = scalar_lea.vmem [#allocation37], %s1309
        // Predicated region
        $region209: #{egnn_forward.1} parent=115 // pred_check
          %p1311 = pneg %p654
        $region210: #{egnn_forward.1} parent=115 // pred_check_branch
          %1313 = sbr.rel (%p1311) target = $region212
        $region211: #{egnn_forward.1} parent=115 // pred_region
          %1314 = dma.done %s1308, 16
        $region212: #{egnn_forward.1} parent=115 // pred_fallthru
          _
        %p1315 = pneg %p76
        %p1316 = pneg %p73
        %p1317 = pneg %p97
        %p1318 = pneg %p94
        %p1319 = pneg %p118
        %p1320 = pneg %p115
        %s1321 = sand.u32 %s48, 1
        %s1322 = scalar_lea.sflag [#allocation15], %s1321
        %s1323 = sand.u32 %s131, 1
        %s1324 = smul.addr %s1323, 4
        %s1325 = scalar_lea.vmem [#allocation14], %s1324
        %p1326 = pneg %p144
        %p1327 = pneg %p141
        %s1328 = sand.u32 %s48, 1
        %s1329 = scalar_lea.sflag [#allocation15], %s1328
        %s1330 = sand.u32 %s157, 1
        %s1331 = smul.addr %s1330, 4
        %s1332 = scalar_lea.vmem [#allocation16], %s1331
        %p1333 = pneg %p170
        %p1334 = pneg %p167
        %s1335 = sand.u32 %s48, 1
        %s1336 = scalar_lea.sflag [#allocation18], %s1335
        %s1337 = sand.u32 %s183, 1
        %s1338 = smul.addr %s1337, 8
        %s1339 = scalar_lea.vmem [#allocation17], %s1338
        %p1340 = pneg %p196
        %p1341 = pneg %p193
        %p1342 = pneg %p217
        %p1343 = pneg %p214
        %p1344 = pneg %p238
        %p1345 = pneg %p235
        %s1346 = sand.u32 %s48, 1
        %s1347 = scalar_lea.sflag [#allocation9], %s1346
        %s1348 = sand.u32 %s251, 1
        %s1349 = scalar_lea.vmem [#allocation22], %s1348
        %p1350 = pneg %p264
        %p1351 = pneg %p261
        %s1352 = sand.u32 %s48, 1
        %s1353 = scalar_lea.sflag [#allocation15], %s1352
        %s1354 = sand.u32 %s277, 1
        %s1355 = smul.addr %s1354, 32
        %s1356 = scalar_lea.vmem [#allocation23], %s1355
        %p1357 = pneg %p290
        %p1358 = pneg %p287
        %s1359 = sand.u32 %s48, 1
        %s1360 = scalar_lea.sflag [#allocation18], %s1359
        %s1361 = sand.u32 %s303, 1
        %s1362 = smul.addr %s1361, 32
        %s1363 = scalar_lea.vmem [#allocation24], %s1362
        %p1364 = pneg %p316
        %p1365 = pneg %p313
        %s1366 = sand.u32 %s48, 1
        %s1367 = scalar_lea.sflag [#allocation9], %s1366
        %s1368 = sand.u32 %s329, 1
        %s1369 = smul.addr %s1368, 4
        %s1370 = scalar_lea.vmem [#allocation25], %s1369
        %p1371 = pneg %p342
        %p1372 = pneg %p339
        %s1373 = sand.u32 %s48, 1
        %s1374 = scalar_lea.sflag [#allocation15], %s1373
        %s1375 = sand.u32 %s355, 1
        %s1376 = scalar_lea.vmem [#allocation26], %s1375
        %p1377 = pneg %p368
        %p1378 = pneg %p365
        %s1379 = sand.u32 %s48, 1
        %s1380 = scalar_lea.sflag [#allocation18], %s1379
        %s1381 = sand.u32 %s381, 1
        %s1382 = smul.addr %s1381, 32
        %s1383 = scalar_lea.vmem [#allocation27], %s1382
        %p1384 = pneg %p394
        %p1385 = pneg %p391
        %s1386 = sand.u32 %s48, 1
        %s1387 = scalar_lea.sflag [#allocation9], %s1386
        %s1388 = sand.u32 %s407, 1
        %s1389 = scalar_lea.vmem [#allocation28], %s1388
        %p1390 = pneg %p420
        %p1391 = pneg %p417
        %s1392 = sand.u32 %s48, 1
        %s1393 = scalar_lea.sflag [#allocation15], %s1392
        %s1394 = sand.u32 %s433, 1
        %s1395 = smul.addr %s1394, 32
        %s1396 = scalar_lea.vmem [#allocation29], %s1395
        %p1397 = pneg %p446
        %p1398 = pneg %p443
        %s1399 = sand.u32 %s48, 1
        %s1400 = scalar_lea.sflag [#allocation18], %s1399
        %s1401 = sand.u32 %s459, 1
        %s1402 = scalar_lea.vmem [#allocation30], %s1401
        %p1403 = pneg %p472
        %p1404 = pneg %p469
        %s1405 = sand.u32 %s48, 1
        %s1406 = scalar_lea.sflag [#allocation9], %s1405
        %s1407 = sand.u32 %s485, 1
        %s1408 = scalar_lea.vmem [#allocation31], %s1407
        %p1409 = pneg %p498
        %p1410 = pneg %p495
        %s1411 = sand.u32 %s48, 1
        %s1412 = scalar_lea.sflag [#allocation15], %s1411
        %s1413 = sand.u32 %s511, 1
        %s1414 = scalar_lea.vmem [#allocation32], %s1413
        %p1415 = pneg %p524
        %p1416 = pneg %p521
        %s1417 = sand.u32 %s48, 1
        %s1418 = scalar_lea.sflag [#allocation18], %s1417
        %s1419 = sand.u32 %s537, 1
        %s1420 = smul.addr %s1419, 32
        %s1421 = scalar_lea.vmem [#allocation33], %s1420
        %p1422 = pneg %p550
        %p1423 = pneg %p547
        %s1424 = sand.u32 %s48, 1
        %s1425 = scalar_lea.sflag [#allocation9], %s1424
        %s1426 = sand.u32 %s563, 1
        %s1427 = smul.addr %s1426, 32
        %s1428 = scalar_lea.vmem [#allocation34], %s1427
        %p1429 = pneg %p576
        %p1430 = pneg %p573
        %s1431 = sand.u32 %s48, 1
        %s1432 = scalar_lea.sflag [#allocation15], %s1431
        %s1433 = sand.u32 %s589, 1
        %s1434 = scalar_lea.vmem [#allocation35], %s1433
        %p1435 = pneg %p602
        %p1436 = pneg %p599
        %s1437 = sand.u32 %s48, 1
        %s1438 = scalar_lea.sflag [#allocation18], %s1437
        %s1439 = sand.u32 %s615, 1
        %s1440 = smul.addr %s1439, 32
        %s1441 = scalar_lea.vmem [#allocation36], %s1440
        %p1442 = pneg %p628
        %p1443 = pneg %p625
        %s1444 = sand.u32 %s48, 1
        %s1445 = scalar_lea.sflag [#allocation9], %s1444
        %s1446 = sand.u32 %s641, 1
        %s1447 = scalar_lea.vmem [#allocation37], %s1446
        %p1448 = pneg %p654
        %p1449 = pneg %p651
        %p1450 = pneg %p675
        %p1451 = pneg %p672
        %p1452 = pneg %p696
        %p1453 = pneg %p693
        %p1454 = scmp.eq.s32.totalorder %s52, 0
        %p1455 = scmp.eq.s32.totalorder %s53, 0
        %p1456 = pnand %p1454, %p1455
        %p1457 = pneg %p1456
        // Predicated region
        $region213: #{egnn_forward.1} parent=115 // pred_check
          _
        $region214: #{egnn_forward.1} parent=115 // pred_check_branch
          %1459 = sbr.rel (%p1456) target = $region216
        $region215: #{egnn_forward.1} parent=115 // pred_region
          %v1460 = vld [vmem:[#allocation8] sm:$0xff]
          %vm1461 = vcmask 64512
          %1462 = vst.msk [vmem:[#allocation2] sm:$0xff] %vm1461, %v1460
          %v1463 = vld [vmem:[#allocation11] sm:$0xff]
          %v1464 = vld [vmem:[#allocation19] sm:$0xff]
          %v1465 = vld [vmem:[#allocation20] sm:$0x1]
          %v1467 = vlaneseq
          %v1468 = vshrl.u32 %v1467, 7
          %v1469 = vsub.s32 0, %v1468
          %v1470 = vrot.slane %v1465, %v1469
          %v1473 = vsel %vm1461, %v1463, 0
          %1475 = vmatprep.subr.mxu0 0.0
          %1476 = vmatpush1.msra.mxu0 %v1464
          %1477 = vmatprep.subr.mxu0 0.0
          %1478 = vmatpush1.msra.mxu0 0.0
          %1479 = vmatprep.subr.mxu0 0.0
          %1480 = vmatpush1.msra.mxu0 0.0
          %1481 = vmatprep.subr.mxu0 0.0
          %1482 = vmatpush1.msra.mxu0 0.0
          %1483 = vmatprep.subr.mxu0 0.0
          %1484 = vmatpush1.msra.mxu0 0.0
          %1485 = vmatprep.subr.mxu0 0.0
          %1486 = vmatpush1.msra.mxu0 0.0
          %1487 = vmatprep.subr.mxu0 0.0
          %1488 = vmatpush1.msra.mxu0 0.0
          %1489 = vmatprep.subr.mxu0 0.0
          %1490 = vmatpush1.msra.mxu0 0.0
          %1491 = vmatprep.subr.mxu0 0.0
          %1492 = vmatpush1.msra.mxu0 0.0
          %1493 = vmatprep.subr.mxu0 0.0
          %1494 = vmatpush1.msra.mxu0 0.0
          %1495 = vmatprep.subr.mxu0 0.0
          %1496 = vmatpush1.msra.mxu0 0.0
          %1497 = vmatprep.subr.mxu0 0.0
          %1498 = vmatpush1.msra.mxu0 0.0
          %1499 = vmatprep.subr.mxu0 0.0
          %1500 = vmatpush1.msra.mxu0 0.0
          %1501 = vmatprep.subr.mxu0 0.0
          %1502 = vmatpush1.msra.mxu0 0.0
          %1503 = vmatprep.subr.mxu0 0.0
          %1504 = vmatpush1.msra.mxu0 0.0
          %1505 = vmatprep.subr.mxu0 0.0
          %1506 = vmatpush1.msra.mxu0 0.0
          %1507 = vmatprep.subr.mxu0 0.0
          %1508 = vmatpush1.msra.mxu0 0.0
          %1509 = vmatprep.subr.mxu0 0.0
          %1510 = vmatpush1.msra.mxu0 0.0
          %1511 = vmatprep.subr.mxu0 0.0
          %1512 = vmatpush1.msra.mxu0 0.0
          %1513 = vmatprep.subr.mxu0 0.0
          %1514 = vmatpush1.msra.mxu0 0.0
          %1515 = vmatprep.subr.mxu0 0.0
          %1516 = vmatpush1.msra.mxu0 0.0
          %1517 = vmatprep.subr.mxu0 0.0
          %1518 = vmatpush1.msra.mxu0 0.0
          %1519 = vmatprep.subr.mxu0 0.0
          %1520 = vmatpush1.msra.mxu0 0.0
          %1521 = vmatprep.subr.mxu0 0.0
          %1522 = vmatpush1.msra.mxu0 0.0
          %1523 = vmatprep.subr.mxu0 0.0
          %1524 = vmatpush1.msra.mxu0 0.0
          %1525 = vmatprep.subr.mxu0 0.0
          %1526 = vmatpush1.msra.mxu0 0.0
          %1527 = vmatprep.subr.mxu0 0.0
          %1528 = vmatpush1.msra.mxu0 0.0
          %1529 = vmatprep.subr.mxu0 0.0
          %1530 = vmatpush1.msra.mxu0 0.0
          %1531 = vmatprep.subr.mxu0 0.0
          %1532 = vmatpush1.msra.mxu0 0.0
          %1533 = vmatprep.subr.mxu0 0.0
          %1534 = vmatpush1.msra.mxu0 0.0
          %1535 = vmatprep.subr.mxu0 0.0
          %1536 = vmatpush1.msra.mxu0 0.0
          %1537 = vmatprep.subr.mxu0 0.0
          %1538 = vmatpush1.msra.mxu0 0.0
          %1539 = vmatprep.mubr.f32.mxu0 0.0
          %1540 = vmatmul.mubr.f32.gmra.mrb[0].mxu0 %v1473
          %v1541 = vpop.f32.mrb[0].mxu0
          %v1542 = vadd.f32 %v1470, %v1541
          %v1543 = vpop.f32.mrb[0].mxu0
          %1544 = vdwg.mxu0
          %vm1545 = vcmask 261120
          %1546 = vst.msk [vmem:[#allocation3] sm:$0xff] %vm1545, %v1542
        $region216: #{egnn_forward.1} parent=115 // pred_fallthru
          _
        // Predicated region
        $region217: #{egnn_forward.1} parent=115 // pred_check
          %p1547 = pneg %p1455
        $region218: #{egnn_forward.1} parent=115 // pred_check_branch
          %1549 = sbr.rel (%p1547) target = $region220
        $region219: #{egnn_forward.1} parent=115 // pred_region
          %vm1550 = vcmask 64512
          %1551 = vst.msk [vmem:[#allocation6] sm:$0xff] %vm1550, 0.0
          %vm1552 = vcmask 261120
          %1553 = vst.msk [vmem:[#allocation7] sm:$0xff] %vm1552, 0.0
          %v1554 = vld [vmem:[#allocation3] sm:$0xff]
          %v1555 = vld [vmem:[%s1191] sm:$0xff]
          %v1556 = vld [vmem:[%s1191 + $0x8] sm:$0xff]
          %v1557 = vld [vmem:[%s1191 + $0x10] sm:$0xff]
          %v1558 = vld [vmem:[%s1191 + $0x18] sm:$0xff]
          %v1560 = vsel %vm1552, %v1554, 0
          %1562 = vmatprep.subr.mxu0 0.0
          %1563 = vmatpush1.msra.mxu0 %v1555
          %1564 = vmatprep.subr.mxu0 0.0
          %1565 = vmatpush1.msra.mxu0 %v1556
          %1566 = vmatprep.subr.mxu0 0.0
          %1567 = vmatpush1.msra.mxu0 %v1557
          %1568 = vmatprep.subr.mxu0 0.0
          %1569 = vmatpush1.msra.mxu0 %v1558
          %1570 = vmatprep.subr.mxu0 0.0
          %1571 = vmatpush1.msra.mxu0 0.0
          %1572 = vmatprep.subr.mxu0 0.0
          %1573 = vmatpush1.msra.mxu0 0.0
          %1574 = vmatprep.subr.mxu0 0.0
          %1575 = vmatpush1.msra.mxu0 0.0
          %1576 = vmatprep.subr.mxu0 0.0
          %1577 = vmatpush1.msra.mxu0 0.0
          %1578 = vmatprep.subr.mxu0 0.0
          %1579 = vmatpush1.msra.mxu0 0.0
          %1580 = vmatprep.subr.mxu0 0.0
          %1581 = vmatpush1.msra.mxu0 0.0
          %1582 = vmatprep.subr.mxu0 0.0
          %1583 = vmatpush1.msra.mxu0 0.0
          %1584 = vmatprep.subr.mxu0 0.0
          %1585 = vmatpush1.msra.mxu0 0.0
          %1586 = vmatprep.subr.mxu0 0.0
          %1587 = vmatpush1.msra.mxu0 0.0
          %1588 = vmatprep.subr.mxu0 0.0
          %1589 = vmatpush1.msra.mxu0 0.0
          %1590 = vmatprep.subr.mxu0 0.0
          %1591 = vmatpush1.msra.mxu0 0.0
          %1592 = vmatprep.subr.mxu0 0.0
          %1593 = vmatpush1.msra.mxu0 0.0
          %1594 = vmatprep.subr.mxu0 0.0
          %1595 = vmatpush1.msra.mxu0 0.0
          %1596 = vmatprep.subr.mxu0 0.0
          %1597 = vmatpush1.msra.mxu0 0.0
          %1598 = vmatprep.subr.mxu0 0.0
          %1599 = vmatpush1.msra.mxu0 0.0
          %1600 = vmatprep.subr.mxu0 0.0
          %1601 = vmatpush1.msra.mxu0 0.0
          %1602 = vmatprep.subr.mxu0 0.0
          %1603 = vmatpush1.msra.mxu0 0.0
          %1604 = vmatprep.subr.mxu0 0.0
          %1605 = vmatpush1.msra.mxu0 0.0
          %1606 = vmatprep.subr.mxu0 0.0
          %1607 = vmatpush1.msra.mxu0 0.0
          %1608 = vmatprep.subr.mxu0 0.0
          %1609 = vmatpush1.msra.mxu0 0.0
          %1610 = vmatprep.subr.mxu0 0.0
          %1611 = vmatpush1.msra.mxu0 0.0
          %1612 = vmatprep.subr.mxu0 0.0
          %1613 = vmatpush1.msra.mxu0 0.0
          %1614 = vmatprep.subr.mxu0 0.0
          %1615 = vmatpush1.msra.mxu0 0.0
          %1616 = vmatprep.subr.mxu0 0.0
          %1617 = vmatpush1.msra.mxu0 0.0
          %1618 = vmatprep.subr.mxu0 0.0
          %1619 = vmatpush1.msra.mxu0 0.0
          %1620 = vmatprep.subr.mxu0 0.0
          %1621 = vmatpush1.msra.mxu0 0.0
          %1622 = vmatprep.subr.mxu0 0.0
          %1623 = vmatpush1.msra.mxu0 0.0
          %1624 = vmatprep.subr.mxu0 0.0
          %1625 = vmatpush1.msra.mxu0 0.0
          %1626 = vmatprep.mubr.f32.mxu0 0.0
          %1627 = vmatmul.mubr.f32.gmra.mrb[0].mxu0 %v1560
          %v1628 = vpop.f32.mrb[0].mxu0
          %v1629 = vadd.f32 0.0, %v1628
          %v1630 = vpop.f32.mrb[0].mxu0
          %1631 = vdwg.mxu0
          %1632 = vst.msk [vmem:[#allocation4] sm:$0xff] %vm1552, %v1629
          %v1633 = vld [vmem:[#allocation3] sm:$0xff]
          %v1634 = vld [vmem:[%s1200] sm:$0xff]
          %v1635 = vld [vmem:[%s1200 + $0x8] sm:$0xff]
          %v1636 = vld [vmem:[%s1200 + $0x10] sm:$0xff]
          %v1637 = vld [vmem:[%s1200 + $0x18] sm:$0xff]
          %v1639 = vsel %vm1552, %v1633, 0
          %1641 = vmatprep.subr.mxu0 0.0
          %1642 = vmatpush1.msra.mxu0 %v1634
          %1643 = vmatprep.subr.mxu0 0.0
          %1644 = vmatpush1.msra.mxu0 %v1635
          %1645 = vmatprep.subr.mxu0 0.0
          %1646 = vmatpush1.msra.mxu0 %v1636
          %1647 = vmatprep.subr.mxu0 0.0
          %1648 = vmatpush1.msra.mxu0 %v1637
          %1649 = vmatprep.subr.mxu0 0.0
          %1650 = vmatpush1.msra.mxu0 0.0
          %1651 = vmatprep.subr.mxu0 0.0
          %1652 = vmatpush1.msra.mxu0 0.0
          %1653 = vmatprep.subr.mxu0 0.0
          %1654 = vmatpush1.msra.mxu0 0.0
          %1655 = vmatprep.subr.mxu0 0.0
          %1656 = vmatpush1.msra.mxu0 0.0
          %1657 = vmatprep.subr.mxu0 0.0
          %1658 = vmatpush1.msra.mxu0 0.0
          %1659 = vmatprep.subr.mxu0 0.0
          %1660 = vmatpush1.msra.mxu0 0.0
          %1661 = vmatprep.subr.mxu0 0.0
          %1662 = vmatpush1.msra.mxu0 0.0
          %1663 = vmatprep.subr.mxu0 0.0
          %1664 = vmatpush1.msra.mxu0 0.0
          %1665 = vmatprep.subr.mxu0 0.0
          %1666 = vmatpush1.msra.mxu0 0.0
          %1667 = vmatprep.subr.mxu0 0.0
          %1668 = vmatpush1.msra.mxu0 0.0
          %1669 = vmatprep.subr.mxu0 0.0
          %1670 = vmatpush1.msra.mxu0 0.0
          %1671 = vmatprep.subr.mxu0 0.0
          %1672 = vmatpush1.msra.mxu0 0.0
          %1673 = vmatprep.subr.mxu0 0.0
          %1674 = vmatpush1.msra.mxu0 0.0
          %1675 = vmatprep.subr.mxu0 0.0
          %1676 = vmatpush1.msra.mxu0 0.0
          %1677 = vmatprep.subr.mxu0 0.0
          %1678 = vmatpush1.msra.mxu0 0.0
          %1679 = vmatprep.subr.mxu0 0.0
          %1680 = vmatpush1.msra.mxu0 0.0
          %1681 = vmatprep.subr.mxu0 0.0
          %1682 = vmatpush1.msra.mxu0 0.0
          %1683 = vmatprep.subr.mxu0 0.0
          %1684 = vmatpush1.msra.mxu0 0.0
          %1685 = vmatprep.subr.mxu0 0.0
          %1686 = vmatpush1.msra.mxu0 0.0
          %1687 = vmatprep.subr.mxu0 0.0
          %1688 = vmatpush1.msra.mxu0 0.0
          %1689 = vmatprep.subr.mxu0 0.0
          %1690 = vmatpush1.msra.mxu0 0.0
          %1691 = vmatprep.subr.mxu0 0.0
          %1692 = vmatpush1.msra.mxu0 0.0
          %1693 = vmatprep.subr.mxu0 0.0
          %1694 = vmatpush1.msra.mxu0 0.0
          %1695 = vmatprep.subr.mxu0 0.0
          %1696 = vmatpush1.msra.mxu0 0.0
          %1697 = vmatprep.subr.mxu0 0.0
          %1698 = vmatpush1.msra.mxu0 0.0
          %1699 = vmatprep.subr.mxu0 0.0
          %1700 = vmatpush1.msra.mxu0 0.0
          %1701 = vmatprep.subr.mxu0 0.0
          %1702 = vmatpush1.msra.mxu0 0.0
          %1703 = vmatprep.subr.mxu0 0.0
          %1704 = vmatpush1.msra.mxu0 0.0
          %1705 = vmatprep.mubr.f32.mxu0 0.0
          %1706 = vmatmul.mubr.f32.gmra.mrb[0].mxu0 %v1639
          %v1707 = vpop.f32.mrb[0].mxu0
          %v1708 = vadd.f32 0.0, %v1707
          %v1709 = vpop.f32.mrb[0].mxu0
          %1710 = vdwg.mxu0
          %1711 = vst.msk [vmem:[#allocation5] sm:$0xff] %vm1552, %v1708
        $region220: #{egnn_forward.1} parent=115 // pred_fallthru
          _
        %v1712 = vld [vmem:[%s1148] sm:$0xf]
        %v1713 = vunpack.c.l.bf16 %v1712
        %v1714 = vld [vmem:[%s1157] sm:$0xf]
        %v1715 = vunpack.c.l.bf16 %v1714
        %v1716 = vld [vmem:[#allocation2] sm:$0xff]
        %vm1717 = vcmask 64512
        %v1719 = vsel %vm1717, %v1713, 0
        %1721 = vmatprep.subr.mxu0 0.0
        %1722 = vmatpush1.msra.mxu0 %v1716
        %1723 = vmatprep.subr.mxu0 0.0
        %1724 = vmatpush1.msra.mxu0 0.0
        %1725 = vmatprep.subr.mxu0 0.0
        %1726 = vmatpush1.msra.mxu0 0.0
        %1727 = vmatprep.subr.mxu0 0.0
        %1728 = vmatpush1.msra.mxu0 0.0
        %1729 = vmatprep.subr.mxu0 0.0
        %1730 = vmatpush1.msra.mxu0 0.0
        %1731 = vmatprep.subr.mxu0 0.0
        %1732 = vmatpush1.msra.mxu0 0.0
        %1733 = vmatprep.subr.mxu0 0.0
        %1734 = vmatpush1.msra.mxu0 0.0
        %1735 = vmatprep.subr.mxu0 0.0
        %1736 = vmatpush1.msra.mxu0 0.0
        %1737 = vmatprep.subr.mxu0 0.0
        %1738 = vmatpush1.msra.mxu0 0.0
        %1739 = vmatprep.subr.mxu0 0.0
        %1740 = vmatpush1.msra.mxu0 0.0
        %1741 = vmatprep.subr.mxu0 0.0
        %1742 = vmatpush1.msra.mxu0 0.0
        %1743 = vmatprep.subr.mxu0 0.0
        %1744 = vmatpush1.msra.mxu0 0.0
        %1745 = vmatprep.subr.mxu0 0.0
        %1746 = vmatpush1.msra.mxu0 0.0
        %1747 = vmatprep.subr.mxu0 0.0
        %1748 = vmatpush1.msra.mxu0 0.0
        %1749 = vmatprep.subr.mxu0 0.0
        %1750 = vmatpush1.msra.mxu0 0.0
        %1751 = vmatprep.subr.mxu0 0.0
        %1752 = vmatpush1.msra.mxu0 0.0
        %1753 = vmatprep.subr.mxu0 0.0
        %1754 = vmatpush1.msra.mxu0 0.0
        %1755 = vmatprep.subr.mxu0 0.0
        %1756 = vmatpush1.msra.mxu0 0.0
        %1757 = vmatprep.subr.mxu0 0.0
        %1758 = vmatpush1.msra.mxu0 0.0
        %1759 = vmatprep.subr.mxu0 0.0
        %1760 = vmatpush1.msra.mxu0 0.0
        %1761 = vmatprep.subr.mxu0 0.0
        %1762 = vmatpush1.msra.mxu0 0.0
        %1763 = vmatprep.subr.mxu0 0.0
        %1764 = vmatpush1.msra.mxu0 0.0
        %1765 = vmatprep.subr.mxu0 0.0
        %1766 = vmatpush1.msra.mxu0 0.0
        %1767 = vmatprep.subr.mxu0 0.0
        %1768 = vmatpush1.msra.mxu0 0.0
        %1769 = vmatprep.subr.mxu0 0.0
        %1770 = vmatpush1.msra.mxu0 0.0
        %1771 = vmatprep.subr.mxu0 0.0
        %1772 = vmatpush1.msra.mxu0 0.0
        %1773 = vmatprep.subr.mxu0 0.0
        %1774 = vmatpush1.msra.mxu0 0.0
        %1775 = vmatprep.subr.mxu0 0.0
        %1776 = vmatpush1.msra.mxu0 0.0
        %1777 = vmatprep.subr.mxu0 0.0
        %1778 = vmatpush1.msra.mxu0 0.0
        %1779 = vmatprep.subr.mxu0 0.0
        %1780 = vmatpush1.msra.mxu0 0.0
        %1781 = vmatprep.subr.mxu0 0.0
        %1782 = vmatpush1.msra.mxu0 0.0
        %1783 = vmatprep.subr.mxu0 0.0
        %1784 = vmatpush1.msra.mxu0 0.0
        %1785 = vmatprep.mubr.f32.mxu0 0.0
        %1786 = vmatmul.mubr.f32.gmra.mrb[0].mxu0 %v1719
        %v1787 = vpop.f32.mrb[0].mxu0
        %v1788 = vadd.f32 0.0, %v1787
        %v1789 = vpop.f32.mrb[0].mxu0
        %1790 = vdwg.mxu0
        %v1792 = vsel %vm1717, %v1715, 0
        %1794 = vmatprep.subr.mxu0 0.0
        %1795 = vmatpush1.msra.mxu0 %v1716
        %1796 = vmatprep.subr.mxu0 0.0
        %1797 = vmatpush1.msra.mxu0 0.0
        %1798 = vmatprep.subr.mxu0 0.0
        %1799 = vmatpush1.msra.mxu0 0.0
        %1800 = vmatprep.subr.mxu0 0.0
        %1801 = vmatpush1.msra.mxu0 0.0
        %1802 = vmatprep.subr.mxu0 0.0
        %1803 = vmatpush1.msra.mxu0 0.0
        %1804 = vmatprep.subr.mxu0 0.0
        %1805 = vmatpush1.msra.mxu0 0.0
        %1806 = vmatprep.subr.mxu0 0.0
        %1807 = vmatpush1.msra.mxu0 0.0
        %1808 = vmatprep.subr.mxu0 0.0
        %1809 = vmatpush1.msra.mxu0 0.0
        %1810 = vmatprep.subr.mxu0 0.0
        %1811 = vmatpush1.msra.mxu0 0.0
        %1812 = vmatprep.subr.mxu0 0.0
        %1813 = vmatpush1.msra.mxu0 0.0
        %1814 = vmatprep.subr.mxu0 0.0
        %1815 = vmatpush1.msra.mxu0 0.0
        %1816 = vmatprep.subr.mxu0 0.0
        %1817 = vmatpush1.msra.mxu0 0.0
        %1818 = vmatprep.subr.mxu0 0.0
        %1819 = vmatpush1.msra.mxu0 0.0
        %1820 = vmatprep.subr.mxu0 0.0
        %1821 = vmatpush1.msra.mxu0 0.0
        %1822 = vmatprep.subr.mxu0 0.0
        %1823 = vmatpush1.msra.mxu0 0.0
        %1824 = vmatprep.subr.mxu0 0.0
        %1825 = vmatpush1.msra.mxu0 0.0
        %1826 = vmatprep.subr.mxu0 0.0
        %1827 = vmatpush1.msra.mxu0 0.0
        %1828 = vmatprep.subr.mxu0 0.0
        %1829 = vmatpush1.msra.mxu0 0.0
        %1830 = vmatprep.subr.mxu0 0.0
        %1831 = vmatpush1.msra.mxu0 0.0
        %1832 = vmatprep.subr.mxu0 0.0
        %1833 = vmatpush1.msra.mxu0 0.0
        %1834 = vmatprep.subr.mxu0 0.0
        %1835 = vmatpush1.msra.mxu0 0.0
        %1836 = vmatprep.subr.mxu0 0.0
        %1837 = vmatpush1.msra.mxu0 0.0
        %1838 = vmatprep.subr.mxu0 0.0
        %1839 = vmatpush1.msra.mxu0 0.0
        %1840 = vmatprep.subr.mxu0 0.0
        %1841 = vmatpush1.msra.mxu0 0.0
        %1842 = vmatprep.subr.mxu0 0.0
        %1843 = vmatpush1.msra.mxu0 0.0
        %1844 = vmatprep.subr.mxu0 0.0
        %1845 = vmatpush1.msra.mxu0 0.0
        %1846 = vmatprep.subr.mxu0 0.0
        %1847 = vmatpush1.msra.mxu0 0.0
        %1848 = vmatprep.subr.mxu0 0.0
        %1849 = vmatpush1.msra.mxu0 0.0
        %1850 = vmatprep.subr.mxu0 0.0
        %1851 = vmatpush1.msra.mxu0 0.0
        %1852 = vmatprep.subr.mxu0 0.0
        %1853 = vmatpush1.msra.mxu0 0.0
        %1854 = vmatprep.subr.mxu0 0.0
        %1855 = vmatpush1.msra.mxu0 0.0
        %1856 = vmatprep.subr.mxu0 0.0
        %1857 = vmatpush1.msra.mxu0 0.0
        %1858 = vmatprep.mubr.f32.mxu0 0.0
        %1859 = vmatmul.mubr.f32.gmra.mrb[0].mxu0 %v1792
        %v1860 = vpop.f32.mrb[0].mxu0
        %v1861 = vadd.f32 0.0, %v1860
        %v1862 = vpop.f32.mrb[0].mxu0
        %1863 = vdwg.mxu0
        %v1864 = vsub.f32 %v1788, %v1861
        %v1865 = vmul.f32 %v1864, %v1864
        %v1866 = vsel %vm1717, %v1865, 0.0
        %1867 = vadd.xlane.f32.xlu0 %v1866
        %v1868 = vpop.xlane.xlu0 %1867
        %v1869 = vld [vmem:[%s1182] sm:$0x1]
        %v1871 = vlaneseq
        %v1872 = vshrl.u32 %v1871, 7
        %v1873 = vsub.s32 0, %v1872
        %v1874 = vrot.slane %v1869, %v1873
        %v1876 = vmul.f32 %v1868, %v1874
        %v1877 = vld [vmem:[#allocation4] sm:$0xff]
        %1878 = vmatprep.subr.mxu0 0.0
        %1879 = vmatpush1.msra.mxu0 %v1877
        %1880 = vmatprep.subr.mxu0 0.0
        %1881 = vmatpush1.msra.mxu0 0.0
        %1882 = vmatprep.subr.mxu0 0.0
        %1883 = vmatpush1.msra.mxu0 0.0
        %1884 = vmatprep.subr.mxu0 0.0
        %1885 = vmatpush1.msra.mxu0 0.0
        %1886 = vmatprep.subr.mxu0 0.0
        %1887 = vmatpush1.msra.mxu0 0.0
        %1888 = vmatprep.subr.mxu0 0.0
        %1889 = vmatpush1.msra.mxu0 0.0
        %1890 = vmatprep.subr.mxu0 0.0
        %1891 = vmatpush1.msra.mxu0 0.0
        %1892 = vmatprep.subr.mxu0 0.0
        %1893 = vmatpush1.msra.mxu0 0.0
        %1894 = vmatprep.subr.mxu0 0.0
        %1895 = vmatpush1.msra.mxu0 0.0
        %1896 = vmatprep.subr.mxu0 0.0
        %1897 = vmatpush1.msra.mxu0 0.0
        %1898 = vmatprep.subr.mxu0 0.0
        %1899 = vmatpush1.msra.mxu0 0.0
        %1900 = vmatprep.subr.mxu0 0.0
        %1901 = vmatpush1.msra.mxu0 0.0
        %1902 = vmatprep.subr.mxu0 0.0
        %1903 = vmatpush1.msra.mxu0 0.0
        %1904 = vmatprep.subr.mxu0 0.0
        %1905 = vmatpush1.msra.mxu0 0.0
        %1906 = vmatprep.subr.mxu0 0.0
        %1907 = vmatpush1.msra.mxu0 0.0
        %1908 = vmatprep.subr.mxu0 0.0
        %1909 = vmatpush1.msra.mxu0 0.0
        %1910 = vmatprep.subr.mxu0 0.0
        %1911 = vmatpush1.msra.mxu0 0.0
        %1912 = vmatprep.subr.mxu0 0.0
        %1913 = vmatpush1.msra.mxu0 0.0
        %1914 = vmatprep.subr.mxu0 0.0
        %1915 = vmatpush1.msra.mxu0 0.0
        %1916 = vmatprep.subr.mxu0 0.0
        %1917 = vmatpush1.msra.mxu0 0.0
        %1918 = vmatprep.subr.mxu0 0.0
        %1919 = vmatpush1.msra.mxu0 0.0
        %1920 = vmatprep.subr.mxu0 0.0
        %1921 = vmatpush1.msra.mxu0 0.0
        %1922 = vmatprep.subr.mxu0 0.0
        %1923 = vmatpush1.msra.mxu0 0.0
        %1924 = vmatprep.subr.mxu0 0.0
        %1925 = vmatpush1.msra.mxu0 0.0
        %1926 = vmatprep.subr.mxu0 0.0
        %1927 = vmatpush1.msra.mxu0 0.0
        %1928 = vmatprep.subr.mxu0 0.0
        %1929 = vmatpush1.msra.mxu0 0.0
        %1930 = vmatprep.subr.mxu0 0.0
        %1931 = vmatpush1.msra.mxu0 0.0
        %1932 = vmatprep.subr.mxu0 0.0
        %1933 = vmatpush1.msra.mxu0 0.0
        %1934 = vmatprep.subr.mxu0 0.0
        %1935 = vmatpush1.msra.mxu0 0.0
        %1936 = vmatprep.subr.mxu0 0.0
        %1937 = vmatpush1.msra.mxu0 0.0
        %1938 = vmatprep.subr.mxu0 0.0
        %1939 = vmatpush1.msra.mxu0 0.0
        %1940 = vmatprep.subr.mxu0 0.0
        %1941 = vmatpush1.msra.mxu0 0.0
        %1942 = vmatprep.mubr.f32.mxu0 0.0
        %1943 = vmatmul.mubr.f32.gmra.mrb[0].mxu0 %v1719
        %v1944 = vpop.f32.mrb[0].mxu0
        %v1945 = vadd.f32 0.0, %v1944
        %v1946 = vpop.f32.mrb[0].mxu0
        %1947 = vdwg.mxu0
        %v1948 = vadd.f32 %v1876, %v1945
        %v1949 = vld [vmem:[#allocation5] sm:$0xff]
        %1950 = vmatprep.subr.mxu0 0.0
        %1951 = vmatpush1.msra.mxu0 %v1949
        %1952 = vmatprep.subr.mxu0 0.0
        %1953 = vmatpush1.msra.mxu0 0.0
        %1954 = vmatprep.subr.mxu0 0.0
        %1955 = vmatpush1.msra.mxu0 0.0
        %1956 = vmatprep.subr.mxu0 0.0
        %1957 = vmatpush1.msra.mxu0 0.0
        %1958 = vmatprep.subr.mxu0 0.0
        %1959 = vmatpush1.msra.mxu0 0.0
        %1960 = vmatprep.subr.mxu0 0.0
        %1961 = vmatpush1.msra.mxu0 0.0
        %1962 = vmatprep.subr.mxu0 0.0
        %1963 = vmatpush1.msra.mxu0 0.0
        %1964 = vmatprep.subr.mxu0 0.0
        %1965 = vmatpush1.msra.mxu0 0.0
        %1966 = vmatprep.subr.mxu0 0.0
        %1967 = vmatpush1.msra.mxu0 0.0
        %1968 = vmatprep.subr.mxu0 0.0
        %1969 = vmatpush1.msra.mxu0 0.0
        %1970 = vmatprep.subr.mxu0 0.0
        %1971 = vmatpush1.msra.mxu0 0.0
        %1972 = vmatprep.subr.mxu0 0.0
        %1973 = vmatpush1.msra.mxu0 0.0
        %1974 = vmatprep.subr.mxu0 0.0
        %1975 = vmatpush1.msra.mxu0 0.0
        %1976 = vmatprep.subr.mxu0 0.0
        %1977 = vmatpush1.msra.mxu0 0.0
        %1978 = vmatprep.subr.mxu0 0.0
        %1979 = vmatpush1.msra.mxu0 0.0
        %1980 = vmatprep.subr.mxu0 0.0
        %1981 = vmatpush1.msra.mxu0 0.0
        %1982 = vmatprep.subr.mxu0 0.0
        %1983 = vmatpush1.msra.mxu0 0.0
        %1984 = vmatprep.subr.mxu0 0.0
        %1985 = vmatpush1.msra.mxu0 0.0
        %1986 = vmatprep.subr.mxu0 0.0
        %1987 = vmatpush1.msra.mxu0 0.0
        %1988 = vmatprep.subr.mxu0 0.0
        %1989 = vmatpush1.msra.mxu0 0.0
        %1990 = vmatprep.subr.mxu0 0.0
        %1991 = vmatpush1.msra.mxu0 0.0
        %1992 = vmatprep.subr.mxu0 0.0
        %1993 = vmatpush1.msra.mxu0 0.0
        %1994 = vmatprep.subr.mxu0 0.0
        %1995 = vmatpush1.msra.mxu0 0.0
        %1996 = vmatprep.subr.mxu0 0.0
        %1997 = vmatpush1.msra.mxu0 0.0
        %1998 = vmatprep.subr.mxu0 0.0
        %1999 = vmatpush1.msra.mxu0 0.0
        %2000 = vmatprep.subr.mxu0 0.0
        %2001 = vmatpush1.msra.mxu0 0.0
        %2002 = vmatprep.subr.mxu0 0.0
        %2003 = vmatpush1.msra.mxu0 0.0
        %2004 = vmatprep.subr.mxu0 0.0
        %2005 = vmatpush1.msra.mxu0 0.0
        %2006 = vmatprep.subr.mxu0 0.0
        %2007 = vmatpush1.msra.mxu0 0.0
        %2008 = vmatprep.subr.mxu0 0.0
        %2009 = vmatpush1.msra.mxu0 0.0
        %2010 = vmatprep.subr.mxu0 0.0
        %2011 = vmatpush1.msra.mxu0 0.0
        %2012 = vmatprep.subr.mxu0 0.0
        %2013 = vmatpush1.msra.mxu0 0.0
        %2014 = vmatprep.mubr.f32.mxu0 0.0
        %2015 = vmatmul.mubr.f32.gmra.mrb[0].mxu0 %v1792
        %v2016 = vpop.f32.mrb[0].mxu0
        %v2017 = vadd.f32 0.0, %v2016
        %v2018 = vpop.f32.mrb[0].mxu0
        %2019 = vdwg.mxu0
        %v2020 = vadd.f32 %v1948, %v2017
        %v2021 = vld [vmem:[%s1166] sm:$0xff]
        %v2022 = vld [vmem:[%s1209] sm:$0xf]
        %vm2023 = vcmask 31744
        %v2025 = vsel %vm2023, %v2021, 0
        %vm2027 = vcmask 1043456
        %v2029 = vsel %vm2027, %v2022, 0
        %2031 = vmatprep.subr.mxu0 0.0
        %2032 = vmatpush1.msra.mxu0 %v2029
        %2033 = vmatprep.subr.mxu0 0.0
        %2034 = vmatpush1.msra.mxu0 0.0
        %2035 = vmatprep.subr.mxu0 0.0
        %2036 = vmatpush1.msra.mxu0 0.0
        %2037 = vmatprep.subr.mxu0 0.0
        %2038 = vmatpush1.msra.mxu0 0.0
        %2039 = vmatprep.subr.mxu0 0.0
        %2040 = vmatpush1.msra.mxu0 0.0
        %2041 = vmatprep.subr.mxu0 0.0
        %2042 = vmatpush1.msra.mxu0 0.0
        %2043 = vmatprep.subr.mxu0 0.0
        %2044 = vmatpush1.msra.mxu0 0.0
        %2045 = vmatprep.subr.mxu0 0.0
        %2046 = vmatpush1.msra.mxu0 0.0
        %2047 = vmatprep.subr.mxu0 0.0
        %2048 = vmatpush1.msra.mxu0 0.0
        %2049 = vmatprep.subr.mxu0 0.0
        %2050 = vmatpush1.msra.mxu0 0.0
        %2051 = vmatprep.subr.mxu0 0.0
        %2052 = vmatpush1.msra.mxu0 0.0
        %2053 = vmatprep.subr.mxu0 0.0
        %2054 = vmatpush1.msra.mxu0 0.0
        %2055 = vmatprep.subr.mxu0 0.0
        %2056 = vmatpush1.msra.mxu0 0.0
        %2057 = vmatprep.subr.mxu0 0.0
        %2058 = vmatpush1.msra.mxu0 0.0
        %2059 = vmatprep.subr.mxu0 0.0
        %2060 = vmatpush1.msra.mxu0 0.0
        %2061 = vmatprep.subr.mxu0 0.0
        %2062 = vmatpush1.msra.mxu0 0.0
        %2063 = vmatprep.subr.mxu0 0.0
        %2064 = vmatpush1.msra.mxu0 0.0
        %2065 = vmatprep.subr.mxu0 0.0
        %2066 = vmatpush1.msra.mxu0 0.0
        %2067 = vmatprep.subr.mxu0 0.0
        %2068 = vmatpush1.msra.mxu0 0.0
        %2069 = vmatprep.subr.mxu0 0.0
        %2070 = vmatpush1.msra.mxu0 0.0
        %2071 = vmatprep.subr.mxu0 0.0
        %2072 = vmatpush1.msra.mxu0 0.0
        %2073 = vmatprep.subr.mxu0 0.0
        %2074 = vmatpush1.msra.mxu0 0.0
        %2075 = vmatprep.subr.mxu0 0.0
        %2076 = vmatpush1.msra.mxu0 0.0
        %2077 = vmatprep.subr.mxu0 0.0
        %2078 = vmatpush1.msra.mxu0 0.0
        %2079 = vmatprep.subr.mxu0 0.0
        %2080 = vmatpush1.msra.mxu0 0.0
        %2081 = vmatprep.subr.mxu0 0.0
        %2082 = vmatpush1.msra.mxu0 0.0
        %2083 = vmatprep.subr.mxu0 0.0
        %2084 = vmatpush1.msra.mxu0 0.0
        %2085 = vmatprep.subr.mxu0 0.0
        %2086 = vmatpush1.msra.mxu0 0.0
        %2087 = vmatprep.subr.mxu0 0.0
        %2088 = vmatpush1.msra.mxu0 0.0
        %2089 = vmatprep.subr.mxu0 0.0
        %2090 = vmatpush1.msra.mxu0 0.0
        %2091 = vmatprep.subr.mxu0 0.0
        %2092 = vmatpush1.msra.mxu0 0.0
        %2093 = vmatprep.subr.mxu0 0.0
        %2094 = vmatpush1.msra.mxu0 0.0
        %2095 = vmatprep.mubr.f32.mxu0 0.0
        %2096 = vmatmul.mubr.f32.gmra.mrb[0].mxu0 %v2025
        %v2097 = vpop.f32.mrb[0].mxu0
        %v2098 = vadd.f32 0.0, %v2097
        %v2099 = vpop.f32.mrb[0].mxu0
        %2100 = vdwg.mxu0
        %v2101 = vadd.f32 %v2020, %v2098
        %v2102 = vld [vmem:[%s1217] sm:$0x1]
        %v2104 = vlaneseq
        %v2105 = vshrl.u32 %v2104, 7
        %v2106 = vsub.s32 0, %v2105
        %v2107 = vrot.slane %v2102, %v2106
        %v2109 = vadd.f32 %v2101, %v2107
        %v2110 = vxor.u32 %v2109, 2147483648
        %v2111 = vmul.f32 %v2110, 1.442695
        %v2112 = vpow.pop %v2111
        %v2113 = vadd.f32 %v2112, 1.0
        %v2114 = vrcp.pop %v2113
        %v2115 = vmul.f32 1.0, %v2114
        %v2116 = vmul.f32 %v2109, %v2115
        %v2117 = vld [vmem:[%s1226] sm:$0xff]
        %v2118 = vld [vmem:[%s1226 + $0x8] sm:$0xff]
        %v2119 = vld [vmem:[%s1226 + $0x10] sm:$0xff]
        %v2120 = vld [vmem:[%s1226 + $0x18] sm:$0xff]
        %v2121 = vld [vmem:[%s1234] sm:$0x1]
        %v2123 = vlaneseq
        %v2124 = vshrl.u32 %v2123, 7
        %v2125 = vsub.s32 0, %v2124
        %v2126 = vrot.slane %v2121, %v2125
        %vm2128 = vcmask 261120
        %v2130 = vsel %vm2128, %v2116, 0
        %2132 = vmatprep.subr.mxu0 0.0
        %2133 = vmatpush1.msra.mxu0 %v2117
        %2134 = vmatprep.subr.mxu0 0.0
        %2135 = vmatpush1.msra.mxu0 %v2118
        %2136 = vmatprep.subr.mxu0 0.0
        %2137 = vmatpush1.msra.mxu0 %v2119
        %2138 = vmatprep.subr.mxu0 0.0
        %2139 = vmatpush1.msra.mxu0 %v2120
        %2140 = vmatprep.subr.mxu0 0.0
        %2141 = vmatpush1.msra.mxu0 0.0
        %2142 = vmatprep.subr.mxu0 0.0
        %2143 = vmatpush1.msra.mxu0 0.0
        %2144 = vmatprep.subr.mxu0 0.0
        %2145 = vmatpush1.msra.mxu0 0.0
        %2146 = vmatprep.subr.mxu0 0.0
        %2147 = vmatpush1.msra.mxu0 0.0
        %2148 = vmatprep.subr.mxu0 0.0
        %2149 = vmatpush1.msra.mxu0 0.0
        %2150 = vmatprep.subr.mxu0 0.0
        %2151 = vmatpush1.msra.mxu0 0.0
        %2152 = vmatprep.subr.mxu0 0.0
        %2153 = vmatpush1.msra.mxu0 0.0
        %2154 = vmatprep.subr.mxu0 0.0
        %2155 = vmatpush1.msra.mxu0 0.0
        %2156 = vmatprep.subr.mxu0 0.0
        %2157 = vmatpush1.msra.mxu0 0.0
        %2158 = vmatprep.subr.mxu0 0.0
        %2159 = vmatpush1.msra.mxu0 0.0
        %2160 = vmatprep.subr.mxu0 0.0
        %2161 = vmatpush1.msra.mxu0 0.0
        %2162 = vmatprep.subr.mxu0 0.0
        %2163 = vmatpush1.msra.mxu0 0.0
        %2164 = vmatprep.subr.mxu0 0.0
        %2165 = vmatpush1.msra.mxu0 0.0
        %2166 = vmatprep.subr.mxu0 0.0
        %2167 = vmatpush1.msra.mxu0 0.0
        %2168 = vmatprep.subr.mxu0 0.0
        %2169 = vmatpush1.msra.mxu0 0.0
        %2170 = vmatprep.subr.mxu0 0.0
        %2171 = vmatpush1.msra.mxu0 0.0
        %2172 = vmatprep.subr.mxu0 0.0
        %2173 = vmatpush1.msra.mxu0 0.0
        %2174 = vmatprep.subr.mxu0 0.0
        %2175 = vmatpush1.msra.mxu0 0.0
        %2176 = vmatprep.subr.mxu0 0.0
        %2177 = vmatpush1.msra.mxu0 0.0
        %2178 = vmatprep.subr.mxu0 0.0
        %2179 = vmatpush1.msra.mxu0 0.0
        %2180 = vmatprep.subr.mxu0 0.0
        %2181 = vmatpush1.msra.mxu0 0.0
        %2182 = vmatprep.subr.mxu0 0.0
        %2183 = vmatpush1.msra.mxu0 0.0
        %2184 = vmatprep.subr.mxu0 0.0
        %2185 = vmatpush1.msra.mxu0 0.0
        %2186 = vmatprep.subr.mxu0 0.0
        %2187 = vmatpush1.msra.mxu0 0.0
        %2188 = vmatprep.subr.mxu0 0.0
        %2189 = vmatpush1.msra.mxu0 0.0
        %2190 = vmatprep.subr.mxu0 0.0
        %2191 = vmatpush1.msra.mxu0 0.0
        %2192 = vmatprep.subr.mxu0 0.0
        %2193 = vmatpush1.msra.mxu0 0.0
        %2194 = vmatprep.subr.mxu0 0.0
        %2195 = vmatpush1.msra.mxu0 0.0
        %2196 = vmatprep.mubr.f32.mxu0 0.0
        %2197 = vmatmul.mubr.f32.gmra.mrb[0].mxu0 %v2130
        %v2198 = vpop.f32.mrb[0].mxu0
        %v2199 = vadd.f32 %v2126, %v2198
        %v2200 = vpop.f32.mrb[0].mxu0
        %2201 = vdwg.mxu0
        %v2202 = vld [vmem:[%s1243] sm:$0xff]
        %v2203 = vld [vmem:[%s1243 + $0x8] sm:$0xff]
        %v2204 = vld [vmem:[%s1243 + $0x10] sm:$0xff]
        %v2205 = vld [vmem:[%s1243 + $0x18] sm:$0xff]
        %v2206 = vld [vmem:[%s1251] sm:$0x1]
        %v2208 = vlaneseq
        %v2209 = vshrl.u32 %v2208, 7
        %v2210 = vsub.s32 0, %v2209
        %v2211 = vrot.slane %v2206, %v2210
        %v2214 = vsel %vm2128, %v2199, 0
        %2216 = vmatprep.subr.mxu0 0.0
        %2217 = vmatpush1.msra.mxu0 %v2202
        %2218 = vmatprep.subr.mxu0 0.0
        %2219 = vmatpush1.msra.mxu0 %v2203
        %2220 = vmatprep.subr.mxu0 0.0
        %2221 = vmatpush1.msra.mxu0 %v2204
        %2222 = vmatprep.subr.mxu0 0.0
        %2223 = vmatpush1.msra.mxu0 %v2205
        %2224 = vmatprep.subr.mxu0 0.0
        %2225 = vmatpush1.msra.mxu0 0.0
        %2226 = vmatprep.subr.mxu0 0.0
        %2227 = vmatpush1.msra.mxu0 0.0
        %2228 = vmatprep.subr.mxu0 0.0
        %2229 = vmatpush1.msra.mxu0 0.0
        %2230 = vmatprep.subr.mxu0 0.0
        %2231 = vmatpush1.msra.mxu0 0.0
        %2232 = vmatprep.subr.mxu0 0.0
        %2233 = vmatpush1.msra.mxu0 0.0
        %2234 = vmatprep.subr.mxu0 0.0
        %2235 = vmatpush1.msra.mxu0 0.0
        %2236 = vmatprep.subr.mxu0 0.0
        %2237 = vmatpush1.msra.mxu0 0.0
        %2238 = vmatprep.subr.mxu0 0.0
        %2239 = vmatpush1.msra.mxu0 0.0
        %2240 = vmatprep.subr.mxu0 0.0
        %2241 = vmatpush1.msra.mxu0 0.0
        %2242 = vmatprep.subr.mxu0 0.0
        %2243 = vmatpush1.msra.mxu0 0.0
        %2244 = vmatprep.subr.mxu0 0.0
        %2245 = vmatpush1.msra.mxu0 0.0
        %2246 = vmatprep.subr.mxu0 0.0
        %2247 = vmatpush1.msra.mxu0 0.0
        %2248 = vmatprep.subr.mxu0 0.0
        %2249 = vmatpush1.msra.mxu0 0.0
        %2250 = vmatprep.subr.mxu0 0.0
        %2251 = vmatpush1.msra.mxu0 0.0
        %2252 = vmatprep.subr.mxu0 0.0
        %2253 = vmatpush1.msra.mxu0 0.0
        %2254 = vmatprep.subr.mxu0 0.0
        %2255 = vmatpush1.msra.mxu0 0.0
        %2256 = vmatprep.subr.mxu0 0.0
        %2257 = vmatpush1.msra.mxu0 0.0
        %2258 = vmatprep.subr.mxu0 0.0
        %2259 = vmatpush1.msra.mxu0 0.0
        %2260 = vmatprep.subr.mxu0 0.0
        %2261 = vmatpush1.msra.mxu0 0.0
        %2262 = vmatprep.subr.mxu0 0.0
        %2263 = vmatpush1.msra.mxu0 0.0
        %2264 = vmatprep.subr.mxu0 0.0
        %2265 = vmatpush1.msra.mxu0 0.0
        %2266 = vmatprep.subr.mxu0 0.0
        %2267 = vmatpush1.msra.mxu0 0.0
        %2268 = vmatprep.subr.mxu0 0.0
        %2269 = vmatpush1.msra.mxu0 0.0
        %2270 = vmatprep.subr.mxu0 0.0
        %2271 = vmatpush1.msra.mxu0 0.0
        %2272 = vmatprep.subr.mxu0 0.0
        %2273 = vmatpush1.msra.mxu0 0.0
        %2274 = vmatprep.subr.mxu0 0.0
        %2275 = vmatpush1.msra.mxu0 0.0
        %2276 = vmatprep.subr.mxu0 0.0
        %2277 = vmatpush1.msra.mxu0 0.0
        %2278 = vmatprep.subr.mxu0 0.0
        %2279 = vmatpush1.msra.mxu0 0.0
        %2280 = vmatprep.mubr.f32.mxu0 0.0
        %2281 = vmatmul.mubr.f32.gmra.mrb[0].mxu0 %v2214
        %v2282 = vpop.f32.mrb[0].mxu0
        %v2283 = vadd.f32 %v2211, %v2282
        %v2284 = vpop.f32.mrb[0].mxu0
        %2285 = vdwg.mxu0
        %v2286 = vxor.u32 %v2283, 2147483648
        %v2287 = vmul.f32 %v2286, 1.442695
        %v2288 = vpow.pop %v2287
        %v2289 = vadd.f32 %v2288, 1.0
        %v2290 = vrcp.pop %v2289
        %v2291 = vmul.f32 1.0, %v2290
        %v2292 = vmul.f32 %v2283, %v2291
        %v2293 = vld [vmem:[%s1259] sm:$0x1]
        %v2295 = vlaneseq
        %v2296 = vshrl.u32 %v2295, 7
        %v2297 = vsub.s32 0, %v2296
        %v2298 = vrot.slane %v2293, %v2297
        %v2300 = vmul.f32 %v2292, %v2298
        %v2301 = vsel %vm2128, %v2300, 0.0
        %2302 = vadd.xlane.f32.xlu0 %v2301
        %v2303 = vpop.xlane.xlu0 %2302
        %v2304 = vld [vmem:[%s1267] sm:$0x1]
        %v2306 = vlaneseq
        %v2307 = vshrl.u32 %v2306, 7
        %v2308 = vsub.s32 0, %v2307
        %v2309 = vrot.slane %v2304, %v2308
        %v2311 = vadd.f32 %v2303, %v2309
        %2313 = vset.pattern.permute.xlu0 0
        %2314 = vperm.xlu0 %2313, %v2311
        %v2315 = vpop.permute.xlu0 %2314
        %v2317 = vmul.f32 %v1864, %v2315
        %v2318 = vld [vmem:[#allocation6] sm:$0xff]
        %2319 = vxpose.xlu0.b32.start [1/16] %v1713, 128
        %2320 = vxpose.xlu0.b32.cont [2/16] 0.0, 128
        %2321 = vxpose.xlu0.b32.cont [3/16] 0.0, 128
        %2322 = vxpose.xlu0.b32.cont [4/16] 0.0, 128
        %2323 = vxpose.xlu0.b32.cont [5/16] 0.0, 128
        %2324 = vxpose.xlu0.b32.cont [6/16] 0.0, 128
        %2325 = vxpose.xlu0.b32.cont [7/16] 0.0, 128
        %2326 = vxpose.xlu0.b32.cont [8/16] 0.0, 128
        %2327 = vxpose.xlu0.b32.cont [9/16] 0.0, 128
        %2328 = vxpose.xlu0.b32.cont [10/16] 0.0, 128
        %2329 = vxpose.xlu0.b32.cont [11/16] 0.0, 128
        %2330 = vxpose.xlu0.b32.cont [12/16] 0.0, 128
        %2331 = vxpose.xlu0.b32.cont [13/16] 0.0, 128
        %2332 = vxpose.xlu0.b32.cont [14/16] 0.0, 128
        %2333 = vxpose.xlu0.b32.cont [15/16] 0.0, 128
        %2334 = vxpose.xlu0.b32.end [16/16] 0.0, 128
        %v2335 = vpop.trf.xlu0
        %v2336 = vpop.trf.xlu0
        %v2337 = vpop.trf.xlu0
        %v2338 = vpop.trf.xlu0
        %v2339 = vpop.trf.xlu0
        %v2340 = vpop.trf.xlu0
        %v2341 = vpop.trf.xlu0
        %v2342 = vpop.trf.xlu0
        %v2343 = vpop.trf.xlu0
        %v2344 = vpop.trf.xlu0
        %v2345 = vpop.trf.xlu0
        %v2346 = vpop.trf.xlu0
        %v2347 = vpop.trf.xlu0
        %v2348 = vpop.trf.xlu0
        %v2349 = vpop.trf.xlu0
        %v2350 = vpop.trf.xlu0
        %v2352 = vsel %vm1717, %v2335, 0
        %2354 = vmatprep.subr.mxu0 0.0
        %2355 = vmatpush1.msra.mxu0 %v2317
        %2356 = vmatprep.subr.mxu0 0.0
        %2357 = vmatpush1.msra.mxu0 0.0
        %2358 = vmatprep.subr.mxu0 0.0
        %2359 = vmatpush1.msra.mxu0 0.0
        %2360 = vmatprep.subr.mxu0 0.0
        %2361 = vmatpush1.msra.mxu0 0.0
        %2362 = vmatprep.subr.mxu0 0.0
        %2363 = vmatpush1.msra.mxu0 0.0
        %2364 = vmatprep.subr.mxu0 0.0
        %2365 = vmatpush1.msra.mxu0 0.0
        %2366 = vmatprep.subr.mxu0 0.0
        %2367 = vmatpush1.msra.mxu0 0.0
        %2368 = vmatprep.subr.mxu0 0.0
        %2369 = vmatpush1.msra.mxu0 0.0
        %2370 = vmatprep.subr.mxu0 0.0
        %2371 = vmatpush1.msra.mxu0 0.0
        %2372 = vmatprep.subr.mxu0 0.0
        %2373 = vmatpush1.msra.mxu0 0.0
        %2374 = vmatprep.subr.mxu0 0.0
        %2375 = vmatpush1.msra.mxu0 0.0
        %2376 = vmatprep.subr.mxu0 0.0
        %2377 = vmatpush1.msra.mxu0 0.0
        %2378 = vmatprep.subr.mxu0 0.0
        %2379 = vmatpush1.msra.mxu0 0.0
        %2380 = vmatprep.subr.mxu0 0.0
        %2381 = vmatpush1.msra.mxu0 0.0
        %2382 = vmatprep.subr.mxu0 0.0
        %2383 = vmatpush1.msra.mxu0 0.0
        %2384 = vmatprep.subr.mxu0 0.0
        %2385 = vmatpush1.msra.mxu0 0.0
        %2386 = vmatprep.subr.mxu0 0.0
        %2387 = vmatpush1.msra.mxu0 0.0
        %2388 = vmatprep.subr.mxu0 0.0
        %2389 = vmatpush1.msra.mxu0 0.0
        %2390 = vmatprep.subr.mxu0 0.0
        %2391 = vmatpush1.msra.mxu0 0.0
        %2392 = vmatprep.subr.mxu0 0.0
        %2393 = vmatpush1.msra.mxu0 0.0
        %2394 = vmatprep.subr.mxu0 0.0
        %2395 = vmatpush1.msra.mxu0 0.0
        %2396 = vmatprep.subr.mxu0 0.0
        %2397 = vmatpush1.msra.mxu0 0.0
        %2398 = vmatprep.subr.mxu0 0.0
        %2399 = vmatpush1.msra.mxu0 0.0
        %2400 = vmatprep.subr.mxu0 0.0
        %2401 = vmatpush1.msra.mxu0 0.0
        %2402 = vmatprep.subr.mxu0 0.0
        %2403 = vmatpush1.msra.mxu0 0.0
        %2404 = vmatprep.subr.mxu0 0.0
        %2405 = vmatpush1.msra.mxu0 0.0
        %2406 = vmatprep.subr.mxu0 0.0
        %2407 = vmatpush1.msra.mxu0 0.0
        %2408 = vmatprep.subr.mxu0 0.0
        %2409 = vmatpush1.msra.mxu0 0.0
        %2410 = vmatprep.subr.mxu0 0.0
        %2411 = vmatpush1.msra.mxu0 0.0
        %2412 = vmatprep.subr.mxu0 0.0
        %2413 = vmatpush1.msra.mxu0 0.0
        %2414 = vmatprep.subr.mxu0 0.0
        %2415 = vmatpush1.msra.mxu0 0.0
        %2416 = vmatprep.subr.mxu0 0.0
        %2417 = vmatpush1.msra.mxu0 0.0
        %2418 = vmatprep.mubr.f32.mxu0 0.0
        %2419 = vmatmul.mubr.f32.gmra.mrb[0].mxu0 %v2352
        %v2420 = vpop.f32.mrb[0].mxu0
        %v2421 = vadd.f32 0.0, %v2420
        %v2422 = vpop.f32.mrb[0].mxu0
        %2423 = vdwg.mxu0
        %v2424 = vadd.f32 %v2318, %v2421
        %2425 = vst.msk [vmem:[#allocation6] sm:$0xff] %vm1717, %v2424
        %v2426 = vld [vmem:[#allocation7] sm:$0xff]
        %2427 = vmatprep.subr.mxu0 0.0
        %2428 = vmatpush1.msra.mxu0 %v2199
        %2429 = vmatprep.subr.mxu0 0.0
        %2430 = vmatpush1.msra.mxu0 0.0
        %2431 = vmatprep.subr.mxu0 0.0
        %2432 = vmatpush1.msra.mxu0 0.0
        %2433 = vmatprep.subr.mxu0 0.0
        %2434 = vmatpush1.msra.mxu0 0.0
        %2435 = vmatprep.subr.mxu0 0.0
        %2436 = vmatpush1.msra.mxu0 0.0
        %2437 = vmatprep.subr.mxu0 0.0
        %2438 = vmatpush1.msra.mxu0 0.0
        %2439 = vmatprep.subr.mxu0 0.0
        %2440 = vmatpush1.msra.mxu0 0.0
        %2441 = vmatprep.subr.mxu0 0.0
        %2442 = vmatpush1.msra.mxu0 0.0
        %2443 = vmatprep.subr.mxu0 0.0
        %2444 = vmatpush1.msra.mxu0 0.0
        %2445 = vmatprep.subr.mxu0 0.0
        %2446 = vmatpush1.msra.mxu0 0.0
        %2447 = vmatprep.subr.mxu0 0.0
        %2448 = vmatpush1.msra.mxu0 0.0
        %2449 = vmatprep.subr.mxu0 0.0
        %2450 = vmatpush1.msra.mxu0 0.0
        %2451 = vmatprep.subr.mxu0 0.0
        %2452 = vmatpush1.msra.mxu0 0.0
        %2453 = vmatprep.subr.mxu0 0.0
        %2454 = vmatpush1.msra.mxu0 0.0
        %2455 = vmatprep.subr.mxu0 0.0
        %2456 = vmatpush1.msra.mxu0 0.0
        %2457 = vmatprep.subr.mxu0 0.0
        %2458 = vmatpush1.msra.mxu0 0.0
        %2459 = vmatprep.subr.mxu0 0.0
        %2460 = vmatpush1.msra.mxu0 0.0
        %2461 = vmatprep.subr.mxu0 0.0
        %2462 = vmatpush1.msra.mxu0 0.0
        %2463 = vmatprep.subr.mxu0 0.0
        %2464 = vmatpush1.msra.mxu0 0.0
        %2465 = vmatprep.subr.mxu0 0.0
        %2466 = vmatpush1.msra.mxu0 0.0
        %2467 = vmatprep.subr.mxu0 0.0
        %2468 = vmatpush1.msra.mxu0 0.0
        %2469 = vmatprep.subr.mxu0 0.0
        %2470 = vmatpush1.msra.mxu0 0.0
        %2471 = vmatprep.subr.mxu0 0.0
        %2472 = vmatpush1.msra.mxu0 0.0
        %2473 = vmatprep.subr.mxu0 0.0
        %2474 = vmatpush1.msra.mxu0 0.0
        %2475 = vmatprep.subr.mxu0 0.0
        %2476 = vmatpush1.msra.mxu0 0.0
        %2477 = vmatprep.subr.mxu0 0.0
        %2478 = vmatpush1.msra.mxu0 0.0
        %2479 = vmatprep.subr.mxu0 0.0
        %2480 = vmatpush1.msra.mxu0 0.0
        %2481 = vmatprep.subr.mxu0 0.0
        %2482 = vmatpush1.msra.mxu0 0.0
        %2483 = vmatprep.subr.mxu0 0.0
        %2484 = vmatpush1.msra.mxu0 0.0
        %2485 = vmatprep.subr.mxu0 0.0
        %2486 = vmatpush1.msra.mxu0 0.0
        %2487 = vmatprep.subr.mxu0 0.0
        %2488 = vmatpush1.msra.mxu0 0.0
        %2489 = vmatprep.subr.mxu0 0.0
        %2490 = vmatpush1.msra.mxu0 0.0
        %2491 = vmatprep.mubr.f32.mxu0 0.0
        %2492 = vmatmul.mubr.f32.gmra.mrb[0].mxu0 %v2352
        %v2493 = vpop.f32.mrb[0].mxu0
        %v2494 = vadd.f32 0.0, %v2493
        %v2495 = vpop.f32.mrb[0].mxu0
        %2496 = vdwg.mxu0
        %v2497 = vadd.f32 %v2426, %v2494
        %2498 = vst.msk [vmem:[#allocation7] sm:$0xff] %vm2128, %v2497
        %p2499 = scmp.eq.s32.totalorder %s53, 1
        // Predicated region
        $region221: #{egnn_forward.1} parent=115 // pred_check
          %p2500 = pneg %p2499
        $region222: #{egnn_forward.1} parent=115 // pred_check_branch
          %2502 = sbr.rel (%p2500) target = $region224
        $region223: #{egnn_forward.1} parent=115 // pred_region
          %v2503 = vld [vmem:[#allocation6] sm:$0xff]
          %v2504 = vld [vmem:[#allocation13] sm:$0xff]
          %v2505 = vmax.f32 %v2504, 1.0
          %2507 = vset.pattern.permute.xlu0 0
          %2508 = vperm.xlu0 %2507, %v2505
          %v2509 = vpop.permute.xlu0 %2508
          %v2511 = vrcp.pop %v2509
          %v2512 = vmul.f32 %v2503, %v2511
          %v2513 = vmax.f32 %v2512, -100.0
          %v2514 = vmin.f32 %v2513, 100.0
          %v2515 = vld [vmem:[#allocation2] sm:$0xff]
          %v2516 = vadd.f32 %v2515, %v2514
          %2517 = vst.msk [vmem:[#allocation2] sm:$0xff] %vm1717, %v2516
          %v2518 = vld [vmem:[#allocation3] sm:$0xff]
          %v2519 = vld [vmem:[%s1276] sm:$0xff]
          %v2520 = vld [vmem:[%s1276 + $0x8] sm:$0xff]
          %v2521 = vld [vmem:[%s1276 + $0x10] sm:$0xff]
          %v2522 = vld [vmem:[%s1276 + $0x18] sm:$0xff]
          %v2523 = vld [vmem:[#allocation7] sm:$0xff]
          %v2524 = vld [vmem:[%s1285] sm:$0xff]
          %v2525 = vld [vmem:[%s1285 + $0x8] sm:$0xff]
          %v2526 = vld [vmem:[%s1285 + $0x10] sm:$0xff]
          %v2527 = vld [vmem:[%s1285 + $0x18] sm:$0xff]
          %v2529 = vsel %vm2128, %v2523, 0
          %2531 = vmatprep.subr.mxu0 0.0
          %2532 = vmatpush1.msra.mxu0 %v2524
          %2533 = vmatprep.subr.mxu0 0.0
          %2534 = vmatpush1.msra.mxu0 %v2525
          %2535 = vmatprep.subr.mxu0 0.0
          %2536 = vmatpush1.msra.mxu0 %v2526
          %2537 = vmatprep.subr.mxu0 0.0
          %2538 = vmatpush1.msra.mxu0 %v2527
          %2539 = vmatprep.subr.mxu0 0.0
          %2540 = vmatpush1.msra.mxu0 0.0
          %2541 = vmatprep.subr.mxu0 0.0
          %2542 = vmatpush1.msra.mxu0 0.0
          %2543 = vmatprep.subr.mxu0 0.0
          %2544 = vmatpush1.msra.mxu0 0.0
          %2545 = vmatprep.subr.mxu0 0.0
          %2546 = vmatpush1.msra.mxu0 0.0
          %2547 = vmatprep.subr.mxu0 0.0
          %2548 = vmatpush1.msra.mxu0 0.0
          %2549 = vmatprep.subr.mxu0 0.0
          %2550 = vmatpush1.msra.mxu0 0.0
          %2551 = vmatprep.subr.mxu0 0.0
          %2552 = vmatpush1.msra.mxu0 0.0
          %2553 = vmatprep.subr.mxu0 0.0
          %2554 = vmatpush1.msra.mxu0 0.0
          %2555 = vmatprep.subr.mxu0 0.0
          %2556 = vmatpush1.msra.mxu0 0.0
          %2557 = vmatprep.subr.mxu0 0.0
          %2558 = vmatpush1.msra.mxu0 0.0
          %2559 = vmatprep.subr.mxu0 0.0
          %2560 = vmatpush1.msra.mxu0 0.0
          %2561 = vmatprep.subr.mxu0 0.0
          %2562 = vmatpush1.msra.mxu0 0.0
          %2563 = vmatprep.subr.mxu0 0.0
          %2564 = vmatpush1.msra.mxu0 0.0
          %2565 = vmatprep.subr.mxu0 0.0
          %2566 = vmatpush1.msra.mxu0 0.0
          %2567 = vmatprep.subr.mxu0 0.0
          %2568 = vmatpush1.msra.mxu0 0.0
          %2569 = vmatprep.subr.mxu0 0.0
          %2570 = vmatpush1.msra.mxu0 0.0
          %2571 = vmatprep.subr.mxu0 0.0
          %2572 = vmatpush1.msra.mxu0 0.0
          %2573 = vmatprep.subr.mxu0 0.0
          %2574 = vmatpush1.msra.mxu0 0.0
          %2575 = vmatprep.subr.mxu0 0.0
          %2576 = vmatpush1.msra.mxu0 0.0
          %2577 = vmatprep.subr.mxu0 0.0
          %2578 = vmatpush1.msra.mxu0 0.0
          %2579 = vmatprep.subr.mxu0 0.0
          %2580 = vmatpush1.msra.mxu0 0.0
          %2581 = vmatprep.subr.mxu0 0.0
          %2582 = vmatpush1.msra.mxu0 0.0
          %2583 = vmatprep.subr.mxu0 0.0
          %2584 = vmatpush1.msra.mxu0 0.0
          %2585 = vmatprep.subr.mxu0 0.0
          %2586 = vmatpush1.msra.mxu0 0.0
          %2587 = vmatprep.subr.mxu0 0.0
          %2588 = vmatpush1.msra.mxu0 0.0
          %2589 = vmatprep.subr.mxu0 0.0
          %2590 = vmatpush1.msra.mxu0 0.0
          %2591 = vmatprep.subr.mxu0 0.0
          %2592 = vmatpush1.msra.mxu0 0.0
          %2593 = vmatprep.subr.mxu0 0.0
          %2594 = vmatpush1.msra.mxu0 0.0
          %2595 = vmatprep.mubr.f32.mxu0 0.0
          %2596 = vmatmul.mubr.f32.gmra.mrb[0].mxu0 %v2529
          %v2597 = vpop.f32.mrb[0].mxu0
          %v2598 = vadd.f32 0.0, %v2597
          %v2599 = vpop.f32.mrb[0].mxu0
          %2600 = vdwg.mxu0
          %v2602 = vsel %vm2128, %v2518, 0
          %2604 = vmatprep.subr.mxu0 0.0
          %2605 = vmatpush1.msra.mxu0 %v2519
          %2606 = vmatprep.subr.mxu0 0.0
          %2607 = vmatpush1.msra.mxu0 %v2520
          %2608 = vmatprep.subr.mxu0 0.0
          %2609 = vmatpush1.msra.mxu0 %v2521
          %2610 = vmatprep.subr.mxu0 0.0
          %2611 = vmatpush1.msra.mxu0 %v2522
          %2612 = vmatprep.subr.mxu0 0.0
          %2613 = vmatpush1.msra.mxu0 0.0
          %2614 = vmatprep.subr.mxu0 0.0
          %2615 = vmatpush1.msra.mxu0 0.0
          %2616 = vmatprep.subr.mxu0 0.0
          %2617 = vmatpush1.msra.mxu0 0.0
          %2618 = vmatprep.subr.mxu0 0.0
          %2619 = vmatpush1.msra.mxu0 0.0
          %2620 = vmatprep.subr.mxu0 0.0
          %2621 = vmatpush1.msra.mxu0 0.0
          %2622 = vmatprep.subr.mxu0 0.0
          %2623 = vmatpush1.msra.mxu0 0.0
          %2624 = vmatprep.subr.mxu0 0.0
          %2625 = vmatpush1.msra.mxu0 0.0
          %2626 = vmatprep.subr.mxu0 0.0
          %2627 = vmatpush1.msra.mxu0 0.0
          %2628 = vmatprep.subr.mxu0 0.0
          %2629 = vmatpush1.msra.mxu0 0.0
          %2630 = vmatprep.subr.mxu0 0.0
          %2631 = vmatpush1.msra.mxu0 0.0
          %2632 = vmatprep.subr.mxu0 0.0
          %2633 = vmatpush1.msra.mxu0 0.0
          %2634 = vmatprep.subr.mxu0 0.0
          %2635 = vmatpush1.msra.mxu0 0.0
          %2636 = vmatprep.subr.mxu0 0.0
          %2637 = vmatpush1.msra.mxu0 0.0
          %2638 = vmatprep.subr.mxu0 0.0
          %2639 = vmatpush1.msra.mxu0 0.0
          %2640 = vmatprep.subr.mxu0 0.0
          %2641 = vmatpush1.msra.mxu0 0.0
          %2642 = vmatprep.subr.mxu0 0.0
          %2643 = vmatpush1.msra.mxu0 0.0
          %2644 = vmatprep.subr.mxu0 0.0
          %2645 = vmatpush1.msra.mxu0 0.0
          %2646 = vmatprep.subr.mxu0 0.0
          %2647 = vmatpush1.msra.mxu0 0.0
          %2648 = vmatprep.subr.mxu0 0.0
          %2649 = vmatpush1.msra.mxu0 0.0
          %2650 = vmatprep.subr.mxu0 0.0
          %2651 = vmatpush1.msra.mxu0 0.0
          %2652 = vmatprep.subr.mxu0 0.0
          %2653 = vmatpush1.msra.mxu0 0.0
          %2654 = vmatprep.subr.mxu0 0.0
          %2655 = vmatpush1.msra.mxu0 0.0
          %2656 = vmatprep.subr.mxu0 0.0
          %2657 = vmatpush1.msra.mxu0 0.0
          %2658 = vmatprep.subr.mxu0 0.0
          %2659 = vmatpush1.msra.mxu0 0.0
          %2660 = vmatprep.subr.mxu0 0.0
          %2661 = vmatpush1.msra.mxu0 0.0
          %2662 = vmatprep.subr.mxu0 0.0
          %2663 = vmatpush1.msra.mxu0 0.0
          %2664 = vmatprep.subr.mxu0 0.0
          %2665 = vmatpush1.msra.mxu0 0.0
          %2666 = vmatprep.subr.mxu0 0.0
          %2667 = vmatpush1.msra.mxu0 0.0
          %2668 = vmatprep.mubr.f32.mxu0 0.0
          %2669 = vmatmul.mubr.f32.gmra.mrb[0].mxu0 %v2602
          %v2670 = vpop.f32.mrb[0].mxu0
          %v2671 = vadd.f32 %v2598, %v2670
          %v2672 = vpop.f32.mrb[0].mxu0
          %2673 = vdwg.mxu0
          %v2674 = vld [vmem:[%s1293] sm:$0x1]
          %v2676 = vlaneseq
          %v2677 = vshrl.u32 %v2676, 7
          %v2678 = vsub.s32 0, %v2677
          %v2679 = vrot.slane %v2674, %v2678
          %v2681 = vadd.f32 %v2671, %v2679
          %v2682 = vxor.u32 %v2681, 2147483648
          %v2683 = vmul.f32 %v2682, 1.442695
          %v2684 = vpow.pop %v2683
          %v2685 = vadd.f32 %v2684, 1.0
          %v2686 = vrcp.pop %v2685
          %v2687 = vmul.f32 1.0, %v2686
          %v2688 = vmul.f32 %v2681, %v2687
          %v2689 = vld [vmem:[%s1302] sm:$0xff]
          %v2690 = vld [vmem:[%s1302 + $0x8] sm:$0xff]
          %v2691 = vld [vmem:[%s1302 + $0x10] sm:$0xff]
          %v2692 = vld [vmem:[%s1302 + $0x18] sm:$0xff]
          %v2694 = vsel %vm2128, %v2688, 0
          %2696 = vmatprep.subr.mxu0 0.0
          %2697 = vmatpush1.msra.mxu0 %v2689
          %2698 = vmatprep.subr.mxu0 0.0
          %2699 = vmatpush1.msra.mxu0 %v2690
          %2700 = vmatprep.subr.mxu0 0.0
          %2701 = vmatpush1.msra.mxu0 %v2691
          %2702 = vmatprep.subr.mxu0 0.0
          %2703 = vmatpush1.msra.mxu0 %v2692
          %2704 = vmatprep.subr.mxu0 0.0
          %2705 = vmatpush1.msra.mxu0 0.0
          %2706 = vmatprep.subr.mxu0 0.0
          %2707 = vmatpush1.msra.mxu0 0.0
          %2708 = vmatprep.subr.mxu0 0.0
          %2709 = vmatpush1.msra.mxu0 0.0
          %2710 = vmatprep.subr.mxu0 0.0
          %2711 = vmatpush1.msra.mxu0 0.0
          %2712 = vmatprep.subr.mxu0 0.0
          %2713 = vmatpush1.msra.mxu0 0.0
          %2714 = vmatprep.subr.mxu0 0.0
          %2715 = vmatpush1.msra.mxu0 0.0
          %2716 = vmatprep.subr.mxu0 0.0
          %2717 = vmatpush1.msra.mxu0 0.0
          %2718 = vmatprep.subr.mxu0 0.0
          %2719 = vmatpush1.msra.mxu0 0.0
          %2720 = vmatprep.subr.mxu0 0.0
          %2721 = vmatpush1.msra.mxu0 0.0
          %2722 = vmatprep.subr.mxu0 0.0
          %2723 = vmatpush1.msra.mxu0 0.0
          %2724 = vmatprep.subr.mxu0 0.0
          %2725 = vmatpush1.msra.mxu0 0.0
          %2726 = vmatprep.subr.mxu0 0.0
          %2727 = vmatpush1.msra.mxu0 0.0
          %2728 = vmatprep.subr.mxu0 0.0
          %2729 = vmatpush1.msra.mxu0 0.0
          %2730 = vmatprep.subr.mxu0 0.0
          %2731 = vmatpush1.msra.mxu0 0.0
          %2732 = vmatprep.subr.mxu0 0.0
          %2733 = vmatpush1.msra.mxu0 0.0
          %2734 = vmatprep.subr.mxu0 0.0
          %2735 = vmatpush1.msra.mxu0 0.0
          %2736 = vmatprep.subr.mxu0 0.0
          %2737 = vmatpush1.msra.mxu0 0.0
          %2738 = vmatprep.subr.mxu0 0.0
          %2739 = vmatpush1.msra.mxu0 0.0
          %2740 = vmatprep.subr.mxu0 0.0
          %2741 = vmatpush1.msra.mxu0 0.0
          %2742 = vmatprep.subr.mxu0 0.0
          %2743 = vmatpush1.msra.mxu0 0.0
          %2744 = vmatprep.subr.mxu0 0.0
          %2745 = vmatpush1.msra.mxu0 0.0
          %2746 = vmatprep.subr.mxu0 0.0
          %2747 = vmatpush1.msra.mxu0 0.0
          %2748 = vmatprep.subr.mxu0 0.0
          %2749 = vmatpush1.msra.mxu0 0.0
          %2750 = vmatprep.subr.mxu0 0.0
          %2751 = vmatpush1.msra.mxu0 0.0
          %2752 = vmatprep.subr.mxu0 0.0
          %2753 = vmatpush1.msra.mxu0 0.0
          %2754 = vmatprep.subr.mxu0 0.0
          %2755 = vmatpush1.msra.mxu0 0.0
          %2756 = vmatprep.subr.mxu0 0.0
          %2757 = vmatpush1.msra.mxu0 0.0
          %2758 = vmatprep.subr.mxu0 0.0
          %2759 = vmatpush1.msra.mxu0 0.0
          %2760 = vmatprep.mubr.f32.mxu0 0.0
          %2761 = vmatmul.mubr.f32.gmra.mrb[0].mxu0 %v2694
          %v2762 = vpop.f32.mrb[0].mxu0
          %v2763 = vadd.f32 0.0, %v2762
          %v2764 = vpop.f32.mrb[0].mxu0
          %2765 = vdwg.mxu0
          %v2766 = vadd.f32 %v2518, %v2763
          %v2767 = vld [vmem:[%s1310] sm:$0x1]
          %v2769 = vlaneseq
          %v2770 = vshrl.u32 %v2769, 7
          %v2771 = vsub.s32 0, %v2770
          %v2772 = vrot.slane %v2767, %v2771
          %v2774 = vadd.f32 %v2766, %v2772
          %2775 = vst.msk [vmem:[#allocation3] sm:$0xff] %vm2128, %v2774
        $region224: #{egnn_forward.1} parent=115 // pred_fallthru
          _
        %p2776 = scmp.eq.s32.totalorder %s52, 1
        %p2777 = pnand %p2776, %p2499
        %p2778 = pneg %p2777
        // Predicated region
        $region225: #{egnn_forward.1} parent=115 // pred_check
          _
        $region226: #{egnn_forward.1} parent=115 // pred_check_branch
          %2780 = sbr.rel (%p2777) target = $region228
        $region227: #{egnn_forward.1} parent=115 // pred_region
          %v2781 = vld [vmem:[#allocation2] sm:$0xff]
          %2782 = vst.msk [vmem:[#allocation38] sm:$0xff] %vm1717, %v2781
          %v2783 = vld [vmem:[#allocation3] sm:$0xff]
          %2784 = vst.msk [vmem:[#allocation39] sm:$0xff] %vm2128, %v2783
        $region228: #{egnn_forward.1} parent=115 // pred_fallthru
          _
        // Predicated region
        $region229: #{egnn_forward.1} parent=115 // pred_check
          %p2785 = pneg %p672
        $region230: #{egnn_forward.1} parent=115 // pred_check_branch
          %2787 = sbr.rel (%p2785) target = $region232
        $region231: #{egnn_forward.1} parent=115 // pred_region
          %s2789 = ssub.s32 128, 128
          %2790 = vsyncadd [#allocation10], %s2789
          %s2792 = sshll.u32 [#allocation38], 4
          %s2793 = int_to_ptr.vmem [resolvable:$true] %s2792
          %2795 = dma.vmem_to_hbm [thread:$0]  %s2793, 128, %s24, [#allocation10]
        $region232: #{egnn_forward.1} parent=115 // pred_fallthru
          _
        // Predicated region
        $region233: #{egnn_forward.1} parent=115 // pred_check
          %p2796 = pneg %p693
        $region234: #{egnn_forward.1} parent=115 // pred_check_branch
          %2798 = sbr.rel (%p2796) target = $region236
        $region235: #{egnn_forward.1} parent=115 // pred_region
          %s2800 = ssub.s32 128, 128
          %2801 = vsyncadd [#allocation40], %s2800
          %s2803 = sshll.u32 [#allocation39], 4
          %s2804 = int_to_ptr.vmem [resolvable:$true] %s2803
          %2806 = dma.vmem_to_hbm [thread:$0]  %s2804, 128, %s25, [#allocation40]
        $region236: #{egnn_forward.1} parent=115 // pred_fallthru
          _
        // Predicated region
        $region237: #{egnn_forward.1} parent=115 // pred_check
          %p2807 = pneg %p672
        $region238: #{egnn_forward.1} parent=115 // pred_check_branch
          %2809 = sbr.rel (%p2807) target = $region240
        $region239: #{egnn_forward.1} parent=115 // pred_region
          %2810 = dma.done [#allocation10], 128
        $region240: #{egnn_forward.1} parent=115 // pred_fallthru
          _
        // Predicated region
        $region241: #{egnn_forward.1} parent=115 // pred_check
          %p2811 = pneg %p693
        $region242: #{egnn_forward.1} parent=115 // pred_check_branch
          %2813 = sbr.rel (%p2811) target = $region244
        $region243: #{egnn_forward.1} parent=115 // pred_region
          %2814 = dma.done [#allocation40], 128
        $region244: #{egnn_forward.1} parent=115 // pred_fallthru
          _
      $region116: #{egnn_forward.1} parent=5 // pred_fallthru
        _
      %p2815 = scmp.le.s32.totalorder 2, %s43
      // Predicated region
      $region245: #{egnn_forward.1} parent=5 // pred_check
        %p2816 = pneg %p2815
      $region246: #{egnn_forward.1} parent=5 // pred_check_branch
        %2818 = sbr.rel (%p2816) target = $region248
      $region247: #{egnn_forward.1} parent=5 // pred_region
        %s2819 = ssub.s32 %s43, 2
      $region248: #{egnn_forward.1} parent=5 // pred_fallthru
        _
    $region6: #{egnn_forward.1} parent=1 // loop_footer
      %s47 = sadd.s32 1, %s43
    $region7: #{egnn_forward.1} parent=1 // loop_footer_branch
      %42 = sbr.rel target = $region3
    $region8: #{egnn_forward.1} parent=1 // loop_exit
      _
    %2820 = vsyncpa [#allocation9], 1
    %s2821 = scalar_lea.sflag [#allocation9], 1
    %2822 = vsyncpa %s2821, 1
    %2823 = vsyncpa [#allocation12], 1
    %2824 = vsyncpa [#allocation15], 1
    %s2825 = scalar_lea.sflag [#allocation15], 1
    %2826 = vsyncpa %s2825, 1
    %2827 = vsyncpa [#allocation18], 1
    %s2828 = scalar_lea.sflag [#allocation18], 1
    %2829 = vsyncpa %s2828, 1
    %2830 = vsyncpa [#allocation21], 1
    %2831 = vsyncpa [#allocation10], 1
    %s2832 = scalar_lea.sflag [#allocation10], 1
    %2833 = vsyncpa %s2832, 1
    %2834 = vsyncpa [#allocation40], 1

</llo_original>
